<compile_context>
chip_gen: v6e
topology: v6e:2x2x1
jax: 0.10.0
libtpu: 0.0.40
codegen_flags: <defaults>
</compile_context>

<pallas_src>
import jax
import jax.numpy as jnp
from jax import lax  # noqa: F401  (kept for the long-T fori_loop variant noted below)
from jax.experimental import pallas as pl
from jax.experimental.pallas import tpu as pltpu


# ----------------------------- Pallas kernel ------------------------------- #

def _bilstm_layer_kernel(x_ref, wih_f_ref, whh_f_ref, b_f_ref,
                         wih_b_ref, whh_b_ref, b_b_ref,
                         h_seq_ref, c_fin_ref):
    """One bidirectional LSTM layer (both directions fused), whole problem in VMEM.

    x_ref:     (T*B, In)  bf16  flattened seq-major input
    wih_*_ref: (In, 4H)   bf16  W_ih^T per direction
    whh_*_ref: (H, 4H)    bf16  W_hh^T per direction
    b_*_ref:   (1, 4H)    f32   b_ih + b_hh per direction
    h_seq_ref: (T, B, 2H) bf16  per-step [fwd | bwd] hidden states (layer output)
    c_fin_ref: (B, 2H)    f32   final cell states [fwd | bwd] (what ends up in c_n)
    """
    T, B, H2 = h_seq_ref.shape
    H = H2 // 2

    x = x_ref[...]                                            # (T*B, In) bf16

    # Hoisted input projections: one big MXU matmul per direction, bias folded in.
    gx_f = jnp.dot(x, wih_f_ref[...],
                   preferred_element_type=jnp.float32) + b_f_ref[...]   # (T*B, 4H) f32
    gx_b = jnp.dot(x, wih_b_ref[...],
                   preferred_element_type=jnp.float32) + b_b_ref[...]   # (T*B, 4H) f32

    whh_f = whh_f_ref[...]                                    # (H, 4H) bf16
    whh_b = whh_b_ref[...]

    h_f = jnp.zeros((B, H), jnp.float32)
    c_f = jnp.zeros((B, H), jnp.float32)
    h_b = jnp.zeros((B, H), jnp.float32)
    c_b = jnp.zeros((B, H), jnp.float32)

    def cell(gates, c_prev):
        i_g = jax.nn.sigmoid(gates[:, 0 * H:1 * H])
        f_g = jax.nn.sigmoid(gates[:, 1 * H:2 * H])
        g_g = jnp.tanh(gates[:, 2 * H:3 * H])
        o_g = jax.nn.sigmoid(gates[:, 3 * H:4 * H])
        c_new = f_g * c_prev + i_g * g_g
        h_new = o_g * jnp.tanh(c_new)
        return h_new, c_new

    # Fully unrolled time loop: T is small & static, so all indices are static,
    # h/c live in vregs, and both directions' matmul/EUP work can overlap.
    # TODO(synk): for long T, switch to lax.fori_loop(..., unroll=4..8) plus a
    # T-chunked grid (axis "arbitrary") to stay within v7x's 64 MiB VMEM.
    for t in range(T):
        tr = T - 1 - t
        g_f = gx_f[t * B:(t + 1) * B, :] + jnp.dot(
            h_f.astype(jnp.bfloat16), whh_f, preferred_element_type=jnp.float32)
        g_b = gx_b[tr * B:(tr + 1) * B, :] + jnp.dot(
            h_b.astype(jnp.bfloat16), whh_b, preferred_element_type=jnp.float32)
        h_f, c_f = cell(g_f, c_f)
        h_b, c_b = cell(g_b, c_b)
        h_seq_ref[t, :, 0:H] = h_f.astype(h_seq_ref.dtype)
        h_seq_ref[tr, :, H:2 * H] = h_b.astype(h_seq_ref.dtype)

    c_fin_ref[:, 0:H] = c_f
    c_fin_ref[:, H:2 * H] = c_b


# ------------------------------ Pallas wrapper ------------------------------ #

_VMEM = pl.BlockSpec(memory_space=pltpu.MemorySpace.VMEM)


def bilstm_layer(x_flat, wih_f, whh_f, b_f, wih_b, whh_b, b_b, seq_len, batch_pad):
    """Run one fused bidirectional LSTM layer. x_flat is (T*B_pad, In) bf16."""
    H = whh_f.shape[0]
    return pl.pallas_call(
        _bilstm_layer_kernel,
        out_shape=(
            jax.ShapeDtypeStruct((seq_len, batch_pad, 2 * H), jnp.bfloat16),
            jax.ShapeDtypeStruct((batch_pad, 2 * H), jnp.float32),
        ),
        in_specs=[_VMEM] * 7,
        out_specs=(_VMEM, _VMEM),
    )(x_flat, wih_f, whh_f, b_f, wih_b, whh_b, b_b)


# ------------------------------ Model (glue) ------------------------------- #

def init_params(key, vocab, emb_dim, hidden, num_layers=2):
    k_emb, k_ow, k_ob, k_lstm = jax.random.split(key, 4)
    params = {"embedding": jax.random.normal(k_emb, (vocab, emb_dim), jnp.float32)}

    bound = 1.0 / float(hidden) ** 0.5
    layers = []
    kk = k_lstm
    for layer in range(num_layers):
        in_dim = emb_dim if layer == 0 else 2 * hidden
        dirs = []
        for _direction in range(2):
            kk, k1, k2, k3, k4 = jax.random.split(kk, 5)
            wih = jax.random.uniform(k1, (4 * hidden, in_dim), jnp.float32, -bound, bound)
            whh = jax.random.uniform(k2, (4 * hidden, hidden), jnp.float32, -bound, bound)
            bih = jax.random.uniform(k3, (4 * hidden,), jnp.float32, -bound, bound)
            bhh = jax.random.uniform(k4, (4 * hidden,), jnp.float32, -bound, bound)
            # store transposed weights + fused bias, ready for (rows, In) @ (In, 4H)
            dirs.append((wih.T, whh.T, (bih + bhh)[None, :]))
        layers.append(tuple(dirs))
    params["lstm"] = layers

    out_in = hidden * num_layers * 2
    ob = 1.0 / float(out_in) ** 0.5
    params["w_out"] = jax.random.uniform(k_ow, (out_in, 1), jnp.float32, -ob, ob)
    params["b_out"] = jax.random.uniform(k_ob, (1, 1), jnp.float32, -ob, ob)
    return params


def bilstm_forward(params, sents, num_layers=2):
    B, T = sents.shape
    # embedding lookup (gather) — glue in plain JAX
    emb = jnp.take(params["embedding"], sents, axis=0)       # (B, T, E)
    x = jnp.transpose(emb, (1, 0, 2))                         # (T, B, E) seq-major

    # Pad batch to a multiple of 8 sublanes so kernel rows are unmasked.
    B_pad = ((B + 7) // 8) * 8
    if B_pad != B:
        x = jnp.pad(x, ((0, 0), (0, B_pad - B), (0, 0)))
    layer_in = x.reshape(T * B_pad, -1).astype(jnp.bfloat16)  # contiguous, free reshape

    c_parts = []
    for layer in range(num_layers):
        (wih_f, whh_f, b_f), (wih_b, whh_b, b_b) = params["lstm"][layer]
        h_seq, c_fin = bilstm_layer(
            layer_in,
            wih_f.astype(jnp.bfloat16), whh_f.astype(jnp.bfloat16), b_f,
            wih_b.astype(jnp.bfloat16), whh_b.astype(jnp.bfloat16), b_b,
            T, B_pad)
        c_parts.append(c_fin[:B])                             # (B, 2H) = [fwd | bwd]
        layer_in = h_seq.reshape(T * B_pad, -1)               # (T*B_pad, 2H) bf16, free reshape
        # TODO(synk): LSTM inter-layer dropout + nn.Dropout treated as inference-mode identity.

    # torch.cat([c_n[i] for i in range(num_layers*2)], dim=1) -> (B, num_layers*2*H)
    c_cat = jnp.concatenate(c_parts, axis=-1)
    # Tiny final projection left to XLA (lane-width-1 output in Pallas = pure overhead).
    y = c_cat @ params["w_out"] + params["b_out"]             # (B, 1)
    return y


# ---------------------------------- main ----------------------------------- #

if __name__ == "__main__":
    VOCAB, EMB_DIM, HIDDEN, LAYERS = 20, 16, 32, 2
    BATCH, SEQ = 2, 8

    key = jax.random.PRNGKey(0)
    k_params, k_sents = jax.random.split(key)

    params = init_params(k_params, VOCAB, EMB_DIM, HIDDEN, LAYERS)
    sents = jax.random.randint(k_sents, (BATCH, SEQ), 0, VOCAB, dtype=jnp.int32)

    fwd = jax.jit(bilstm_forward, static_argnums=2)
    y = fwd(params, sents, LAYERS)
    y = jax.block_until_ready(y)
    assert y.shape == (BATCH, 1), y.shape
    print("KERNEL_OK")
</pallas_src>

<mosaic_0001>
module attributes {stable_mosaic.version = 11 : i64} {
  func.func @_bilstm_layer_kernel(%arg0: memref<64x16xbf16, #tpu.memory_space<vmem>>, %arg1: memref<16x128xbf16, #tpu.memory_space<vmem>>, %arg2: memref<32x128xbf16, #tpu.memory_space<vmem>>, %arg3: memref<1x128xf32, #tpu.memory_space<vmem>>, %arg4: memref<16x128xbf16, #tpu.memory_space<vmem>>, %arg5: memref<32x128xbf16, #tpu.memory_space<vmem>>, %arg6: memref<1x128xf32, #tpu.memory_space<vmem>>, %arg7: memref<8x8x64xbf16, #tpu.memory_space<vmem>>, %arg8: memref<8x64xf32, #tpu.memory_space<vmem>>) attributes {dimension_semantics = [], scalar_prefetch = 0 : i64, scratch_operands = 0 : i64, tpu.core_type = #tpu.core_type<tc>} {
    %c0 = arith.constant 0 : index
    %c0_0 = arith.constant 0 : index
    %0 = vector.load %arg0[%c0, %c0_0] : memref<64x16xbf16, #tpu.memory_space<vmem>>, vector<64x16xbf16>
    %c0_1 = arith.constant 0 : index
    %c0_2 = arith.constant 0 : index
    %1 = vector.load %arg1[%c0_1, %c0_2] : memref<16x128xbf16, #tpu.memory_space<vmem>>, vector<16x128xbf16>
    %cst = arith.constant dense<0.000000e+00> : vector<64x128xf32>
    %2 = tpu.matmul %0, %1, %cst {dimension_numbers = #tpu.dot_dimension_numbers<[1], [0], [0], [1], [0, 0, 1, 1], [], []>} : vector<64x16xbf16>, vector<16x128xbf16>, vector<64x128xf32> -> vector<64x128xf32>
    %c0_3 = arith.constant 0 : index
    %c0_4 = arith.constant 0 : index
    %3 = vector.load %arg3[%c0_3, %c0_4] : memref<1x128xf32, #tpu.memory_space<vmem>>, vector<1x128xf32>
    %4 = vector.broadcast %3 : vector<1x128xf32> to vector<64x128xf32>
    %5 = arith.addf %2, %4 : vector<64x128xf32>
    %c0_5 = arith.constant 0 : index
    %c0_6 = arith.constant 0 : index
    %6 = vector.load %arg4[%c0_5, %c0_6] : memref<16x128xbf16, #tpu.memory_space<vmem>>, vector<16x128xbf16>
    %cst_7 = arith.constant dense<0.000000e+00> : vector<64x128xf32>
    %7 = tpu.matmul %0, %6, %cst_7 {dimension_numbers = #tpu.dot_dimension_numbers<[1], [0], [0], [1], [0, 0, 1, 1], [], []>} : vector<64x16xbf16>, vector<16x128xbf16>, vector<64x128xf32> -> vector<64x128xf32>
    %c0_8 = arith.constant 0 : index
    %c0_9 = arith.constant 0 : index
    %8 = vector.load %arg6[%c0_8, %c0_9] : memref<1x128xf32, #tpu.memory_space<vmem>>, vector<1x128xf32>
    %9 = vector.broadcast %8 : vector<1x128xf32> to vector<64x128xf32>
    %10 = arith.addf %7, %9 : vector<64x128xf32>
    %c0_10 = arith.constant 0 : index
    %c0_11 = arith.constant 0 : index
    %11 = vector.load %arg2[%c0_10, %c0_11] : memref<32x128xbf16, #tpu.memory_space<vmem>>, vector<32x128xbf16>
    %c0_12 = arith.constant 0 : index
    %c0_13 = arith.constant 0 : index
    %12 = vector.load %arg5[%c0_12, %c0_13] : memref<32x128xbf16, #tpu.memory_space<vmem>>, vector<32x128xbf16>
    %cst_14 = arith.constant 0.000000e+00 : f32
    %13 = vector.broadcast %cst_14 : f32 to vector<8x32xf32>
    %cst_15 = arith.constant 0.000000e+00 : f32
    %14 = vector.broadcast %cst_15 : f32 to vector<8x32xf32>
    %cst_16 = arith.constant 0.000000e+00 : f32
    %15 = vector.broadcast %cst_16 : f32 to vector<8x32xf32>
    %cst_17 = arith.constant 0.000000e+00 : f32
    %16 = vector.broadcast %cst_17 : f32 to vector<8x32xf32>
    %17 = vector.extract_strided_slice %5 {offsets = [0, 0], sizes = [8, 128], strides = [1, 1]} : vector<64x128xf32> to vector<8x128xf32>
    %18 = arith.truncf %13 : vector<8x32xf32> to vector<8x32xbf16>
    %cst_18 = arith.constant dense<0.000000e+00> : vector<8x128xf32>
    %19 = tpu.matmul %18, %11, %cst_18 {dimension_numbers = #tpu.dot_dimension_numbers<[1], [0], [0], [1], [0, 0, 1, 1], [], []>} : vector<8x32xbf16>, vector<32x128xbf16>, vector<8x128xf32> -> vector<8x128xf32>
    %20 = arith.addf %17, %19 : vector<8x128xf32>
    %21 = vector.extract_strided_slice %10 {offsets = [56, 0], sizes = [8, 128], strides = [1, 1]} : vector<64x128xf32> to vector<8x128xf32>
    %22 = arith.truncf %15 : vector<8x32xf32> to vector<8x32xbf16>
    %cst_19 = arith.constant dense<0.000000e+00> : vector<8x128xf32>
    %23 = tpu.matmul %22, %12, %cst_19 {dimension_numbers = #tpu.dot_dimension_numbers<[1], [0], [0], [1], [0, 0, 1, 1], [], []>} : vector<8x32xbf16>, vector<32x128xbf16>, vector<8x128xf32> -> vector<8x128xf32>
    %24 = arith.addf %21, %23 : vector<8x128xf32>
    %25 = vector.extract_strided_slice %20 {offsets = [0, 0], sizes = [8, 32], strides = [1, 1]} : vector<8x128xf32> to vector<8x32xf32>
    %26 = arith.negf %25 : vector<8x32xf32>
    %27 = math.exp %26 : vector<8x32xf32>
    %cst_20 = arith.constant 1.000000e+00 : f32
    %28 = vector.broadcast %cst_20 : f32 to vector<8x32xf32>
    %29 = arith.addf %28, %27 : vector<8x32xf32>
    %30 = arith.divf %28, %29 : vector<8x32xf32>
    %31 = vector.extract_strided_slice %20 {offsets = [0, 32], sizes = [8, 32], strides = [1, 1]} : vector<8x128xf32> to vector<8x32xf32>
    %32 = arith.negf %31 : vector<8x32xf32>
    %33 = math.exp %32 : vector<8x32xf32>
    %cst_21 = arith.constant 1.000000e+00 : f32
    %34 = vector.broadcast %cst_21 : f32 to vector<8x32xf32>
    %35 = arith.addf %34, %33 : vector<8x32xf32>
    %36 = arith.divf %34, %35 : vector<8x32xf32>
    %37 = vector.extract_strided_slice %20 {offsets = [0, 64], sizes = [8, 32], strides = [1, 1]} : vector<8x128xf32> to vector<8x32xf32>
    %38 = math.tanh %37 : vector<8x32xf32>
    %39 = vector.extract_strided_slice %20 {offsets = [0, 96], sizes = [8, 32], strides = [1, 1]} : vector<8x128xf32> to vector<8x32xf32>
    %40 = arith.negf %39 : vector<8x32xf32>
    %41 = math.exp %40 : vector<8x32xf32>
    %cst_22 = arith.constant 1.000000e+00 : f32
    %42 = vector.broadcast %cst_22 : f32 to vector<8x32xf32>
    %43 = arith.addf %42, %41 : vector<8x32xf32>
    %44 = arith.divf %42, %43 : vector<8x32xf32>
    %45 = arith.mulf %36, %14 : vector<8x32xf32>
    %46 = arith.mulf %30, %38 : vector<8x32xf32>
    %47 = arith.addf %45, %46 : vector<8x32xf32>
    %48 = math.tanh %47 : vector<8x32xf32>
    %49 = arith.mulf %44, %48 : vector<8x32xf32>
    %50 = vector.extract_strided_slice %24 {offsets = [0, 0], sizes = [8, 32], strides = [1, 1]} : vector<8x128xf32> to vector<8x32xf32>
    %51 = arith.negf %50 : vector<8x32xf32>
    %52 = math.exp %51 : vector<8x32xf32>
    %cst_23 = arith.constant 1.000000e+00 : f32
    %53 = vector.broadcast %cst_23 : f32 to vector<8x32xf32>
    %54 = arith.addf %53, %52 : vector<8x32xf32>
    %55 = arith.divf %53, %54 : vector<8x32xf32>
    %56 = vector.extract_strided_slice %24 {offsets = [0, 32], sizes = [8, 32], strides = [1, 1]} : vector<8x128xf32> to vector<8x32xf32>
    %57 = arith.negf %56 : vector<8x32xf32>
    %58 = math.exp %57 : vector<8x32xf32>
    %cst_24 = arith.constant 1.000000e+00 : f32
    %59 = vector.broadcast %cst_24 : f32 to vector<8x32xf32>
    %60 = arith.addf %59, %58 : vector<8x32xf32>
    %61 = arith.divf %59, %60 : vector<8x32xf32>
    %62 = vector.extract_strided_slice %24 {offsets = [0, 64], sizes = [8, 32], strides = [1, 1]} : vector<8x128xf32> to vector<8x32xf32>
    %63 = math.tanh %62 : vector<8x32xf32>
    %64 = vector.extract_strided_slice %24 {offsets = [0, 96], sizes = [8, 32], strides = [1, 1]} : vector<8x128xf32> to vector<8x32xf32>
    %65 = arith.negf %64 : vector<8x32xf32>
    %66 = math.exp %65 : vector<8x32xf32>
    %cst_25 = arith.constant 1.000000e+00 : f32
    %67 = vector.broadcast %cst_25 : f32 to vector<8x32xf32>
    %68 = arith.addf %67, %66 : vector<8x32xf32>
    %69 = arith.divf %67, %68 : vector<8x32xf32>
    %70 = arith.mulf %61, %16 : vector<8x32xf32>
    %71 = arith.mulf %55, %63 : vector<8x32xf32>
    %72 = arith.addf %70, %71 : vector<8x32xf32>
    %73 = math.tanh %72 : vector<8x32xf32>
    %74 = arith.mulf %69, %73 : vector<8x32xf32>
    %75 = arith.truncf %49 : vector<8x32xf32> to vector<8x32xbf16>
    %c0_26 = arith.constant 0 : index
    %c0_27 = arith.constant 0 : index
    %c0_28 = arith.constant 0 : index
    %76 = vector.load %arg7[%c0_26, %c0_27, %c0_28] : memref<8x8x64xbf16, #tpu.memory_space<vmem>>, vector<1x8x32xbf16>
    %77 = vector.shape_cast %76 : vector<1x8x32xbf16> to vector<8x32xbf16>
    %78 = vector.shape_cast %75 : vector<8x32xbf16> to vector<1x8x32xbf16>
    tpu.vector_store %arg7[%c0_26, %c0_27, %c0_28], %78 {strides = array<i32>} : memref<8x8x64xbf16, #tpu.memory_space<vmem>>, vector<1x8x32xbf16>,
    %79 = arith.truncf %74 : vector<8x32xf32> to vector<8x32xbf16>
    %c7 = arith.constant 7 : index
    %c0_29 = arith.constant 0 : index
    %c32 = arith.constant 32 : index
    %80 = vector.load %arg7[%c7, %c0_29, %c32] : memref<8x8x64xbf16, #tpu.memory_space<vmem>>, vector<1x8x32xbf16>
    %81 = vector.shape_cast %80 : vector<1x8x32xbf16> to vector<8x32xbf16>
    %82 = vector.shape_cast %79 : vector<8x32xbf16> to vector<1x8x32xbf16>
    tpu.vector_store %arg7[%c7, %c0_29, %c32], %82 {strides = array<i32>} : memref<8x8x64xbf16, #tpu.memory_space<vmem>>, vector<1x8x32xbf16>,
    %83 = vector.extract_strided_slice %5 {offsets = [8, 0], sizes = [8, 128], strides = [1, 1]} : vector<64x128xf32> to vector<8x128xf32>
    %84 = arith.truncf %49 : vector<8x32xf32> to vector<8x32xbf16>
    %cst_30 = arith.constant dense<0.000000e+00> : vector<8x128xf32>
    %85 = tpu.matmul %84, %11, %cst_30 {dimension_numbers = #tpu.dot_dimension_numbers<[1], [0], [0], [1], [0, 0, 1, 1], [], []>} : vector<8x32xbf16>, vector<32x128xbf16>, vector<8x128xf32> -> vector<8x128xf32>
    %86 = arith.addf %83, %85 : vector<8x128xf32>
    %87 = vector.extract_strided_slice %10 {offsets = [48, 0], sizes = [8, 128], strides = [1, 1]} : vector<64x128xf32> to vector<8x128xf32>
    %88 = arith.truncf %74 : vector<8x32xf32> to vector<8x32xbf16>
    %cst_31 = arith.constant dense<0.000000e+00> : vector<8x128xf32>
    %89 = tpu.matmul %88, %12, %cst_31 {dimension_numbers = #tpu.dot_dimension_numbers<[1], [0], [0], [1], [0, 0, 1, 1], [], []>} : vector<8x32xbf16>, vector<32x128xbf16>, vector<8x128xf32> -> vector<8x128xf32>
    %90 = arith.addf %87, %89 : vector<8x128xf32>
    %91 = vector.extract_strided_slice %86 {offsets = [0, 0], sizes = [8, 32], strides = [1, 1]} : vector<8x128xf32> to vector<8x32xf32>
    %92 = arith.negf %91 : vector<8x32xf32>
    %93 = math.exp %92 : vector<8x32xf32>
    %cst_32 = arith.constant 1.000000e+00 : f32
    %94 = vector.broadcast %cst_32 : f32 to vector<8x32xf32>
    %95 = arith.addf %94, %93 : vector<8x32xf32>
    %96 = arith.divf %94, %95 : vector<8x32xf32>
    %97 = vector.extract_strided_slice %86 {offsets = [0, 32], sizes = [8, 32], strides = [1, 1]} : vector<8x128xf32> to vector<8x32xf32>
    %98 = arith.negf %97 : vector<8x32xf32>
    %99 = math.exp %98 : vector<8x32xf32>
    %cst_33 = arith.constant 1.000000e+00 : f32
    %100 = vector.broadcast %cst_33 : f32 to vector<8x32xf32>
    %101 = arith.addf %100, %99 : vector<8x32xf32>
    %102 = arith.divf %100, %101 : vector<8x32xf32>
    %103 = vector.extract_strided_slice %86 {offsets = [0, 64], sizes = [8, 32], strides = [1, 1]} : vector<8x128xf32> to vector<8x32xf32>
    %104 = math.tanh %103 : vector<8x32xf32>
    %105 = vector.extract_strided_slice %86 {offsets = [0, 96], sizes = [8, 32], strides = [1, 1]} : vector<8x128xf32> to vector<8x32xf32>
    %106 = arith.negf %105 : vector<8x32xf32>
    %107 = math.exp %106 : vector<8x32xf32>
    %cst_34 = arith.constant 1.000000e+00 : f32
    %108 = vector.broadcast %cst_34 : f32 to vector<8x32xf32>
    %109 = arith.addf %108, %107 : vector<8x32xf32>
    %110 = arith.divf %108, %109 : vector<8x32xf32>
    %111 = arith.mulf %102, %47 : vector<8x32xf32>
    %112 = arith.mulf %96, %104 : vector<8x32xf32>
    %113 = arith.addf %111, %112 : vector<8x32xf32>
    %114 = math.tanh %113 : vector<8x32xf32>
    %115 = arith.mulf %110, %114 : vector<8x32xf32>
    %116 = vector.extract_strided_slice %90 {offsets = [0, 0], sizes = [8, 32], strides = [1, 1]} : vector<8x128xf32> to vector<8x32xf32>
    %117 = arith.negf %116 : vector<8x32xf32>
    %118 = math.exp %117 : vector<8x32xf32>
    %cst_35 = arith.constant 1.000000e+00 : f32
    %119 = vector.broadcast %cst_35 : f32 to vector<8x32xf32>
    %120 = arith.addf %119, %118 : vector<8x32xf32>
    %121 = arith.divf %119, %120 : vector<8x32xf32>
    %122 = vector.extract_strided_slice %90 {offsets = [0, 32], sizes = [8, 32], strides = [1, 1]} : vector<8x128xf32> to vector<8x32xf32>
    %123 = arith.negf %122 : vector<8x32xf32>
    %124 = math.exp %123 : vector<8x32xf32>
    %cst_36 = arith.constant 1.000000e+00 : f32
    %125 = vector.broadcast %cst_36 : f32 to vector<8x32xf32>
    %126 = arith.addf %125, %124 : vector<8x32xf32>
    %127 = arith.divf %125, %126 : vector<8x32xf32>
    %128 = vector.extract_strided_slice %90 {offsets = [0, 64], sizes = [8, 32], strides = [1, 1]} : vector<8x128xf32> to vector<8x32xf32>
    %129 = math.tanh %128 : vector<8x32xf32>
    %130 = vector.extract_strided_slice %90 {offsets = [0, 96], sizes = [8, 32], strides = [1, 1]} : vector<8x128xf32> to vector<8x32xf32>
    %131 = arith.negf %130 : vector<8x32xf32>
    %132 = math.exp %131 : vector<8x32xf32>
    %cst_37 = arith.constant 1.000000e+00 : f32
    %133 = vector.broadcast %cst_37 : f32 to vector<8x32xf32>
    %134 = arith.addf %133, %132 : vector<8x32xf32>
    %135 = arith.divf %133, %134 : vector<8x32xf32>
    %136 = arith.mulf %127, %72 : vector<8x32xf32>
    %137 = arith.mulf %121, %129 : vector<8x32xf32>
    %138 = arith.addf %136, %137 : vector<8x32xf32>
    %139 = math.tanh %138 : vector<8x32xf32>
    %140 = arith.mulf %135, %139 : vector<8x32xf32>
    %141 = arith.truncf %115 : vector<8x32xf32> to vector<8x32xbf16>
    %c1 = arith.constant 1 : index
    %c0_38 = arith.constant 0 : index
    %c0_39 = arith.constant 0 : index
    %142 = vector.load %arg7[%c1, %c0_38, %c0_39] : memref<8x8x64xbf16, #tpu.memory_space<vmem>>, vector<1x8x32xbf16>
    %143 = vector.shape_cast %142 : vector<1x8x32xbf16> to vector<8x32xbf16>
    %144 = vector.shape_cast %141 : vector<8x32xbf16> to vector<1x8x32xbf16>
    tpu.vector_store %arg7[%c1, %c0_38, %c0_39], %144 {strides = array<i32>} : memref<8x8x64xbf16, #tpu.memory_space<vmem>>, vector<1x8x32xbf16>,
    %145 = arith.truncf %140 : vector<8x32xf32> to vector<8x32xbf16>
    %c6 = arith.constant 6 : index
    %c0_40 = arith.constant 0 : index
    %c32_41 = arith.constant 32 : index
    %146 = vector.load %arg7[%c6, %c0_40, %c32_41] : memref<8x8x64xbf16, #tpu.memory_space<vmem>>, vector<1x8x32xbf16>
    %147 = vector.shape_cast %146 : vector<1x8x32xbf16> to vector<8x32xbf16>
    %148 = vector.shape_cast %145 : vector<8x32xbf16> to vector<1x8x32xbf16>
    tpu.vector_store %arg7[%c6, %c0_40, %c32_41], %148 {strides = array<i32>} : memref<8x8x64xbf16, #tpu.memory_space<vmem>>, vector<1x8x32xbf16>,
    %149 = vector.extract_strided_slice %5 {offsets = [16, 0], sizes = [8, 128], strides = [1, 1]} : vector<64x128xf32> to vector<8x128xf32>
    %150 = arith.truncf %115 : vector<8x32xf32> to vector<8x32xbf16>
    %cst_42 = arith.constant dense<0.000000e+00> : vector<8x128xf32>
    %151 = tpu.matmul %150, %11, %cst_42 {dimension_numbers = #tpu.dot_dimension_numbers<[1], [0], [0], [1], [0, 0, 1, 1], [], []>} : vector<8x32xbf16>, vector<32x128xbf16>, vector<8x128xf32> -> vector<8x128xf32>
    %152 = arith.addf %149, %151 : vector<8x128xf32>
    %153 = vector.extract_strided_slice %10 {offsets = [40, 0], sizes = [8, 128], strides = [1, 1]} : vector<64x128xf32> to vector<8x128xf32>
    %154 = arith.truncf %140 : vector<8x32xf32> to vector<8x32xbf16>
    %cst_43 = arith.constant dense<0.000000e+00> : vector<8x128xf32>
    %155 = tpu.matmul %154, %12, %cst_43 {dimension_numbers = #tpu.dot_dimension_numbers<[1], [0], [0], [1], [0, 0, 1, 1], [], []>} : vector<8x32xbf16>, vector<32x128xbf16>, vector<8x128xf32> -> vector<8x128xf32>
    %156 = arith.addf %153, %155 : vector<8x128xf32>
    %157 = vector.extract_strided_slice %152 {offsets = [0, 0], sizes = [8, 32], strides = [1, 1]} : vector<8x128xf32> to vector<8x32xf32>
    %158 = arith.negf %157 : vector<8x32xf32>
    %159 = math.exp %158 : vector<8x32xf32>
    %cst_44 = arith.constant 1.000000e+00 : f32
    %160 = vector.broadcast %cst_44 : f32 to vector<8x32xf32>
    %161 = arith.addf %160, %159 : vector<8x32xf32>
    %162 = arith.divf %160, %161 : vector<8x32xf32>
    %163 = vector.extract_strided_slice %152 {offsets = [0, 32], sizes = [8, 32], strides = [1, 1]} : vector<8x128xf32> to vector<8x32xf32>
    %164 = arith.negf %163 : vector<8x32xf32>
    %165 = math.exp %164 : vector<8x32xf32>
    %cst_45 = arith.constant 1.000000e+00 : f32
    %166 = vector.broadcast %cst_45 : f32 to vector<8x32xf32>
    %167 = arith.addf %166, %165 : vector<8x32xf32>
    %168 = arith.divf %166, %167 : vector<8x32xf32>
    %169 = vector.extract_strided_slice %152 {offsets = [0, 64], sizes = [8, 32], strides = [1, 1]} : vector<8x128xf32> to vector<8x32xf32>
    %170 = math.tanh %169 : vector<8x32xf32>
    %171 = vector.extract_strided_slice %152 {offsets = [0, 96], sizes = [8, 32], strides = [1, 1]} : vector<8x128xf32> to vector<8x32xf32>
    %172 = arith.negf %171 : vector<8x32xf32>
    %173 = math.exp %172 : vector<8x32xf32>
    %cst_46 = arith.constant 1.000000e+00 : f32
    %174 = vector.broadcast %cst_46 : f32 to vector<8x32xf32>
    %175 = arith.addf %174, %173 : vector<8x32xf32>
    %176 = arith.divf %174, %175 : vector<8x32xf32>
    %177 = arith.mulf %168, %113 : vector<8x32xf32>
    %178 = arith.mulf %162, %170 : vector<8x32xf32>
    %179 = arith.addf %177, %178 : vector<8x32xf32>
    %180 = math.tanh %179 : vector<8x32xf32>
    %181 = arith.mulf %176, %180 : vector<8x32xf32>
    %182 = vector.extract_strided_slice %156 {offsets = [0, 0], sizes = [8, 32], strides = [1, 1]} : vector<8x128xf32> to vector<8x32xf32>
    %183 = arith.negf %182 : vector<8x32xf32>
    %184 = math.exp %183 : vector<8x32xf32>
    %cst_47 = arith.constant 1.000000e+00 : f32
    %185 = vector.broadcast %cst_47 : f32 to vector<8x32xf32>
    %186 = arith.addf %185, %184 : vector<8x32xf32>
    %187 = arith.divf %185, %186 : vector<8x32xf32>
    %188 = vector.extract_strided_slice %156 {offsets = [0, 32], sizes = [8, 32], strides = [1, 1]} : vector<8x128xf32> to vector<8x32xf32>
    %189 = arith.negf %188 : vector<8x32xf32>
    %190 = math.exp %189 : vector<8x32xf32>
    %cst_48 = arith.constant 1.000000e+00 : f32
    %191 = vector.broadcast %cst_48 : f32 to vector<8x32xf32>
    %192 = arith.addf %191, %190 : vector<8x32xf32>
    %193 = arith.divf %191, %192 : vector<8x32xf32>
    %194 = vector.extract_strided_slice %156 {offsets = [0, 64], sizes = [8, 32], strides = [1, 1]} : vector<8x128xf32> to vector<8x32xf32>
    %195 = math.tanh %194 : vector<8x32xf32>
    %196 = vector.extract_strided_slice %156 {offsets = [0, 96], sizes = [8, 32], strides = [1, 1]} : vector<8x128xf32> to vector<8x32xf32>
    %197 = arith.negf %196 : vector<8x32xf32>
    %198 = math.exp %197 : vector<8x32xf32>
    %cst_49 = arith.constant 1.000000e+00 : f32
    %199 = vector.broadcast %cst_49 : f32 to vector<8x32xf32>
    %200 = arith.addf %199, %198 : vector<8x32xf32>
    %201 = arith.divf %199, %200 : vector<8x32xf32>
    %202 = arith.mulf %193, %138 : vector<8x32xf32>
    %203 = arith.mulf %187, %195 : vector<8x32xf32>
    %204 = arith.addf %202, %203 : vector<8x32xf32>
    %205 = math.tanh %204 : vector<8x32xf32>
    %206 = arith.mulf %201, %205 : vector<8x32xf32>
    %207 = arith.truncf %181 : vector<8x32xf32> to vector<8x32xbf16>
    %c2 = arith.constant 2 : index
    %c0_50 = arith.constant 0 : index
    %c0_51 = arith.constant 0 : index
    %208 = vector.load %arg7[%c2, %c0_50, %c0_51] : memref<8x8x64xbf16, #tpu.memory_space<vmem>>, vector<1x8x32xbf16>
    %209 = vector.shape_cast %208 : vector<1x8x32xbf16> to vector<8x32xbf16>
    %210 = vector.shape_cast %207 : vector<8x32xbf16> to vector<1x8x32xbf16>
    tpu.vector_store %arg7[%c2, %c0_50, %c0_51], %210 {strides = array<i32>} : memref<8x8x64xbf16, #tpu.memory_space<vmem>>, vector<1x8x32xbf16>,
    %211 = arith.truncf %206 : vector<8x32xf32> to vector<8x32xbf16>
    %c5 = arith.constant 5 : index
    %c0_52 = arith.constant 0 : index
    %c32_53 = arith.constant 32 : index
    %212 = vector.load %arg7[%c5, %c0_52, %c32_53] : memref<8x8x64xbf16, #tpu.memory_space<vmem>>, vector<1x8x32xbf16>
    %213 = vector.shape_cast %212 : vector<1x8x32xbf16> to vector<8x32xbf16>
    %214 = vector.shape_cast %211 : vector<8x32xbf16> to vector<1x8x32xbf16>
    tpu.vector_store %arg7[%c5, %c0_52, %c32_53], %214 {strides = array<i32>} : memref<8x8x64xbf16, #tpu.memory_space<vmem>>, vector<1x8x32xbf16>,
    %215 = vector.extract_strided_slice %5 {offsets = [24, 0], sizes = [8, 128], strides = [1, 1]} : vector<64x128xf32> to vector<8x128xf32>
    %216 = arith.truncf %181 : vector<8x32xf32> to vector<8x32xbf16>
    %cst_54 = arith.constant dense<0.000000e+00> : vector<8x128xf32>
    %217 = tpu.matmul %216, %11, %cst_54 {dimension_numbers = #tpu.dot_dimension_numbers<[1], [0], [0], [1], [0, 0, 1, 1], [], []>} : vector<8x32xbf16>, vector<32x128xbf16>, vector<8x128xf32> -> vector<8x128xf32>
    %218 = arith.addf %215, %217 : vector<8x128xf32>
    %219 = vector.extract_strided_slice %10 {offsets = [32, 0], sizes = [8, 128], strides = [1, 1]} : vector<64x128xf32> to vector<8x128xf32>
    %220 = arith.truncf %206 : vector<8x32xf32> to vector<8x32xbf16>
    %cst_55 = arith.constant dense<0.000000e+00> : vector<8x128xf32>
    %221 = tpu.matmul %220, %12, %cst_55 {dimension_numbers = #tpu.dot_dimension_numbers<[1], [0], [0], [1], [0, 0, 1, 1], [], []>} : vector<8x32xbf16>, vector<32x128xbf16>, vector<8x128xf32> -> vector<8x128xf32>
    %222 = arith.addf %219, %221 : vector<8x128xf32>
    %223 = vector.extract_strided_slice %218 {offsets = [0, 0], sizes = [8, 32], strides = [1, 1]} : vector<8x128xf32> to vector<8x32xf32>
    %224 = arith.negf %223 : vector<8x32xf32>
    %225 = math.exp %224 : vector<8x32xf32>
    %cst_56 = arith.constant 1.000000e+00 : f32
    %226 = vector.broadcast %cst_56 : f32 to vector<8x32xf32>
    %227 = arith.addf %226, %225 : vector<8x32xf32>
    %228 = arith.divf %226, %227 : vector<8x32xf32>
    %229 = vector.extract_strided_slice %218 {offsets = [0, 32], sizes = [8, 32], strides = [1, 1]} : vector<8x128xf32> to vector<8x32xf32>
    %230 = arith.negf %229 : vector<8x32xf32>
    %231 = math.exp %230 : vector<8x32xf32>
    %cst_57 = arith.constant 1.000000e+00 : f32
    %232 = vector.broadcast %cst_57 : f32 to vector<8x32xf32>
    %233 = arith.addf %232, %231 : vector<8x32xf32>
    %234 = arith.divf %232, %233 : vector<8x32xf32>
    %235 = vector.extract_strided_slice %218 {offsets = [0, 64], sizes = [8, 32], strides = [1, 1]} : vector<8x128xf32> to vector<8x32xf32>
    %236 = math.tanh %235 : vector<8x32xf32>
    %237 = vector.extract_strided_slice %218 {offsets = [0, 96], sizes = [8, 32], strides = [1, 1]} : vector<8x128xf32> to vector<8x32xf32>
    %238 = arith.negf %237 : vector<8x32xf32>
    %239 = math.exp %238 : vector<8x32xf32>
    %cst_58 = arith.constant 1.000000e+00 : f32
    %240 = vector.broadcast %cst_58 : f32 to vector<8x32xf32>
    %241 = arith.addf %240, %239 : vector<8x32xf32>
    %242 = arith.divf %240, %241 : vector<8x32xf32>
    %243 = arith.mulf %234, %179 : vector<8x32xf32>
    %244 = arith.mulf %228, %236 : vector<8x32xf32>
    %245 = arith.addf %243, %244 : vector<8x32xf32>
    %246 = math.tanh %245 : vector<8x32xf32>
    %247 = arith.mulf %242, %246 : vector<8x32xf32>
    %248 = vector.extract_strided_slice %222 {offsets = [0, 0], sizes = [8, 32], strides = [1, 1]} : vector<8x128xf32> to vector<8x32xf32>
    %249 = arith.negf %248 : vector<8x32xf32>
    %250 = math.exp %249 : vector<8x32xf32>
    %cst_59 = arith.constant 1.000000e+00 : f32
    %251 = vector.broadcast %cst_59 : f32 to vector<8x32xf32>
    %252 = arith.addf %251, %250 : vector<8x32xf32>
    %253 = arith.divf %251, %252 : vector<8x32xf32>
    %254 = vector.extract_strided_slice %222 {offsets = [0, 32], sizes = [8, 32], strides = [1, 1]} : vector<8x128xf32> to vector<8x32xf32>
    %255 = arith.negf %254 : vector<8x32xf32>
    %256 = math.exp %255 : vector<8x32xf32>
    %cst_60 = arith.constant 1.000000e+00 : f32
    %257 = vector.broadcast %cst_60 : f32 to vector<8x32xf32>
    %258 = arith.addf %257, %256 : vector<8x32xf32>
    %259 = arith.divf %257, %258 : vector<8x32xf32>
    %260 = vector.extract_strided_slice %222 {offsets = [0, 64], sizes = [8, 32], strides = [1, 1]} : vector<8x128xf32> to vector<8x32xf32>
    %261 = math.tanh %260 : vector<8x32xf32>
    %262 = vector.extract_strided_slice %222 {offsets = [0, 96], sizes = [8, 32], strides = [1, 1]} : vector<8x128xf32> to vector<8x32xf32>
    %263 = arith.negf %262 : vector<8x32xf32>
    %264 = math.exp %263 : vector<8x32xf32>
    %cst_61 = arith.constant 1.000000e+00 : f32
    %265 = vector.broadcast %cst_61 : f32 to vector<8x32xf32>
    %266 = arith.addf %265, %264 : vector<8x32xf32>
    %267 = arith.divf %265, %266 : vector<8x32xf32>
    %268 = arith.mulf %259, %204 : vector<8x32xf32>
    %269 = arith.mulf %253, %261 : vector<8x32xf32>
    %270 = arith.addf %268, %269 : vector<8x32xf32>
    %271 = math.tanh %270 : vector<8x32xf32>
    %272 = arith.mulf %267, %271 : vector<8x32xf32>
    %273 = arith.truncf %247 : vector<8x32xf32> to vector<8x32xbf16>
    %c3 = arith.constant 3 : index
    %c0_62 = arith.constant 0 : index
    %c0_63 = arith.constant 0 : index
    %274 = vector.load %arg7[%c3, %c0_62, %c0_63] : memref<8x8x64xbf16, #tpu.memory_space<vmem>>, vector<1x8x32xbf16>
    %275 = vector.shape_cast %274 : vector<1x8x32xbf16> to vector<8x32xbf16>
    %276 = vector.shape_cast %273 : vector<8x32xbf16> to vector<1x8x32xbf16>
    tpu.vector_store %arg7[%c3, %c0_62, %c0_63], %276 {strides = array<i32>} : memref<8x8x64xbf16, #tpu.memory_space<vmem>>, vector<1x8x32xbf16>,
    %277 = arith.truncf %272 : vector<8x32xf32> to vector<8x32xbf16>
    %c4 = arith.constant 4 : index
    %c0_64 = arith.constant 0 : index
    %c32_65 = arith.constant 32 : index
    %278 = vector.load %arg7[%c4, %c0_64, %c32_65] : memref<8x8x64xbf16, #tpu.memory_space<vmem>>, vector<1x8x32xbf16>
    %279 = vector.shape_cast %278 : vector<1x8x32xbf16> to vector<8x32xbf16>
    %280 = vector.shape_cast %277 : vector<8x32xbf16> to vector<1x8x32xbf16>
    tpu.vector_store %arg7[%c4, %c0_64, %c32_65], %280 {strides = array<i32>} : memref<8x8x64xbf16, #tpu.memory_space<vmem>>, vector<1x8x32xbf16>,
    %281 = vector.extract_strided_slice %5 {offsets = [32, 0], sizes = [8, 128], strides = [1, 1]} : vector<64x128xf32> to vector<8x128xf32>
    %282 = arith.truncf %247 : vector<8x32xf32> to vector<8x32xbf16>
    %cst_66 = arith.constant dense<0.000000e+00> : vector<8x128xf32>
    %283 = tpu.matmul %282, %11, %cst_66 {dimension_numbers = #tpu.dot_dimension_numbers<[1], [0], [0], [1], [0, 0, 1, 1], [], []>} : vector<8x32xbf16>, vector<32x128xbf16>, vector<8x128xf32> -> vector<8x128xf32>
    %284 = arith.addf %281, %283 : vector<8x128xf32>
    %285 = vector.extract_strided_slice %10 {offsets = [24, 0], sizes = [8, 128], strides = [1, 1]} : vector<64x128xf32> to vector<8x128xf32>
    %286 = arith.truncf %272 : vector<8x32xf32> to vector<8x32xbf16>
    %cst_67 = arith.constant dense<0.000000e+00> : vector<8x128xf32>
    %287 = tpu.matmul %286, %12, %cst_67 {dimension_numbers = #tpu.dot_dimension_numbers<[1], [0], [0], [1], [0, 0, 1, 1], [], []>} : vector<8x32xbf16>, vector<32x128xbf16>, vector<8x128xf32> -> vector<8x128xf32>
    %288 = arith.addf %285, %287 : vector<8x128xf32>
    %289 = vector.extract_strided_slice %284 {offsets = [0, 0], sizes = [8, 32], strides = [1, 1]} : vector<8x128xf32> to vector<8x32xf32>
    %290 = arith.negf %289 : vector<8x32xf32>
    %291 = math.exp %290 : vector<8x32xf32>
    %cst_68 = arith.constant 1.000000e+00 : f32
    %292 = vector.broadcast %cst_68 : f32 to vector<8x32xf32>
    %293 = arith.addf %292, %291 : vector<8x32xf32>
    %294 = arith.divf %292, %293 : vector<8x32xf32>
    %295 = vector.extract_strided_slice %284 {offsets = [0, 32], sizes = [8, 32], strides = [1, 1]} : vector<8x128xf32> to vector<8x32xf32>
    %296 = arith.negf %295 : vector<8x32xf32>
    %297 = math.exp %296 : vector<8x32xf32>
    %cst_69 = arith.constant 1.000000e+00 : f32
    %298 = vector.broadcast %cst_69 : f32 to vector<8x32xf32>
    %299 = arith.addf %298, %297 : vector<8x32xf32>
    %300 = arith.divf %298, %299 : vector<8x32xf32>
    %301 = vector.extract_strided_slice %284 {offsets = [0, 64], sizes = [8, 32], strides = [1, 1]} : vector<8x128xf32> to vector<8x32xf32>
    %302 = math.tanh %301 : vector<8x32xf32>
    %303 = vector.extract_strided_slice %284 {offsets = [0, 96], sizes = [8, 32], strides = [1, 1]} : vector<8x128xf32> to vector<8x32xf32>
    %304 = arith.negf %303 : vector<8x32xf32>
    %305 = math.exp %304 : vector<8x32xf32>
    %cst_70 = arith.constant 1.000000e+00 : f32
    %306 = vector.broadcast %cst_70 : f32 to vector<8x32xf32>
    %307 = arith.addf %306, %305 : vector<8x32xf32>
    %308 = arith.divf %306, %307 : vector<8x32xf32>
    %309 = arith.mulf %300, %245 : vector<8x32xf32>
    %310 = arith.mulf %294, %302 : vector<8x32xf32>
    %311 = arith.addf %309, %310 : vector<8x32xf32>
    %312 = math.tanh %311 : vector<8x32xf32>
    %313 = arith.mulf %308, %312 : vector<8x32xf32>
    %314 = vector.extract_strided_slice %288 {offsets = [0, 0], sizes = [8, 32], strides = [1, 1]} : vector<8x128xf32> to vector<8x32xf32>
    %315 = arith.negf %314 : vector<8x32xf32>
    %316 = math.exp %315 : vector<8x32xf32>
    %cst_71 = arith.constant 1.000000e+00 : f32
    %317 = vector.broadcast %cst_71 : f32 to vector<8x32xf32>
    %318 = arith.addf %317, %316 : vector<8x32xf32>
    %319 = arith.divf %317, %318 : vector<8x32xf32>
    %320 = vector.extract_strided_slice %288 {offsets = [0, 32], sizes = [8, 32], strides = [1, 1]} : vector<8x128xf32> to vector<8x32xf32>
    %321 = arith.negf %320 : vector<8x32xf32>
    %322 = math.exp %321 : vector<8x32xf32>
    %cst_72 = arith.constant 1.000000e+00 : f32
    %323 = vector.broadcast %cst_72 : f32 to vector<8x32xf32>
    %324 = arith.addf %323, %322 : vector<8x32xf32>
    %325 = arith.divf %323, %324 : vector<8x32xf32>
    %326 = vector.extract_strided_slice %288 {offsets = [0, 64], sizes = [8, 32], strides = [1, 1]} : vector<8x128xf32> to vector<8x32xf32>
    %327 = math.tanh %326 : vector<8x32xf32>
    %328 = vector.extract_strided_slice %288 {offsets = [0, 96], sizes = [8, 32], strides = [1, 1]} : vector<8x128xf32> to vector<8x32xf32>
    %329 = arith.negf %328 : vector<8x32xf32>
    %330 = math.exp %329 : vector<8x32xf32>
    %cst_73 = arith.constant 1.000000e+00 : f32
    %331 = vector.broadcast %cst_73 : f32 to vector<8x32xf32>
    %332 = arith.addf %331, %330 : vector<8x32xf32>
    %333 = arith.divf %331, %332 : vector<8x32xf32>
    %334 = arith.mulf %325, %270 : vector<8x32xf32>
    %335 = arith.mulf %319, %327 : vector<8x32xf32>
    %336 = arith.addf %334, %335 : vector<8x32xf32>
    %337 = math.tanh %336 : vector<8x32xf32>
    %338 = arith.mulf %333, %337 : vector<8x32xf32>
    %339 = arith.truncf %313 : vector<8x32xf32> to vector<8x32xbf16>
    %c4_74 = arith.constant 4 : index
    %c0_75 = arith.constant 0 : index
    %c0_76 = arith.constant 0 : index
    %340 = vector.load %arg7[%c4_74, %c0_75, %c0_76] : memref<8x8x64xbf16, #tpu.memory_space<vmem>>, vector<1x8x32xbf16>
    %341 = vector.shape_cast %340 : vector<1x8x32xbf16> to vector<8x32xbf16>
    %342 = vector.shape_cast %339 : vector<8x32xbf16> to vector<1x8x32xbf16>
    tpu.vector_store %arg7[%c4_74, %c0_75, %c0_76], %342 {strides = array<i32>} : memref<8x8x64xbf16, #tpu.memory_space<vmem>>, vector<1x8x32xbf16>,
    %343 = arith.truncf %338 : vector<8x32xf32> to vector<8x32xbf16>
    %c3_77 = arith.constant 3 : index
    %c0_78 = arith.constant 0 : index
    %c32_79 = arith.constant 32 : index
    %344 = vector.load %arg7[%c3_77, %c0_78, %c32_79] : memref<8x8x64xbf16, #tpu.memory_space<vmem>>, vector<1x8x32xbf16>
    %345 = vector.shape_cast %344 : vector<1x8x32xbf16> to vector<8x32xbf16>
    %346 = vector.shape_cast %343 : vector<8x32xbf16> to vector<1x8x32xbf16>
    tpu.vector_store %arg7[%c3_77, %c0_78, %c32_79], %346 {strides = array<i32>} : memref<8x8x64xbf16, #tpu.memory_space<vmem>>, vector<1x8x32xbf16>,
    %347 = vector.extract_strided_slice %5 {offsets = [40, 0], sizes = [8, 128], strides = [1, 1]} : vector<64x128xf32> to vector<8x128xf32>
    %348 = arith.truncf %313 : vector<8x32xf32> to vector<8x32xbf16>
    %cst_80 = arith.constant dense<0.000000e+00> : vector<8x128xf32>
    %349 = tpu.matmul %348, %11, %cst_80 {dimension_numbers = #tpu.dot_dimension_numbers<[1], [0], [0], [1], [0, 0, 1, 1], [], []>} : vector<8x32xbf16>, vector<32x128xbf16>, vector<8x128xf32> -> vector<8x128xf32>
    %350 = arith.addf %347, %349 : vector<8x128xf32>
    %351 = vector.extract_strided_slice %10 {offsets = [16, 0], sizes = [8, 128], strides = [1, 1]} : vector<64x128xf32> to vector<8x128xf32>
    %352 = arith.truncf %338 : vector<8x32xf32> to vector<8x32xbf16>
    %cst_81 = arith.constant dense<0.000000e+00> : vector<8x128xf32>
    %353 = tpu.matmul %352, %12, %cst_81 {dimension_numbers = #tpu.dot_dimension_numbers<[1], [0], [0], [1], [0, 0, 1, 1], [], []>} : vector<8x32xbf16>, vector<32x128xbf16>, vector<8x128xf32> -> vector<8x128xf32>
    %354 = arith.addf %351, %353 : vector<8x128xf32>
    %355 = vector.extract_strided_slice %350 {offsets = [0, 0], sizes = [8, 32], strides = [1, 1]} : vector<8x128xf32> to vector<8x32xf32>
    %356 = arith.negf %355 : vector<8x32xf32>
    %357 = math.exp %356 : vector<8x32xf32>
    %cst_82 = arith.constant 1.000000e+00 : f32
    %358 = vector.broadcast %cst_82 : f32 to vector<8x32xf32>
    %359 = arith.addf %358, %357 : vector<8x32xf32>
    %360 = arith.divf %358, %359 : vector<8x32xf32>
    %361 = vector.extract_strided_slice %350 {offsets = [0, 32], sizes = [8, 32], strides = [1, 1]} : vector<8x128xf32> to vector<8x32xf32>
    %362 = arith.negf %361 : vector<8x32xf32>
    %363 = math.exp %362 : vector<8x32xf32>
    %cst_83 = arith.constant 1.000000e+00 : f32
    %364 = vector.broadcast %cst_83 : f32 to vector<8x32xf32>
    %365 = arith.addf %364, %363 : vector<8x32xf32>
    %366 = arith.divf %364, %365 : vector<8x32xf32>
    %367 = vector.extract_strided_slice %350 {offsets = [0, 64], sizes = [8, 32], strides = [1, 1]} : vector<8x128xf32> to vector<8x32xf32>
    %368 = math.tanh %367 : vector<8x32xf32>
    %369 = vector.extract_strided_slice %350 {offsets = [0, 96], sizes = [8, 32], strides = [1, 1]} : vector<8x128xf32> to vector<8x32xf32>
    %370 = arith.negf %369 : vector<8x32xf32>
    %371 = math.exp %370 : vector<8x32xf32>
    %cst_84 = arith.constant 1.000000e+00 : f32
    %372 = vector.broadcast %cst_84 : f32 to vector<8x32xf32>
    %373 = arith.addf %372, %371 : vector<8x32xf32>
    %374 = arith.divf %372, %373 : vector<8x32xf32>
    %375 = arith.mulf %366, %311 : vector<8x32xf32>
    %376 = arith.mulf %360, %368 : vector<8x32xf32>
    %377 = arith.addf %375, %376 : vector<8x32xf32>
    %378 = math.tanh %377 : vector<8x32xf32>
    %379 = arith.mulf %374, %378 : vector<8x32xf32>
    %380 = vector.extract_strided_slice %354 {offsets = [0, 0], sizes = [8, 32], strides = [1, 1]} : vector<8x128xf32> to vector<8x32xf32>
    %381 = arith.negf %380 : vector<8x32xf32>
    %382 = math.exp %381 : vector<8x32xf32>
    %cst_85 = arith.constant 1.000000e+00 : f32
    %383 = vector.broadcast %cst_85 : f32 to vector<8x32xf32>
    %384 = arith.addf %383, %382 : vector<8x32xf32>
    %385 = arith.divf %383, %384 : vector<8x32xf32>
    %386 = vector.extract_strided_slice %354 {offsets = [0, 32], sizes = [8, 32], strides = [1, 1]} : vector<8x128xf32> to vector<8x32xf32>
    %387 = arith.negf %386 : vector<8x32xf32>
    %388 = math.exp %387 : vector<8x32xf32>
    %cst_86 = arith.constant 1.000000e+00 : f32
    %389 = vector.broadcast %cst_86 : f32 to vector<8x32xf32>
    %390 = arith.addf %389, %388 : vector<8x32xf32>
    %391 = arith.divf %389, %390 : vector<8x32xf32>
    %392 = vector.extract_strided_slice %354 {offsets = [0, 64], sizes = [8, 32], strides = [1, 1]} : vector<8x128xf32> to vector<8x32xf32>
    %393 = math.tanh %392 : vector<8x32xf32>
    %394 = vector.extract_strided_slice %354 {offsets = [0, 96], sizes = [8, 32], strides = [1, 1]} : vector<8x128xf32> to vector<8x32xf32>
    %395 = arith.negf %394 : vector<8x32xf32>
    %396 = math.exp %395 : vector<8x32xf32>
    %cst_87 = arith.constant 1.000000e+00 : f32
    %397 = vector.broadcast %cst_87 : f32 to vector<8x32xf32>
    %398 = arith.addf %397, %396 : vector<8x32xf32>
    %399 = arith.divf %397, %398 : vector<8x32xf32>
    %400 = arith.mulf %391, %336 : vector<8x32xf32>
    %401 = arith.mulf %385, %393 : vector<8x32xf32>
    %402 = arith.addf %400, %401 : vector<8x32xf32>
    %403 = math.tanh %402 : vector<8x32xf32>
    %404 = arith.mulf %399, %403 : vector<8x32xf32>
    %405 = arith.truncf %379 : vector<8x32xf32> to vector<8x32xbf16>
    %c5_88 = arith.constant 5 : index
    %c0_89 = arith.constant 0 : index
    %c0_90 = arith.constant 0 : index
    %406 = vector.load %arg7[%c5_88, %c0_89, %c0_90] : memref<8x8x64xbf16, #tpu.memory_space<vmem>>, vector<1x8x32xbf16>
    %407 = vector.shape_cast %406 : vector<1x8x32xbf16> to vector<8x32xbf16>
    %408 = vector.shape_cast %405 : vector<8x32xbf16> to vector<1x8x32xbf16>
    tpu.vector_store %arg7[%c5_88, %c0_89, %c0_90], %408 {strides = array<i32>} : memref<8x8x64xbf16, #tpu.memory_space<vmem>>, vector<1x8x32xbf16>,
    %409 = arith.truncf %404 : vector<8x32xf32> to vector<8x32xbf16>
    %c2_91 = arith.constant 2 : index
    %c0_92 = arith.constant 0 : index
    %c32_93 = arith.constant 32 : index
    %410 = vector.load %arg7[%c2_91, %c0_92, %c32_93] : memref<8x8x64xbf16, #tpu.memory_space<vmem>>, vector<1x8x32xbf16>
    %411 = vector.shape_cast %410 : vector<1x8x32xbf16> to vector<8x32xbf16>
    %412 = vector.shape_cast %409 : vector<8x32xbf16> to vector<1x8x32xbf16>
    tpu.vector_store %arg7[%c2_91, %c0_92, %c32_93], %412 {strides = array<i32>} : memref<8x8x64xbf16, #tpu.memory_space<vmem>>, vector<1x8x32xbf16>,
    %413 = vector.extract_strided_slice %5 {offsets = [48, 0], sizes = [8, 128], strides = [1, 1]} : vector<64x128xf32> to vector<8x128xf32>
    %414 = arith.truncf %379 : vector<8x32xf32> to vector<8x32xbf16>
    %cst_94 = arith.constant dense<0.000000e+00> : vector<8x128xf32>
    %415 = tpu.matmul %414, %11, %cst_94 {dimension_numbers = #tpu.dot_dimension_numbers<[1], [0], [0], [1], [0, 0, 1, 1], [], []>} : vector<8x32xbf16>, vector<32x128xbf16>, vector<8x128xf32> -> vector<8x128xf32>
    %416 = arith.addf %413, %415 : vector<8x128xf32>
    %417 = vector.extract_strided_slice %10 {offsets = [8, 0], sizes = [8, 128], strides = [1, 1]} : vector<64x128xf32> to vector<8x128xf32>
    %418 = arith.truncf %404 : vector<8x32xf32> to vector<8x32xbf16>
    %cst_95 = arith.constant dense<0.000000e+00> : vector<8x128xf32>
    %419 = tpu.matmul %418, %12, %cst_95 {dimension_numbers = #tpu.dot_dimension_numbers<[1], [0], [0], [1], [0, 0, 1, 1], [], []>} : vector<8x32xbf16>, vector<32x128xbf16>, vector<8x128xf32> -> vector<8x128xf32>
    %420 = arith.addf %417, %419 : vector<8x128xf32>
    %421 = vector.extract_strided_slice %416 {offsets = [0, 0], sizes = [8, 32], strides = [1, 1]} : vector<8x128xf32> to vector<8x32xf32>
    %422 = arith.negf %421 : vector<8x32xf32>
    %423 = math.exp %422 : vector<8x32xf32>
    %cst_96 = arith.constant 1.000000e+00 : f32
    %424 = vector.broadcast %cst_96 : f32 to vector<8x32xf32>
    %425 = arith.addf %424, %423 : vector<8x32xf32>
    %426 = arith.divf %424, %425 : vector<8x32xf32>
    %427 = vector.extract_strided_slice %416 {offsets = [0, 32], sizes = [8, 32], strides = [1, 1]} : vector<8x128xf32> to vector<8x32xf32>
    %428 = arith.negf %427 : vector<8x32xf32>
    %429 = math.exp %428 : vector<8x32xf32>
    %cst_97 = arith.constant 1.000000e+00 : f32
    %430 = vector.broadcast %cst_97 : f32 to vector<8x32xf32>
    %431 = arith.addf %430, %429 : vector<8x32xf32>
    %432 = arith.divf %430, %431 : vector<8x32xf32>
    %433 = vector.extract_strided_slice %416 {offsets = [0, 64], sizes = [8, 32], strides = [1, 1]} : vector<8x128xf32> to vector<8x32xf32>
    %434 = math.tanh %433 : vector<8x32xf32>
    %435 = vector.extract_strided_slice %416 {offsets = [0, 96], sizes = [8, 32], strides = [1, 1]} : vector<8x128xf32> to vector<8x32xf32>
    %436 = arith.negf %435 : vector<8x32xf32>
    %437 = math.exp %436 : vector<8x32xf32>
    %cst_98 = arith.constant 1.000000e+00 : f32
    %438 = vector.broadcast %cst_98 : f32 to vector<8x32xf32>
    %439 = arith.addf %438, %437 : vector<8x32xf32>
    %440 = arith.divf %438, %439 : vector<8x32xf32>
    %441 = arith.mulf %432, %377 : vector<8x32xf32>
    %442 = arith.mulf %426, %434 : vector<8x32xf32>
    %443 = arith.addf %441, %442 : vector<8x32xf32>
    %444 = math.tanh %443 : vector<8x32xf32>
    %445 = arith.mulf %440, %444 : vector<8x32xf32>
    %446 = vector.extract_strided_slice %420 {offsets = [0, 0], sizes = [8, 32], strides = [1, 1]} : vector<8x128xf32> to vector<8x32xf32>
    %447 = arith.negf %446 : vector<8x32xf32>
    %448 = math.exp %447 : vector<8x32xf32>
    %cst_99 = arith.constant 1.000000e+00 : f32
    %449 = vector.broadcast %cst_99 : f32 to vector<8x32xf32>
    %450 = arith.addf %449, %448 : vector<8x32xf32>
    %451 = arith.divf %449, %450 : vector<8x32xf32>
    %452 = vector.extract_strided_slice %420 {offsets = [0, 32], sizes = [8, 32], strides = [1, 1]} : vector<8x128xf32> to vector<8x32xf32>
    %453 = arith.negf %452 : vector<8x32xf32>
    %454 = math.exp %453 : vector<8x32xf32>
    %cst_100 = arith.constant 1.000000e+00 : f32
    %455 = vector.broadcast %cst_100 : f32 to vector<8x32xf32>
    %456 = arith.addf %455, %454 : vector<8x32xf32>
    %457 = arith.divf %455, %456 : vector<8x32xf32>
    %458 = vector.extract_strided_slice %420 {offsets = [0, 64], sizes = [8, 32], strides = [1, 1]} : vector<8x128xf32> to vector<8x32xf32>
    %459 = math.tanh %458 : vector<8x32xf32>
    %460 = vector.extract_strided_slice %420 {offsets = [0, 96], sizes = [8, 32], strides = [1, 1]} : vector<8x128xf32> to vector<8x32xf32>
    %461 = arith.negf %460 : vector<8x32xf32>
    %462 = math.exp %461 : vector<8x32xf32>
    %cst_101 = arith.constant 1.000000e+00 : f32
    %463 = vector.broadcast %cst_101 : f32 to vector<8x32xf32>
    %464 = arith.addf %463, %462 : vector<8x32xf32>
    %465 = arith.divf %463, %464 : vector<8x32xf32>
    %466 = arith.mulf %457, %402 : vector<8x32xf32>
    %467 = arith.mulf %451, %459 : vector<8x32xf32>
    %468 = arith.addf %466, %467 : vector<8x32xf32>
    %469 = math.tanh %468 : vector<8x32xf32>
    %470 = arith.mulf %465, %469 : vector<8x32xf32>
    %471 = arith.truncf %445 : vector<8x32xf32> to vector<8x32xbf16>
    %c6_102 = arith.constant 6 : index
    %c0_103 = arith.constant 0 : index
    %c0_104 = arith.constant 0 : index
    %472 = vector.load %arg7[%c6_102, %c0_103, %c0_104] : memref<8x8x64xbf16, #tpu.memory_space<vmem>>, vector<1x8x32xbf16>
    %473 = vector.shape_cast %472 : vector<1x8x32xbf16> to vector<8x32xbf16>
    %474 = vector.shape_cast %471 : vector<8x32xbf16> to vector<1x8x32xbf16>
    tpu.vector_store %arg7[%c6_102, %c0_103, %c0_104], %474 {strides = array<i32>} : memref<8x8x64xbf16, #tpu.memory_space<vmem>>, vector<1x8x32xbf16>,
    %475 = arith.truncf %470 : vector<8x32xf32> to vector<8x32xbf16>
    %c1_105 = arith.constant 1 : index
    %c0_106 = arith.constant 0 : index
    %c32_107 = arith.constant 32 : index
    %476 = vector.load %arg7[%c1_105, %c0_106, %c32_107] : memref<8x8x64xbf16, #tpu.memory_space<vmem>>, vector<1x8x32xbf16>
    %477 = vector.shape_cast %476 : vector<1x8x32xbf16> to vector<8x32xbf16>
    %478 = vector.shape_cast %475 : vector<8x32xbf16> to vector<1x8x32xbf16>
    tpu.vector_store %arg7[%c1_105, %c0_106, %c32_107], %478 {strides = array<i32>} : memref<8x8x64xbf16, #tpu.memory_space<vmem>>, vector<1x8x32xbf16>,
    %479 = vector.extract_strided_slice %5 {offsets = [56, 0], sizes = [8, 128], strides = [1, 1]} : vector<64x128xf32> to vector<8x128xf32>
    %480 = arith.truncf %445 : vector<8x32xf32> to vector<8x32xbf16>
    %cst_108 = arith.constant dense<0.000000e+00> : vector<8x128xf32>
    %481 = tpu.matmul %480, %11, %cst_108 {dimension_numbers = #tpu.dot_dimension_numbers<[1], [0], [0], [1], [0, 0, 1, 1], [], []>} : vector<8x32xbf16>, vector<32x128xbf16>, vector<8x128xf32> -> vector<8x128xf32>
    %482 = arith.addf %479, %481 : vector<8x128xf32>
    %483 = vector.extract_strided_slice %10 {offsets = [0, 0], sizes = [8, 128], strides = [1, 1]} : vector<64x128xf32> to vector<8x128xf32>
    %484 = arith.truncf %470 : vector<8x32xf32> to vector<8x32xbf16>
    %cst_109 = arith.constant dense<0.000000e+00> : vector<8x128xf32>
    %485 = tpu.matmul %484, %12, %cst_109 {dimension_numbers = #tpu.dot_dimension_numbers<[1], [0], [0], [1], [0, 0, 1, 1], [], []>} : vector<8x32xbf16>, vector<32x128xbf16>, vector<8x128xf32> -> vector<8x128xf32>
    %486 = arith.addf %483, %485 : vector<8x128xf32>
    %487 = vector.extract_strided_slice %482 {offsets = [0, 0], sizes = [8, 32], strides = [1, 1]} : vector<8x128xf32> to vector<8x32xf32>
    %488 = arith.negf %487 : vector<8x32xf32>
    %489 = math.exp %488 : vector<8x32xf32>
    %cst_110 = arith.constant 1.000000e+00 : f32
    %490 = vector.broadcast %cst_110 : f32 to vector<8x32xf32>
    %491 = arith.addf %490, %489 : vector<8x32xf32>
    %492 = arith.divf %490, %491 : vector<8x32xf32>
    %493 = vector.extract_strided_slice %482 {offsets = [0, 32], sizes = [8, 32], strides = [1, 1]} : vector<8x128xf32> to vector<8x32xf32>
    %494 = arith.negf %493 : vector<8x32xf32>
    %495 = math.exp %494 : vector<8x32xf32>
    %cst_111 = arith.constant 1.000000e+00 : f32
    %496 = vector.broadcast %cst_111 : f32 to vector<8x32xf32>
    %497 = arith.addf %496, %495 : vector<8x32xf32>
    %498 = arith.divf %496, %497 : vector<8x32xf32>
    %499 = vector.extract_strided_slice %482 {offsets = [0, 64], sizes = [8, 32], strides = [1, 1]} : vector<8x128xf32> to vector<8x32xf32>
    %500 = math.tanh %499 : vector<8x32xf32>
    %501 = vector.extract_strided_slice %482 {offsets = [0, 96], sizes = [8, 32], strides = [1, 1]} : vector<8x128xf32> to vector<8x32xf32>
    %502 = arith.negf %501 : vector<8x32xf32>
    %503 = math.exp %502 : vector<8x32xf32>
    %cst_112 = arith.constant 1.000000e+00 : f32
    %504 = vector.broadcast %cst_112 : f32 to vector<8x32xf32>
    %505 = arith.addf %504, %503 : vector<8x32xf32>
    %506 = arith.divf %504, %505 : vector<8x32xf32>
    %507 = arith.mulf %498, %443 : vector<8x32xf32>
    %508 = arith.mulf %492, %500 : vector<8x32xf32>
    %509 = arith.addf %507, %508 : vector<8x32xf32>
    %510 = math.tanh %509 : vector<8x32xf32>
    %511 = arith.mulf %506, %510 : vector<8x32xf32>
    %512 = vector.extract_strided_slice %486 {offsets = [0, 0], sizes = [8, 32], strides = [1, 1]} : vector<8x128xf32> to vector<8x32xf32>
    %513 = arith.negf %512 : vector<8x32xf32>
    %514 = math.exp %513 : vector<8x32xf32>
    %cst_113 = arith.constant 1.000000e+00 : f32
    %515 = vector.broadcast %cst_113 : f32 to vector<8x32xf32>
    %516 = arith.addf %515, %514 : vector<8x32xf32>
    %517 = arith.divf %515, %516 : vector<8x32xf32>
    %518 = vector.extract_strided_slice %486 {offsets = [0, 32], sizes = [8, 32], strides = [1, 1]} : vector<8x128xf32> to vector<8x32xf32>
    %519 = arith.negf %518 : vector<8x32xf32>
    %520 = math.exp %519 : vector<8x32xf32>
    %cst_114 = arith.constant 1.000000e+00 : f32
    %521 = vector.broadcast %cst_114 : f32 to vector<8x32xf32>
    %522 = arith.addf %521, %520 : vector<8x32xf32>
    %523 = arith.divf %521, %522 : vector<8x32xf32>
    %524 = vector.extract_strided_slice %486 {offsets = [0, 64], sizes = [8, 32], strides = [1, 1]} : vector<8x128xf32> to vector<8x32xf32>
    %525 = math.tanh %524 : vector<8x32xf32>
    %526 = vector.extract_strided_slice %486 {offsets = [0, 96], sizes = [8, 32], strides = [1, 1]} : vector<8x128xf32> to vector<8x32xf32>
    %527 = arith.negf %526 : vector<8x32xf32>
    %528 = math.exp %527 : vector<8x32xf32>
    %cst_115 = arith.constant 1.000000e+00 : f32
    %529 = vector.broadcast %cst_115 : f32 to vector<8x32xf32>
    %530 = arith.addf %529, %528 : vector<8x32xf32>
    %531 = arith.divf %529, %530 : vector<8x32xf32>
    %532 = arith.mulf %523, %468 : vector<8x32xf32>
    %533 = arith.mulf %517, %525 : vector<8x32xf32>
    %534 = arith.addf %532, %533 : vector<8x32xf32>
    %535 = math.tanh %534 : vector<8x32xf32>
    %536 = arith.mulf %531, %535 : vector<8x32xf32>
    %537 = arith.truncf %511 : vector<8x32xf32> to vector<8x32xbf16>
    %c7_116 = arith.constant 7 : index
    %c0_117 = arith.constant 0 : index
    %c0_118 = arith.constant 0 : index
    %538 = vector.load %arg7[%c7_116, %c0_117, %c0_118] : memref<8x8x64xbf16, #tpu.memory_space<vmem>>, vector<1x8x32xbf16>
    %539 = vector.shape_cast %538 : vector<1x8x32xbf16> to vector<8x32xbf16>
    %540 = vector.shape_cast %537 : vector<8x32xbf16> to vector<1x8x32xbf16>
    tpu.vector_store %arg7[%c7_116, %c0_117, %c0_118], %540 {strides = array<i32>} : memref<8x8x64xbf16, #tpu.memory_space<vmem>>, vector<1x8x32xbf16>,
    %541 = arith.truncf %536 : vector<8x32xf32> to vector<8x32xbf16>
    %c0_119 = arith.constant 0 : index
    %c0_120 = arith.constant 0 : index
    %c32_121 = arith.constant 32 : index
    %542 = vector.load %arg7[%c0_119, %c0_120, %c32_121] : memref<8x8x64xbf16, #tpu.memory_space<vmem>>, vector<1x8x32xbf16>
    %543 = vector.shape_cast %542 : vector<1x8x32xbf16> to vector<8x32xbf16>
    %544 = vector.shape_cast %541 : vector<8x32xbf16> to vector<1x8x32xbf16>
    tpu.vector_store %arg7[%c0_119, %c0_120, %c32_121], %544 {strides = array<i32>} : memref<8x8x64xbf16, #tpu.memory_space<vmem>>, vector<1x8x32xbf16>,
    %c0_122 = arith.constant 0 : index
    %c0_123 = arith.constant 0 : index
    %545 = vector.load %arg8[%c0_122, %c0_123] : memref<8x64xf32, #tpu.memory_space<vmem>>, vector<8x32xf32>
    tpu.vector_store %arg8[%c0_122, %c0_123], %509 {strides = array<i32>} : memref<8x64xf32, #tpu.memory_space<vmem>>, vector<8x32xf32>,
    %c0_124 = arith.constant 0 : index
    %c32_125 = arith.constant 32 : index
    %546 = vector.load %arg8[%c0_124, %c32_125] : memref<8x64xf32, #tpu.memory_space<vmem>>, vector<8x32xf32>
    tpu.vector_store %arg8[%c0_124, %c32_125], %534 {strides = array<i32>} : memref<8x64xf32, #tpu.memory_space<vmem>>, vector<8x32xf32>,
    return
  }
}

module attributes {stable_mosaic.version = 11 : i64} {
  func.func @_bilstm_layer_kernel(%arg0: memref<64x64xbf16, #tpu.memory_space<vmem>>, %arg1: memref<64x128xbf16, #tpu.memory_space<vmem>>, %arg2: memref<32x128xbf16, #tpu.memory_space<vmem>>, %arg3: memref<1x128xf32, #tpu.memory_space<vmem>>, %arg4: memref<64x128xbf16, #tpu.memory_space<vmem>>, %arg5: memref<32x128xbf16, #tpu.memory_space<vmem>>, %arg6: memref<1x128xf32, #tpu.memory_space<vmem>>, %arg7: memref<8x8x64xbf16, #tpu.memory_space<vmem>>, %arg8: memref<8x64xf32, #tpu.memory_space<vmem>>) attributes {dimension_semantics = [], scalar_prefetch = 0 : i64, scratch_operands = 0 : i64, tpu.core_type = #tpu.core_type<tc>} {
    %c0 = arith.constant 0 : index
    %c0_0 = arith.constant 0 : index
    %0 = vector.load %arg0[%c0, %c0_0] : memref<64x64xbf16, #tpu.memory_space<vmem>>, vector<64x64xbf16>
    %c0_1 = arith.constant 0 : index
    %c0_2 = arith.constant 0 : index
    %1 = vector.load %arg1[%c0_1, %c0_2] : memref<64x128xbf16, #tpu.memory_space<vmem>>, vector<64x128xbf16>
    %cst = arith.constant dense<0.000000e+00> : vector<64x128xf32>
    %2 = tpu.matmul %0, %1, %cst {dimension_numbers = #tpu.dot_dimension_numbers<[1], [0], [0], [1], [0, 0, 1, 1], [], []>} : vector<64x64xbf16>, vector<64x128xbf16>, vector<64x128xf32> -> vector<64x128xf32>
    %c0_3 = arith.constant 0 : index
    %c0_4 = arith.constant 0 : index
    %3 = vector.load %arg3[%c0_3, %c0_4] : memref<1x128xf32, #tpu.memory_space<vmem>>, vector<1x128xf32>
    %4 = vector.broadcast %3 : vector<1x128xf32> to vector<64x128xf32>
    %5 = arith.addf %2, %4 : vector<64x128xf32>
    %c0_5 = arith.constant 0 : index
    %c0_6 = arith.constant 0 : index
    %6 = vector.load %arg4[%c0_5, %c0_6] : memref<64x128xbf16, #tpu.memory_space<vmem>>, vector<64x128xbf16>
    %cst_7 = arith.constant dense<0.000000e+00> : vector<64x128xf32>
    %7 = tpu.matmul %0, %6, %cst_7 {dimension_numbers = #tpu.dot_dimension_numbers<[1], [0], [0], [1], [0, 0, 1, 1], [], []>} : vector<64x64xbf16>, vector<64x128xbf16>, vector<64x128xf32> -> vector<64x128xf32>
    %c0_8 = arith.constant 0 : index
    %c0_9 = arith.constant 0 : index
    %8 = vector.load %arg6[%c0_8, %c0_9] : memref<1x128xf32, #tpu.memory_space<vmem>>, vector<1x128xf32>
    %9 = vector.broadcast %8 : vector<1x128xf32> to vector<64x128xf32>
    %10 = arith.addf %7, %9 : vector<64x128xf32>
    %c0_10 = arith.constant 0 : index
    %c0_11 = arith.constant 0 : index
    %11 = vector.load %arg2[%c0_10, %c0_11] : memref<32x128xbf16, #tpu.memory_space<vmem>>, vector<32x128xbf16>
    %c0_12 = arith.constant 0 : index
    %c0_13 = arith.constant 0 : index
    %12 = vector.load %arg5[%c0_12, %c0_13] : memref<32x128xbf16, #tpu.memory_space<vmem>>, vector<32x128xbf16>
    %cst_14 = arith.constant 0.000000e+00 : f32
    %13 = vector.broadcast %cst_14 : f32 to vector<8x32xf32>
    %cst_15 = arith.constant 0.000000e+00 : f32
    %14 = vector.broadcast %cst_15 : f32 to vector<8x32xf32>
    %cst_16 = arith.constant 0.000000e+00 : f32
    %15 = vector.broadcast %cst_16 : f32 to vector<8x32xf32>
    %cst_17 = arith.constant 0.000000e+00 : f32
    %16 = vector.broadcast %cst_17 : f32 to vector<8x32xf32>
    %17 = vector.extract_strided_slice %5 {offsets = [0, 0], sizes = [8, 128], strides = [1, 1]} : vector<64x128xf32> to vector<8x128xf32>
    %18 = arith.truncf %13 : vector<8x32xf32> to vector<8x32xbf16>
    %cst_18 = arith.constant dense<0.000000e+00> : vector<8x128xf32>
    %19 = tpu.matmul %18, %11, %cst_18 {dimension_numbers = #tpu.dot_dimension_numbers<[1], [0], [0], [1], [0, 0, 1, 1], [], []>} : vector<8x32xbf16>, vector<32x128xbf16>, vector<8x128xf32> -> vector<8x128xf32>
    %20 = arith.addf %17, %19 : vector<8x128xf32>
    %21 = vector.extract_strided_slice %10 {offsets = [56, 0], sizes = [8, 128], strides = [1, 1]} : vector<64x128xf32> to vector<8x128xf32>
    %22 = arith.truncf %15 : vector<8x32xf32> to vector<8x32xbf16>
    %cst_19 = arith.constant dense<0.000000e+00> : vector<8x128xf32>
    %23 = tpu.matmul %22, %12, %cst_19 {dimension_numbers = #tpu.dot_dimension_numbers<[1], [0], [0], [1], [0, 0, 1, 1], [], []>} : vector<8x32xbf16>, vector<32x128xbf16>, vector<8x128xf32> -> vector<8x128xf32>
    %24 = arith.addf %21, %23 : vector<8x128xf32>
    %25 = vector.extract_strided_slice %20 {offsets = [0, 0], sizes = [8, 32], strides = [1, 1]} : vector<8x128xf32> to vector<8x32xf32>
    %26 = arith.negf %25 : vector<8x32xf32>
    %27 = math.exp %26 : vector<8x32xf32>
    %cst_20 = arith.constant 1.000000e+00 : f32
    %28 = vector.broadcast %cst_20 : f32 to vector<8x32xf32>
    %29 = arith.addf %28, %27 : vector<8x32xf32>
    %30 = arith.divf %28, %29 : vector<8x32xf32>
    %31 = vector.extract_strided_slice %20 {offsets = [0, 32], sizes = [8, 32], strides = [1, 1]} : vector<8x128xf32> to vector<8x32xf32>
    %32 = arith.negf %31 : vector<8x32xf32>
    %33 = math.exp %32 : vector<8x32xf32>
    %cst_21 = arith.constant 1.000000e+00 : f32
    %34 = vector.broadcast %cst_21 : f32 to vector<8x32xf32>
    %35 = arith.addf %34, %33 : vector<8x32xf32>
    %36 = arith.divf %34, %35 : vector<8x32xf32>
    %37 = vector.extract_strided_slice %20 {offsets = [0, 64], sizes = [8, 32], strides = [1, 1]} : vector<8x128xf32> to vector<8x32xf32>
    %38 = math.tanh %37 : vector<8x32xf32>
    %39 = vector.extract_strided_slice %20 {offsets = [0, 96], sizes = [8, 32], strides = [1, 1]} : vector<8x128xf32> to vector<8x32xf32>
    %40 = arith.negf %39 : vector<8x32xf32>
    %41 = math.exp %40 : vector<8x32xf32>
    %cst_22 = arith.constant 1.000000e+00 : f32
    %42 = vector.broadcast %cst_22 : f32 to vector<8x32xf32>
    %43 = arith.addf %42, %41 : vector<8x32xf32>
    %44 = arith.divf %42, %43 : vector<8x32xf32>
    %45 = arith.mulf %36, %14 : vector<8x32xf32>
    %46 = arith.mulf %30, %38 : vector<8x32xf32>
    %47 = arith.addf %45, %46 : vector<8x32xf32>
    %48 = math.tanh %47 : vector<8x32xf32>
    %49 = arith.mulf %44, %48 : vector<8x32xf32>
    %50 = vector.extract_strided_slice %24 {offsets = [0, 0], sizes = [8, 32], strides = [1, 1]} : vector<8x128xf32> to vector<8x32xf32>
    %51 = arith.negf %50 : vector<8x32xf32>
    %52 = math.exp %51 : vector<8x32xf32>
    %cst_23 = arith.constant 1.000000e+00 : f32
    %53 = vector.broadcast %cst_23 : f32 to vector<8x32xf32>
    %54 = arith.addf %53, %52 : vector<8x32xf32>
    %55 = arith.divf %53, %54 : vector<8x32xf32>
    %56 = vector.extract_strided_slice %24 {offsets = [0, 32], sizes = [8, 32], strides = [1, 1]} : vector<8x128xf32> to vector<8x32xf32>
    %57 = arith.negf %56 : vector<8x32xf32>
    %58 = math.exp %57 : vector<8x32xf32>
    %cst_24 = arith.constant 1.000000e+00 : f32
    %59 = vector.broadcast %cst_24 : f32 to vector<8x32xf32>
    %60 = arith.addf %59, %58 : vector<8x32xf32>
    %61 = arith.divf %59, %60 : vector<8x32xf32>
    %62 = vector.extract_strided_slice %24 {offsets = [0, 64], sizes = [8, 32], strides = [1, 1]} : vector<8x128xf32> to vector<8x32xf32>
    %63 = math.tanh %62 : vector<8x32xf32>
    %64 = vector.extract_strided_slice %24 {offsets = [0, 96], sizes = [8, 32], strides = [1, 1]} : vector<8x128xf32> to vector<8x32xf32>
    %65 = arith.negf %64 : vector<8x32xf32>
    %66 = math.exp %65 : vector<8x32xf32>
    %cst_25 = arith.constant 1.000000e+00 : f32
    %67 = vector.broadcast %cst_25 : f32 to vector<8x32xf32>
    %68 = arith.addf %67, %66 : vector<8x32xf32>
    %69 = arith.divf %67, %68 : vector<8x32xf32>
    %70 = arith.mulf %61, %16 : vector<8x32xf32>
    %71 = arith.mulf %55, %63 : vector<8x32xf32>
    %72 = arith.addf %70, %71 : vector<8x32xf32>
    %73 = math.tanh %72 : vector<8x32xf32>
    %74 = arith.mulf %69, %73 : vector<8x32xf32>
    %75 = arith.truncf %49 : vector<8x32xf32> to vector<8x32xbf16>
    %c0_26 = arith.constant 0 : index
    %c0_27 = arith.constant 0 : index
    %c0_28 = arith.constant 0 : index
    %76 = vector.load %arg7[%c0_26, %c0_27, %c0_28] : memref<8x8x64xbf16, #tpu.memory_space<vmem>>, vector<1x8x32xbf16>
    %77 = vector.shape_cast %76 : vector<1x8x32xbf16> to vector<8x32xbf16>
    %78 = vector.shape_cast %75 : vector<8x32xbf16> to vector<1x8x32xbf16>
    tpu.vector_store %arg7[%c0_26, %c0_27, %c0_28], %78 {strides = array<i32>} : memref<8x8x64xbf16, #tpu.memory_space<vmem>>, vector<1x8x32xbf16>,
    %79 = arith.truncf %74 : vector<8x32xf32> to vector<8x32xbf16>
    %c7 = arith.constant 7 : index
    %c0_29 = arith.constant 0 : index
    %c32 = arith.constant 32 : index
    %80 = vector.load %arg7[%c7, %c0_29, %c32] : memref<8x8x64xbf16, #tpu.memory_space<vmem>>, vector<1x8x32xbf16>
    %81 = vector.shape_cast %80 : vector<1x8x32xbf16> to vector<8x32xbf16>
    %82 = vector.shape_cast %79 : vector<8x32xbf16> to vector<1x8x32xbf16>
    tpu.vector_store %arg7[%c7, %c0_29, %c32], %82 {strides = array<i32>} : memref<8x8x64xbf16, #tpu.memory_space<vmem>>, vector<1x8x32xbf16>,
    %83 = vector.extract_strided_slice %5 {offsets = [8, 0], sizes = [8, 128], strides = [1, 1]} : vector<64x128xf32> to vector<8x128xf32>
    %84 = arith.truncf %49 : vector<8x32xf32> to vector<8x32xbf16>
    %cst_30 = arith.constant dense<0.000000e+00> : vector<8x128xf32>
    %85 = tpu.matmul %84, %11, %cst_30 {dimension_numbers = #tpu.dot_dimension_numbers<[1], [0], [0], [1], [0, 0, 1, 1], [], []>} : vector<8x32xbf16>, vector<32x128xbf16>, vector<8x128xf32> -> vector<8x128xf32>
    %86 = arith.addf %83, %85 : vector<8x128xf32>
    %87 = vector.extract_strided_slice %10 {offsets = [48, 0], sizes = [8, 128], strides = [1, 1]} : vector<64x128xf32> to vector<8x128xf32>
    %88 = arith.truncf %74 : vector<8x32xf32> to vector<8x32xbf16>
    %cst_31 = arith.constant dense<0.000000e+00> : vector<8x128xf32>
    %89 = tpu.matmul %88, %12, %cst_31 {dimension_numbers = #tpu.dot_dimension_numbers<[1], [0], [0], [1], [0, 0, 1, 1], [], []>} : vector<8x32xbf16>, vector<32x128xbf16>, vector<8x128xf32> -> vector<8x128xf32>
    %90 = arith.addf %87, %89 : vector<8x128xf32>
    %91 = vector.extract_strided_slice %86 {offsets = [0, 0], sizes = [8, 32], strides = [1, 1]} : vector<8x128xf32> to vector<8x32xf32>
    %92 = arith.negf %91 : vector<8x32xf32>
    %93 = math.exp %92 : vector<8x32xf32>
    %cst_32 = arith.constant 1.000000e+00 : f32
    %94 = vector.broadcast %cst_32 : f32 to vector<8x32xf32>
    %95 = arith.addf %94, %93 : vector<8x32xf32>
    %96 = arith.divf %94, %95 : vector<8x32xf32>
    %97 = vector.extract_strided_slice %86 {offsets = [0, 32], sizes = [8, 32], strides = [1, 1]} : vector<8x128xf32> to vector<8x32xf32>
    %98 = arith.negf %97 : vector<8x32xf32>
    %99 = math.exp %98 : vector<8x32xf32>
    %cst_33 = arith.constant 1.000000e+00 : f32
    %100 = vector.broadcast %cst_33 : f32 to vector<8x32xf32>
    %101 = arith.addf %100, %99 : vector<8x32xf32>
    %102 = arith.divf %100, %101 : vector<8x32xf32>
    %103 = vector.extract_strided_slice %86 {offsets = [0, 64], sizes = [8, 32], strides = [1, 1]} : vector<8x128xf32> to vector<8x32xf32>
    %104 = math.tanh %103 : vector<8x32xf32>
    %105 = vector.extract_strided_slice %86 {offsets = [0, 96], sizes = [8, 32], strides = [1, 1]} : vector<8x128xf32> to vector<8x32xf32>
    %106 = arith.negf %105 : vector<8x32xf32>
    %107 = math.exp %106 : vector<8x32xf32>
    %cst_34 = arith.constant 1.000000e+00 : f32
    %108 = vector.broadcast %cst_34 : f32 to vector<8x32xf32>
    %109 = arith.addf %108, %107 : vector<8x32xf32>
    %110 = arith.divf %108, %109 : vector<8x32xf32>
    %111 = arith.mulf %102, %47 : vector<8x32xf32>
    %112 = arith.mulf %96, %104 : vector<8x32xf32>
    %113 = arith.addf %111, %112 : vector<8x32xf32>
    %114 = math.tanh %113 : vector<8x32xf32>
    %115 = arith.mulf %110, %114 : vector<8x32xf32>
    %116 = vector.extract_strided_slice %90 {offsets = [0, 0], sizes = [8, 32], strides = [1, 1]} : vector<8x128xf32> to vector<8x32xf32>
    %117 = arith.negf %116 : vector<8x32xf32>
    %118 = math.exp %117 : vector<8x32xf32>
    %cst_35 = arith.constant 1.000000e+00 : f32
    %119 = vector.broadcast %cst_35 : f32 to vector<8x32xf32>
    %120 = arith.addf %119, %118 : vector<8x32xf32>
    %121 = arith.divf %119, %120 : vector<8x32xf32>
    %122 = vector.extract_strided_slice %90 {offsets = [0, 32], sizes = [8, 32], strides = [1, 1]} : vector<8x128xf32> to vector<8x32xf32>
    %123 = arith.negf %122 : vector<8x32xf32>
    %124 = math.exp %123 : vector<8x32xf32>
    %cst_36 = arith.constant 1.000000e+00 : f32
    %125 = vector.broadcast %cst_36 : f32 to vector<8x32xf32>
    %126 = arith.addf %125, %124 : vector<8x32xf32>
    %127 = arith.divf %125, %126 : vector<8x32xf32>
    %128 = vector.extract_strided_slice %90 {offsets = [0, 64], sizes = [8, 32], strides = [1, 1]} : vector<8x128xf32> to vector<8x32xf32>
    %129 = math.tanh %128 : vector<8x32xf32>
    %130 = vector.extract_strided_slice %90 {offsets = [0, 96], sizes = [8, 32], strides = [1, 1]} : vector<8x128xf32> to vector<8x32xf32>
    %131 = arith.negf %130 : vector<8x32xf32>
    %132 = math.exp %131 : vector<8x32xf32>
    %cst_37 = arith.constant 1.000000e+00 : f32
    %133 = vector.broadcast %cst_37 : f32 to vector<8x32xf32>
    %134 = arith.addf %133, %132 : vector<8x32xf32>
    %135 = arith.divf %133, %134 : vector<8x32xf32>
    %136 = arith.mulf %127, %72 : vector<8x32xf32>
    %137 = arith.mulf %121, %129 : vector<8x32xf32>
    %138 = arith.addf %136, %137 : vector<8x32xf32>
    %139 = math.tanh %138 : vector<8x32xf32>
    %140 = arith.mulf %135, %139 : vector<8x32xf32>
    %141 = arith.truncf %115 : vector<8x32xf32> to vector<8x32xbf16>
    %c1 = arith.constant 1 : index
    %c0_38 = arith.constant 0 : index
    %c0_39 = arith.constant 0 : index
    %142 = vector.load %arg7[%c1, %c0_38, %c0_39] : memref<8x8x64xbf16, #tpu.memory_space<vmem>>, vector<1x8x32xbf16>
    %143 = vector.shape_cast %142 : vector<1x8x32xbf16> to vector<8x32xbf16>
    %144 = vector.shape_cast %141 : vector<8x32xbf16> to vector<1x8x32xbf16>
    tpu.vector_store %arg7[%c1, %c0_38, %c0_39], %144 {strides = array<i32>} : memref<8x8x64xbf16, #tpu.memory_space<vmem>>, vector<1x8x32xbf16>,
    %145 = arith.truncf %140 : vector<8x32xf32> to vector<8x32xbf16>
    %c6 = arith.constant 6 : index
    %c0_40 = arith.constant 0 : index
    %c32_41 = arith.constant 32 : index
    %146 = vector.load %arg7[%c6, %c0_40, %c32_41] : memref<8x8x64xbf16, #tpu.memory_space<vmem>>, vector<1x8x32xbf16>
    %147 = vector.shape_cast %146 : vector<1x8x32xbf16> to vector<8x32xbf16>
    %148 = vector.shape_cast %145 : vector<8x32xbf16> to vector<1x8x32xbf16>
    tpu.vector_store %arg7[%c6, %c0_40, %c32_41], %148 {strides = array<i32>} : memref<8x8x64xbf16, #tpu.memory_space<vmem>>, vector<1x8x32xbf16>,
    %149 = vector.extract_strided_slice %5 {offsets = [16, 0], sizes = [8, 128], strides = [1, 1]} : vector<64x128xf32> to vector<8x128xf32>
    %150 = arith.truncf %115 : vector<8x32xf32> to vector<8x32xbf16>
    %cst_42 = arith.constant dense<0.000000e+00> : vector<8x128xf32>
    %151 = tpu.matmul %150, %11, %cst_42 {dimension_numbers = #tpu.dot_dimension_numbers<[1], [0], [0], [1], [0, 0, 1, 1], [], []>} : vector<8x32xbf16>, vector<32x128xbf16>, vector<8x128xf32> -> vector<8x128xf32>
    %152 = arith.addf %149, %151 : vector<8x128xf32>
    %153 = vector.extract_strided_slice %10 {offsets = [40, 0], sizes = [8, 128], strides = [1, 1]} : vector<64x128xf32> to vector<8x128xf32>
    %154 = arith.truncf %140 : vector<8x32xf32> to vector<8x32xbf16>
    %cst_43 = arith.constant dense<0.000000e+00> : vector<8x128xf32>
    %155 = tpu.matmul %154, %12, %cst_43 {dimension_numbers = #tpu.dot_dimension_numbers<[1], [0], [0], [1], [0, 0, 1, 1], [], []>} : vector<8x32xbf16>, vector<32x128xbf16>, vector<8x128xf32> -> vector<8x128xf32>
    %156 = arith.addf %153, %155 : vector<8x128xf32>
    %157 = vector.extract_strided_slice %152 {offsets = [0, 0], sizes = [8, 32], strides = [1, 1]} : vector<8x128xf32> to vector<8x32xf32>
    %158 = arith.negf %157 : vector<8x32xf32>
    %159 = math.exp %158 : vector<8x32xf32>
    %cst_44 = arith.constant 1.000000e+00 : f32
    %160 = vector.broadcast %cst_44 : f32 to vector<8x32xf32>
    %161 = arith.addf %160, %159 : vector<8x32xf32>
    %162 = arith.divf %160, %161 : vector<8x32xf32>
    %163 = vector.extract_strided_slice %152 {offsets = [0, 32], sizes = [8, 32], strides = [1, 1]} : vector<8x128xf32> to vector<8x32xf32>
    %164 = arith.negf %163 : vector<8x32xf32>
    %165 = math.exp %164 : vector<8x32xf32>
    %cst_45 = arith.constant 1.000000e+00 : f32
    %166 = vector.broadcast %cst_45 : f32 to vector<8x32xf32>
    %167 = arith.addf %166, %165 : vector<8x32xf32>
    %168 = arith.divf %166, %167 : vector<8x32xf32>
    %169 = vector.extract_strided_slice %152 {offsets = [0, 64], sizes = [8, 32], strides = [1, 1]} : vector<8x128xf32> to vector<8x32xf32>
    %170 = math.tanh %169 : vector<8x32xf32>
    %171 = vector.extract_strided_slice %152 {offsets = [0, 96], sizes = [8, 32], strides = [1, 1]} : vector<8x128xf32> to vector<8x32xf32>
    %172 = arith.negf %171 : vector<8x32xf32>
    %173 = math.exp %172 : vector<8x32xf32>
    %cst_46 = arith.constant 1.000000e+00 : f32
    %174 = vector.broadcast %cst_46 : f32 to vector<8x32xf32>
    %175 = arith.addf %174, %173 : vector<8x32xf32>
    %176 = arith.divf %174, %175 : vector<8x32xf32>
    %177 = arith.mulf %168, %113 : vector<8x32xf32>
    %178 = arith.mulf %162, %170 : vector<8x32xf32>
    %179 = arith.addf %177, %178 : vector<8x32xf32>
    %180 = math.tanh %179 : vector<8x32xf32>
    %181 = arith.mulf %176, %180 : vector<8x32xf32>
    %182 = vector.extract_strided_slice %156 {offsets = [0, 0], sizes = [8, 32], strides = [1, 1]} : vector<8x128xf32> to vector<8x32xf32>
    %183 = arith.negf %182 : vector<8x32xf32>
    %184 = math.exp %183 : vector<8x32xf32>
    %cst_47 = arith.constant 1.000000e+00 : f32
    %185 = vector.broadcast %cst_47 : f32 to vector<8x32xf32>
    %186 = arith.addf %185, %184 : vector<8x32xf32>
    %187 = arith.divf %185, %186 : vector<8x32xf32>
    %188 = vector.extract_strided_slice %156 {offsets = [0, 32], sizes = [8, 32], strides = [1, 1]} : vector<8x128xf32> to vector<8x32xf32>
    %189 = arith.negf %188 : vector<8x32xf32>
    %190 = math.exp %189 : vector<8x32xf32>
    %cst_48 = arith.constant 1.000000e+00 : f32
    %191 = vector.broadcast %cst_48 : f32 to vector<8x32xf32>
    %192 = arith.addf %191, %190 : vector<8x32xf32>
    %193 = arith.divf %191, %192 : vector<8x32xf32>
    %194 = vector.extract_strided_slice %156 {offsets = [0, 64], sizes = [8, 32], strides = [1, 1]} : vector<8x128xf32> to vector<8x32xf32>
    %195 = math.tanh %194 : vector<8x32xf32>
    %196 = vector.extract_strided_slice %156 {offsets = [0, 96], sizes = [8, 32], strides = [1, 1]} : vector<8x128xf32> to vector<8x32xf32>
    %197 = arith.negf %196 : vector<8x32xf32>
    %198 = math.exp %197 : vector<8x32xf32>
    %cst_49 = arith.constant 1.000000e+00 : f32
    %199 = vector.broadcast %cst_49 : f32 to vector<8x32xf32>
    %200 = arith.addf %199, %198 : vector<8x32xf32>
    %201 = arith.divf %199, %200 : vector<8x32xf32>
    %202 = arith.mulf %193, %138 : vector<8x32xf32>
    %203 = arith.mulf %187, %195 : vector<8x32xf32>
    %204 = arith.addf %202, %203 : vector<8x32xf32>
    %205 = math.tanh %204 : vector<8x32xf32>
    %206 = arith.mulf %201, %205 : vector<8x32xf32>
    %207 = arith.truncf %181 : vector<8x32xf32> to vector<8x32xbf16>
    %c2 = arith.constant 2 : index
    %c0_50 = arith.constant 0 : index
    %c0_51 = arith.constant 0 : index
    %208 = vector.load %arg7[%c2, %c0_50, %c0_51] : memref<8x8x64xbf16, #tpu.memory_space<vmem>>, vector<1x8x32xbf16>
    %209 = vector.shape_cast %208 : vector<1x8x32xbf16> to vector<8x32xbf16>
    %210 = vector.shape_cast %207 : vector<8x32xbf16> to vector<1x8x32xbf16>
    tpu.vector_store %arg7[%c2, %c0_50, %c0_51], %210 {strides = array<i32>} : memref<8x8x64xbf16, #tpu.memory_space<vmem>>, vector<1x8x32xbf16>,
    %211 = arith.truncf %206 : vector<8x32xf32> to vector<8x32xbf16>
    %c5 = arith.constant 5 : index
    %c0_52 = arith.constant 0 : index
    %c32_53 = arith.constant 32 : index
    %212 = vector.load %arg7[%c5, %c0_52, %c32_53] : memref<8x8x64xbf16, #tpu.memory_space<vmem>>, vector<1x8x32xbf16>
    %213 = vector.shape_cast %212 : vector<1x8x32xbf16> to vector<8x32xbf16>
    %214 = vector.shape_cast %211 : vector<8x32xbf16> to vector<1x8x32xbf16>
    tpu.vector_store %arg7[%c5, %c0_52, %c32_53], %214 {strides = array<i32>} : memref<8x8x64xbf16, #tpu.memory_space<vmem>>, vector<1x8x32xbf16>,
    %215 = vector.extract_strided_slice %5 {offsets = [24, 0], sizes = [8, 128], strides = [1, 1]} : vector<64x128xf32> to vector<8x128xf32>
    %216 = arith.truncf %181 : vector<8x32xf32> to vector<8x32xbf16>
    %cst_54 = arith.constant dense<0.000000e+00> : vector<8x128xf32>
    %217 = tpu.matmul %216, %11, %cst_54 {dimension_numbers = #tpu.dot_dimension_numbers<[1], [0], [0], [1], [0, 0, 1, 1], [], []>} : vector<8x32xbf16>, vector<32x128xbf16>, vector<8x128xf32> -> vector<8x128xf32>
    %218 = arith.addf %215, %217 : vector<8x128xf32>
    %219 = vector.extract_strided_slice %10 {offsets = [32, 0], sizes = [8, 128], strides = [1, 1]} : vector<64x128xf32> to vector<8x128xf32>
    %220 = arith.truncf %206 : vector<8x32xf32> to vector<8x32xbf16>
    %cst_55 = arith.constant dense<0.000000e+00> : vector<8x128xf32>
    %221 = tpu.matmul %220, %12, %cst_55 {dimension_numbers = #tpu.dot_dimension_numbers<[1], [0], [0], [1], [0, 0, 1, 1], [], []>} : vector<8x32xbf16>, vector<32x128xbf16>, vector<8x128xf32> -> vector<8x128xf32>
    %222 = arith.addf %219, %221 : vector<8x128xf32>
    %223 = vector.extract_strided_slice %218 {offsets = [0, 0], sizes = [8, 32], strides = [1, 1]} : vector<8x128xf32> to vector<8x32xf32>
    %224 = arith.negf %223 : vector<8x32xf32>
    %225 = math.exp %224 : vector<8x32xf32>
    %cst_56 = arith.constant 1.000000e+00 : f32
    %226 = vector.broadcast %cst_56 : f32 to vector<8x32xf32>
    %227 = arith.addf %226, %225 : vector<8x32xf32>
    %228 = arith.divf %226, %227 : vector<8x32xf32>
    %229 = vector.extract_strided_slice %218 {offsets = [0, 32], sizes = [8, 32], strides = [1, 1]} : vector<8x128xf32> to vector<8x32xf32>
    %230 = arith.negf %229 : vector<8x32xf32>
    %231 = math.exp %230 : vector<8x32xf32>
    %cst_57 = arith.constant 1.000000e+00 : f32
    %232 = vector.broadcast %cst_57 : f32 to vector<8x32xf32>
    %233 = arith.addf %232, %231 : vector<8x32xf32>
    %234 = arith.divf %232, %233 : vector<8x32xf32>
    %235 = vector.extract_strided_slice %218 {offsets = [0, 64], sizes = [8, 32], strides = [1, 1]} : vector<8x128xf32> to vector<8x32xf32>
    %236 = math.tanh %235 : vector<8x32xf32>
    %237 = vector.extract_strided_slice %218 {offsets = [0, 96], sizes = [8, 32], strides = [1, 1]} : vector<8x128xf32> to vector<8x32xf32>
    %238 = arith.negf %237 : vector<8x32xf32>
    %239 = math.exp %238 : vector<8x32xf32>
    %cst_58 = arith.constant 1.000000e+00 : f32
    %240 = vector.broadcast %cst_58 : f32 to vector<8x32xf32>
    %241 = arith.addf %240, %239 : vector<8x32xf32>
    %242 = arith.divf %240, %241 : vector<8x32xf32>
    %243 = arith.mulf %234, %179 : vector<8x32xf32>
    %244 = arith.mulf %228, %236 : vector<8x32xf32>
    %245 = arith.addf %243, %244 : vector<8x32xf32>
    %246 = math.tanh %245 : vector<8x32xf32>
    %247 = arith.mulf %242, %246 : vector<8x32xf32>
    %248 = vector.extract_strided_slice %222 {offsets = [0, 0], sizes = [8, 32], strides = [1, 1]} : vector<8x128xf32> to vector<8x32xf32>
    %249 = arith.negf %248 : vector<8x32xf32>
    %250 = math.exp %249 : vector<8x32xf32>
    %cst_59 = arith.constant 1.000000e+00 : f32
    %251 = vector.broadcast %cst_59 : f32 to vector<8x32xf32>
    %252 = arith.addf %251, %250 : vector<8x32xf32>
    %253 = arith.divf %251, %252 : vector<8x32xf32>
    %254 = vector.extract_strided_slice %222 {offsets = [0, 32], sizes = [8, 32], strides = [1, 1]} : vector<8x128xf32> to vector<8x32xf32>
    %255 = arith.negf %254 : vector<8x32xf32>
    %256 = math.exp %255 : vector<8x32xf32>
    %cst_60 = arith.constant 1.000000e+00 : f32
    %257 = vector.broadcast %cst_60 : f32 to vector<8x32xf32>
    %258 = arith.addf %257, %256 : vector<8x32xf32>
    %259 = arith.divf %257, %258 : vector<8x32xf32>
    %260 = vector.extract_strided_slice %222 {offsets = [0, 64], sizes = [8, 32], strides = [1, 1]} : vector<8x128xf32> to vector<8x32xf32>
    %261 = math.tanh %260 : vector<8x32xf32>
    %262 = vector.extract_strided_slice %222 {offsets = [0, 96], sizes = [8, 32], strides = [1, 1]} : vector<8x128xf32> to vector<8x32xf32>
    %263 = arith.negf %262 : vector<8x32xf32>
    %264 = math.exp %263 : vector<8x32xf32>
    %cst_61 = arith.constant 1.000000e+00 : f32
    %265 = vector.broadcast %cst_61 : f32 to vector<8x32xf32>
    %266 = arith.addf %265, %264 : vector<8x32xf32>
    %267 = arith.divf %265, %266 : vector<8x32xf32>
    %268 = arith.mulf %259, %204 : vector<8x32xf32>
    %269 = arith.mulf %253, %261 : vector<8x32xf32>
    %270 = arith.addf %268, %269 : vector<8x32xf32>
    %271 = math.tanh %270 : vector<8x32xf32>
    %272 = arith.mulf %267, %271 : vector<8x32xf32>
    %273 = arith.truncf %247 : vector<8x32xf32> to vector<8x32xbf16>
    %c3 = arith.constant 3 : index
    %c0_62 = arith.constant 0 : index
    %c0_63 = arith.constant 0 : index
    %274 = vector.load %arg7[%c3, %c0_62, %c0_63] : memref<8x8x64xbf16, #tpu.memory_space<vmem>>, vector<1x8x32xbf16>
    %275 = vector.shape_cast %274 : vector<1x8x32xbf16> to vector<8x32xbf16>
    %276 = vector.shape_cast %273 : vector<8x32xbf16> to vector<1x8x32xbf16>
    tpu.vector_store %arg7[%c3, %c0_62, %c0_63], %276 {strides = array<i32>} : memref<8x8x64xbf16, #tpu.memory_space<vmem>>, vector<1x8x32xbf16>,
    %277 = arith.truncf %272 : vector<8x32xf32> to vector<8x32xbf16>
    %c4 = arith.constant 4 : index
    %c0_64 = arith.constant 0 : index
    %c32_65 = arith.constant 32 : index
    %278 = vector.load %arg7[%c4, %c0_64, %c32_65] : memref<8x8x64xbf16, #tpu.memory_space<vmem>>, vector<1x8x32xbf16>
    %279 = vector.shape_cast %278 : vector<1x8x32xbf16> to vector<8x32xbf16>
    %280 = vector.shape_cast %277 : vector<8x32xbf16> to vector<1x8x32xbf16>
    tpu.vector_store %arg7[%c4, %c0_64, %c32_65], %280 {strides = array<i32>} : memref<8x8x64xbf16, #tpu.memory_space<vmem>>, vector<1x8x32xbf16>,
    %281 = vector.extract_strided_slice %5 {offsets = [32, 0], sizes = [8, 128], strides = [1, 1]} : vector<64x128xf32> to vector<8x128xf32>
    %282 = arith.truncf %247 : vector<8x32xf32> to vector<8x32xbf16>
    %cst_66 = arith.constant dense<0.000000e+00> : vector<8x128xf32>
    %283 = tpu.matmul %282, %11, %cst_66 {dimension_numbers = #tpu.dot_dimension_numbers<[1], [0], [0], [1], [0, 0, 1, 1], [], []>} : vector<8x32xbf16>, vector<32x128xbf16>, vector<8x128xf32> -> vector<8x128xf32>
    %284 = arith.addf %281, %283 : vector<8x128xf32>
    %285 = vector.extract_strided_slice %10 {offsets = [24, 0], sizes = [8, 128], strides = [1, 1]} : vector<64x128xf32> to vector<8x128xf32>
    %286 = arith.truncf %272 : vector<8x32xf32> to vector<8x32xbf16>
    %cst_67 = arith.constant dense<0.000000e+00> : vector<8x128xf32>
    %287 = tpu.matmul %286, %12, %cst_67 {dimension_numbers = #tpu.dot_dimension_numbers<[1], [0], [0], [1], [0, 0, 1, 1], [], []>} : vector<8x32xbf16>, vector<32x128xbf16>, vector<8x128xf32> -> vector<8x128xf32>
    %288 = arith.addf %285, %287 : vector<8x128xf32>
    %289 = vector.extract_strided_slice %284 {offsets = [0, 0], sizes = [8, 32], strides = [1, 1]} : vector<8x128xf32> to vector<8x32xf32>
    %290 = arith.negf %289 : vector<8x32xf32>
    %291 = math.exp %290 : vector<8x32xf32>
    %cst_68 = arith.constant 1.000000e+00 : f32
    %292 = vector.broadcast %cst_68 : f32 to vector<8x32xf32>
    %293 = arith.addf %292, %291 : vector<8x32xf32>
    %294 = arith.divf %292, %293 : vector<8x32xf32>
    %295 = vector.extract_strided_slice %284 {offsets = [0, 32], sizes = [8, 32], strides = [1, 1]} : vector<8x128xf32> to vector<8x32xf32>
    %296 = arith.negf %295 : vector<8x32xf32>
    %297 = math.exp %296 : vector<8x32xf32>
    %cst_69 = arith.constant 1.000000e+00 : f32
    %298 = vector.broadcast %cst_69 : f32 to vector<8x32xf32>
    %299 = arith.addf %298, %297 : vector<8x32xf32>
    %300 = arith.divf %298, %299 : vector<8x32xf32>
    %301 = vector.extract_strided_slice %284 {offsets = [0, 64], sizes = [8, 32], strides = [1, 1]} : vector<8x128xf32> to vector<8x32xf32>
    %302 = math.tanh %301 : vector<8x32xf32>
    %303 = vector.extract_strided_slice %284 {offsets = [0, 96], sizes = [8, 32], strides = [1, 1]} : vector<8x128xf32> to vector<8x32xf32>
    %304 = arith.negf %303 : vector<8x32xf32>
    %305 = math.exp %304 : vector<8x32xf32>
    %cst_70 = arith.constant 1.000000e+00 : f32
    %306 = vector.broadcast %cst_70 : f32 to vector<8x32xf32>
    %307 = arith.addf %306, %305 : vector<8x32xf32>
    %308 = arith.divf %306, %307 : vector<8x32xf32>
    %309 = arith.mulf %300, %245 : vector<8x32xf32>
    %310 = arith.mulf %294, %302 : vector<8x32xf32>
    %311 = arith.addf %309, %310 : vector<8x32xf32>
    %312 = math.tanh %311 : vector<8x32xf32>
    %313 = arith.mulf %308, %312 : vector<8x32xf32>
    %314 = vector.extract_strided_slice %288 {offsets = [0, 0], sizes = [8, 32], strides = [1, 1]} : vector<8x128xf32> to vector<8x32xf32>
    %315 = arith.negf %314 : vector<8x32xf32>
    %316 = math.exp %315 : vector<8x32xf32>
    %cst_71 = arith.constant 1.000000e+00 : f32
    %317 = vector.broadcast %cst_71 : f32 to vector<8x32xf32>
    %318 = arith.addf %317, %316 : vector<8x32xf32>
    %319 = arith.divf %317, %318 : vector<8x32xf32>
    %320 = vector.extract_strided_slice %288 {offsets = [0, 32], sizes = [8, 32], strides = [1, 1]} : vector<8x128xf32> to vector<8x32xf32>
    %321 = arith.negf %320 : vector<8x32xf32>
    %322 = math.exp %321 : vector<8x32xf32>
    %cst_72 = arith.constant 1.000000e+00 : f32
    %323 = vector.broadcast %cst_72 : f32 to vector<8x32xf32>
    %324 = arith.addf %323, %322 : vector<8x32xf32>
    %325 = arith.divf %323, %324 : vector<8x32xf32>
    %326 = vector.extract_strided_slice %288 {offsets = [0, 64], sizes = [8, 32], strides = [1, 1]} : vector<8x128xf32> to vector<8x32xf32>
    %327 = math.tanh %326 : vector<8x32xf32>
    %328 = vector.extract_strided_slice %288 {offsets = [0, 96], sizes = [8, 32], strides = [1, 1]} : vector<8x128xf32> to vector<8x32xf32>
    %329 = arith.negf %328 : vector<8x32xf32>
    %330 = math.exp %329 : vector<8x32xf32>
    %cst_73 = arith.constant 1.000000e+00 : f32
    %331 = vector.broadcast %cst_73 : f32 to vector<8x32xf32>
    %332 = arith.addf %331, %330 : vector<8x32xf32>
    %333 = arith.divf %331, %332 : vector<8x32xf32>
    %334 = arith.mulf %325, %270 : vector<8x32xf32>
    %335 = arith.mulf %319, %327 : vector<8x32xf32>
    %336 = arith.addf %334, %335 : vector<8x32xf32>
    %337 = math.tanh %336 : vector<8x32xf32>
    %338 = arith.mulf %333, %337 : vector<8x32xf32>
    %339 = arith.truncf %313 : vector<8x32xf32> to vector<8x32xbf16>
    %c4_74 = arith.constant 4 : index
    %c0_75 = arith.constant 0 : index
    %c0_76 = arith.constant 0 : index
    %340 = vector.load %arg7[%c4_74, %c0_75, %c0_76] : memref<8x8x64xbf16, #tpu.memory_space<vmem>>, vector<1x8x32xbf16>
    %341 = vector.shape_cast %340 : vector<1x8x32xbf16> to vector<8x32xbf16>
    %342 = vector.shape_cast %339 : vector<8x32xbf16> to vector<1x8x32xbf16>
    tpu.vector_store %arg7[%c4_74, %c0_75, %c0_76], %342 {strides = array<i32>} : memref<8x8x64xbf16, #tpu.memory_space<vmem>>, vector<1x8x32xbf16>,
    %343 = arith.truncf %338 : vector<8x32xf32> to vector<8x32xbf16>
    %c3_77 = arith.constant 3 : index
    %c0_78 = arith.constant 0 : index
    %c32_79 = arith.constant 32 : index
    %344 = vector.load %arg7[%c3_77, %c0_78, %c32_79] : memref<8x8x64xbf16, #tpu.memory_space<vmem>>, vector<1x8x32xbf16>
    %345 = vector.shape_cast %344 : vector<1x8x32xbf16> to vector<8x32xbf16>
    %346 = vector.shape_cast %343 : vector<8x32xbf16> to vector<1x8x32xbf16>
    tpu.vector_store %arg7[%c3_77, %c0_78, %c32_79], %346 {strides = array<i32>} : memref<8x8x64xbf16, #tpu.memory_space<vmem>>, vector<1x8x32xbf16>,
    %347 = vector.extract_strided_slice %5 {offsets = [40, 0], sizes = [8, 128], strides = [1, 1]} : vector<64x128xf32> to vector<8x128xf32>
    %348 = arith.truncf %313 : vector<8x32xf32> to vector<8x32xbf16>
    %cst_80 = arith.constant dense<0.000000e+00> : vector<8x128xf32>
    %349 = tpu.matmul %348, %11, %cst_80 {dimension_numbers = #tpu.dot_dimension_numbers<[1], [0], [0], [1], [0, 0, 1, 1], [], []>} : vector<8x32xbf16>, vector<32x128xbf16>, vector<8x128xf32> -> vector<8x128xf32>
    %350 = arith.addf %347, %349 : vector<8x128xf32>
    %351 = vector.extract_strided_slice %10 {offsets = [16, 0], sizes = [8, 128], strides = [1, 1]} : vector<64x128xf32> to vector<8x128xf32>
    %352 = arith.truncf %338 : vector<8x32xf32> to vector<8x32xbf16>
    %cst_81 = arith.constant dense<0.000000e+00> : vector<8x128xf32>
    %353 = tpu.matmul %352, %12, %cst_81 {dimension_numbers = #tpu.dot_dimension_numbers<[1], [0], [0], [1], [0, 0, 1, 1], [], []>} : vector<8x32xbf16>, vector<32x128xbf16>, vector<8x128xf32> -> vector<8x128xf32>
    %354 = arith.addf %351, %353 : vector<8x128xf32>
    %355 = vector.extract_strided_slice %350 {offsets = [0, 0], sizes = [8, 32], strides = [1, 1]} : vector<8x128xf32> to vector<8x32xf32>
    %356 = arith.negf %355 : vector<8x32xf32>
    %357 = math.exp %356 : vector<8x32xf32>
    %cst_82 = arith.constant 1.000000e+00 : f32
    %358 = vector.broadcast %cst_82 : f32 to vector<8x32xf32>
    %359 = arith.addf %358, %357 : vector<8x32xf32>
    %360 = arith.divf %358, %359 : vector<8x32xf32>
    %361 = vector.extract_strided_slice %350 {offsets = [0, 32], sizes = [8, 32], strides = [1, 1]} : vector<8x128xf32> to vector<8x32xf32>
    %362 = arith.negf %361 : vector<8x32xf32>
    %363 = math.exp %362 : vector<8x32xf32>
    %cst_83 = arith.constant 1.000000e+00 : f32
    %364 = vector.broadcast %cst_83 : f32 to vector<8x32xf32>
    %365 = arith.addf %364, %363 : vector<8x32xf32>
    %366 = arith.divf %364, %365 : vector<8x32xf32>
    %367 = vector.extract_strided_slice %350 {offsets = [0, 64], sizes = [8, 32], strides = [1, 1]} : vector<8x128xf32> to vector<8x32xf32>
    %368 = math.tanh %367 : vector<8x32xf32>
    %369 = vector.extract_strided_slice %350 {offsets = [0, 96], sizes = [8, 32], strides = [1, 1]} : vector<8x128xf32> to vector<8x32xf32>
    %370 = arith.negf %369 : vector<8x32xf32>
    %371 = math.exp %370 : vector<8x32xf32>
    %cst_84 = arith.constant 1.000000e+00 : f32
    %372 = vector.broadcast %cst_84 : f32 to vector<8x32xf32>
    %373 = arith.addf %372, %371 : vector<8x32xf32>
    %374 = arith.divf %372, %373 : vector<8x32xf32>
    %375 = arith.mulf %366, %311 : vector<8x32xf32>
    %376 = arith.mulf %360, %368 : vector<8x32xf32>
    %377 = arith.addf %375, %376 : vector<8x32xf32>
    %378 = math.tanh %377 : vector<8x32xf32>
    %379 = arith.mulf %374, %378 : vector<8x32xf32>
    %380 = vector.extract_strided_slice %354 {offsets = [0, 0], sizes = [8, 32], strides = [1, 1]} : vector<8x128xf32> to vector<8x32xf32>
    %381 = arith.negf %380 : vector<8x32xf32>
    %382 = math.exp %381 : vector<8x32xf32>
    %cst_85 = arith.constant 1.000000e+00 : f32
    %383 = vector.broadcast %cst_85 : f32 to vector<8x32xf32>
    %384 = arith.addf %383, %382 : vector<8x32xf32>
    %385 = arith.divf %383, %384 : vector<8x32xf32>
    %386 = vector.extract_strided_slice %354 {offsets = [0, 32], sizes = [8, 32], strides = [1, 1]} : vector<8x128xf32> to vector<8x32xf32>
    %387 = arith.negf %386 : vector<8x32xf32>
    %388 = math.exp %387 : vector<8x32xf32>
    %cst_86 = arith.constant 1.000000e+00 : f32
    %389 = vector.broadcast %cst_86 : f32 to vector<8x32xf32>
    %390 = arith.addf %389, %388 : vector<8x32xf32>
    %391 = arith.divf %389, %390 : vector<8x32xf32>
    %392 = vector.extract_strided_slice %354 {offsets = [0, 64], sizes = [8, 32], strides = [1, 1]} : vector<8x128xf32> to vector<8x32xf32>
    %393 = math.tanh %392 : vector<8x32xf32>
    %394 = vector.extract_strided_slice %354 {offsets = [0, 96], sizes = [8, 32], strides = [1, 1]} : vector<8x128xf32> to vector<8x32xf32>
    %395 = arith.negf %394 : vector<8x32xf32>
    %396 = math.exp %395 : vector<8x32xf32>
    %cst_87 = arith.constant 1.000000e+00 : f32
    %397 = vector.broadcast %cst_87 : f32 to vector<8x32xf32>
    %398 = arith.addf %397, %396 : vector<8x32xf32>
    %399 = arith.divf %397, %398 : vector<8x32xf32>
    %400 = arith.mulf %391, %336 : vector<8x32xf32>
    %401 = arith.mulf %385, %393 : vector<8x32xf32>
    %402 = arith.addf %400, %401 : vector<8x32xf32>
    %403 = math.tanh %402 : vector<8x32xf32>
    %404 = arith.mulf %399, %403 : vector<8x32xf32>
    %405 = arith.truncf %379 : vector<8x32xf32> to vector<8x32xbf16>
    %c5_88 = arith.constant 5 : index
    %c0_89 = arith.constant 0 : index
    %c0_90 = arith.constant 0 : index
    %406 = vector.load %arg7[%c5_88, %c0_89, %c0_90] : memref<8x8x64xbf16, #tpu.memory_space<vmem>>, vector<1x8x32xbf16>
    %407 = vector.shape_cast %406 : vector<1x8x32xbf16> to vector<8x32xbf16>
    %408 = vector.shape_cast %405 : vector<8x32xbf16> to vector<1x8x32xbf16>
    tpu.vector_store %arg7[%c5_88, %c0_89, %c0_90], %408 {strides = array<i32>} : memref<8x8x64xbf16, #tpu.memory_space<vmem>>, vector<1x8x32xbf16>,
    %409 = arith.truncf %404 : vector<8x32xf32> to vector<8x32xbf16>
    %c2_91 = arith.constant 2 : index
    %c0_92 = arith.constant 0 : index
    %c32_93 = arith.constant 32 : index
    %410 = vector.load %arg7[%c2_91, %c0_92, %c32_93] : memref<8x8x64xbf16, #tpu.memory_space<vmem>>, vector<1x8x32xbf16>
    %411 = vector.shape_cast %410 : vector<1x8x32xbf16> to vector<8x32xbf16>
    %412 = vector.shape_cast %409 : vector<8x32xbf16> to vector<1x8x32xbf16>
    tpu.vector_store %arg7[%c2_91, %c0_92, %c32_93], %412 {strides = array<i32>} : memref<8x8x64xbf16, #tpu.memory_space<vmem>>, vector<1x8x32xbf16>,
    %413 = vector.extract_strided_slice %5 {offsets = [48, 0], sizes = [8, 128], strides = [1, 1]} : vector<64x128xf32> to vector<8x128xf32>
    %414 = arith.truncf %379 : vector<8x32xf32> to vector<8x32xbf16>
    %cst_94 = arith.constant dense<0.000000e+00> : vector<8x128xf32>
    %415 = tpu.matmul %414, %11, %cst_94 {dimension_numbers = #tpu.dot_dimension_numbers<[1], [0], [0], [1], [0, 0, 1, 1], [], []>} : vector<8x32xbf16>, vector<32x128xbf16>, vector<8x128xf32> -> vector<8x128xf32>
    %416 = arith.addf %413, %415 : vector<8x128xf32>
    %417 = vector.extract_strided_slice %10 {offsets = [8, 0], sizes = [8, 128], strides = [1, 1]} : vector<64x128xf32> to vector<8x128xf32>
    %418 = arith.truncf %404 : vector<8x32xf32> to vector<8x32xbf16>
    %cst_95 = arith.constant dense<0.000000e+00> : vector<8x128xf32>
    %419 = tpu.matmul %418, %12, %cst_95 {dimension_numbers = #tpu.dot_dimension_numbers<[1], [0], [0], [1], [0, 0, 1, 1], [], []>} : vector<8x32xbf16>, vector<32x128xbf16>, vector<8x128xf32> -> vector<8x128xf32>
    %420 = arith.addf %417, %419 : vector<8x128xf32>
    %421 = vector.extract_strided_slice %416 {offsets = [0, 0], sizes = [8, 32], strides = [1, 1]} : vector<8x128xf32> to vector<8x32xf32>
    %422 = arith.negf %421 : vector<8x32xf32>
    %423 = math.exp %422 : vector<8x32xf32>
    %cst_96 = arith.constant 1.000000e+00 : f32
    %424 = vector.broadcast %cst_96 : f32 to vector<8x32xf32>
    %425 = arith.addf %424, %423 : vector<8x32xf32>
    %426 = arith.divf %424, %425 : vector<8x32xf32>
    %427 = vector.extract_strided_slice %416 {offsets = [0, 32], sizes = [8, 32], strides = [1, 1]} : vector<8x128xf32> to vector<8x32xf32>
    %428 = arith.negf %427 : vector<8x32xf32>
    %429 = math.exp %428 : vector<8x32xf32>
    %cst_97 = arith.constant 1.000000e+00 : f32
    %430 = vector.broadcast %cst_97 : f32 to vector<8x32xf32>
    %431 = arith.addf %430, %429 : vector<8x32xf32>
    %432 = arith.divf %430, %431 : vector<8x32xf32>
    %433 = vector.extract_strided_slice %416 {offsets = [0, 64], sizes = [8, 32], strides = [1, 1]} : vector<8x128xf32> to vector<8x32xf32>
    %434 = math.tanh %433 : vector<8x32xf32>
    %435 = vector.extract_strided_slice %416 {offsets = [0, 96], sizes = [8, 32], strides = [1, 1]} : vector<8x128xf32> to vector<8x32xf32>
    %436 = arith.negf %435 : vector<8x32xf32>
    %437 = math.exp %436 : vector<8x32xf32>
    %cst_98 = arith.constant 1.000000e+00 : f32
    %438 = vector.broadcast %cst_98 : f32 to vector<8x32xf32>
    %439 = arith.addf %438, %437 : vector<8x32xf32>
    %440 = arith.divf %438, %439 : vector<8x32xf32>
    %441 = arith.mulf %432, %377 : vector<8x32xf32>
    %442 = arith.mulf %426, %434 : vector<8x32xf32>
    %443 = arith.addf %441, %442 : vector<8x32xf32>
    %444 = math.tanh %443 : vector<8x32xf32>
    %445 = arith.mulf %440, %444 : vector<8x32xf32>
    %446 = vector.extract_strided_slice %420 {offsets = [0, 0], sizes = [8, 32], strides = [1, 1]} : vector<8x128xf32> to vector<8x32xf32>
    %447 = arith.negf %446 : vector<8x32xf32>
    %448 = math.exp %447 : vector<8x32xf32>
    %cst_99 = arith.constant 1.000000e+00 : f32
    %449 = vector.broadcast %cst_99 : f32 to vector<8x32xf32>
    %450 = arith.addf %449, %448 : vector<8x32xf32>
    %451 = arith.divf %449, %450 : vector<8x32xf32>
    %452 = vector.extract_strided_slice %420 {offsets = [0, 32], sizes = [8, 32], strides = [1, 1]} : vector<8x128xf32> to vector<8x32xf32>
    %453 = arith.negf %452 : vector<8x32xf32>
    %454 = math.exp %453 : vector<8x32xf32>
    %cst_100 = arith.constant 1.000000e+00 : f32
    %455 = vector.broadcast %cst_100 : f32 to vector<8x32xf32>
    %456 = arith.addf %455, %454 : vector<8x32xf32>
    %457 = arith.divf %455, %456 : vector<8x32xf32>
    %458 = vector.extract_strided_slice %420 {offsets = [0, 64], sizes = [8, 32], strides = [1, 1]} : vector<8x128xf32> to vector<8x32xf32>
    %459 = math.tanh %458 : vector<8x32xf32>
    %460 = vector.extract_strided_slice %420 {offsets = [0, 96], sizes = [8, 32], strides = [1, 1]} : vector<8x128xf32> to vector<8x32xf32>
    %461 = arith.negf %460 : vector<8x32xf32>
    %462 = math.exp %461 : vector<8x32xf32>
    %cst_101 = arith.constant 1.000000e+00 : f32
    %463 = vector.broadcast %cst_101 : f32 to vector<8x32xf32>
    %464 = arith.addf %463, %462 : vector<8x32xf32>
    %465 = arith.divf %463, %464 : vector<8x32xf32>
    %466 = arith.mulf %457, %402 : vector<8x32xf32>
    %467 = arith.mulf %451, %459 : vector<8x32xf32>
    %468 = arith.addf %466, %467 : vector<8x32xf32>
    %469 = math.tanh %468 : vector<8x32xf32>
    %470 = arith.mulf %465, %469 : vector<8x32xf32>
    %471 = arith.truncf %445 : vector<8x32xf32> to vector<8x32xbf16>
    %c6_102 = arith.constant 6 : index
    %c0_103 = arith.constant 0 : index
    %c0_104 = arith.constant 0 : index
    %472 = vector.load %arg7[%c6_102, %c0_103, %c0_104] : memref<8x8x64xbf16, #tpu.memory_space<vmem>>, vector<1x8x32xbf16>
    %473 = vector.shape_cast %472 : vector<1x8x32xbf16> to vector<8x32xbf16>
    %474 = vector.shape_cast %471 : vector<8x32xbf16> to vector<1x8x32xbf16>
    tpu.vector_store %arg7[%c6_102, %c0_103, %c0_104], %474 {strides = array<i32>} : memref<8x8x64xbf16, #tpu.memory_space<vmem>>, vector<1x8x32xbf16>,
    %475 = arith.truncf %470 : vector<8x32xf32> to vector<8x32xbf16>
    %c1_105 = arith.constant 1 : index
    %c0_106 = arith.constant 0 : index
    %c32_107 = arith.constant 32 : index
    %476 = vector.load %arg7[%c1_105, %c0_106, %c32_107] : memref<8x8x64xbf16, #tpu.memory_space<vmem>>, vector<1x8x32xbf16>
    %477 = vector.shape_cast %476 : vector<1x8x32xbf16> to vector<8x32xbf16>
    %478 = vector.shape_cast %475 : vector<8x32xbf16> to vector<1x8x32xbf16>
    tpu.vector_store %arg7[%c1_105, %c0_106, %c32_107], %478 {strides = array<i32>} : memref<8x8x64xbf16, #tpu.memory_space<vmem>>, vector<1x8x32xbf16>,
    %479 = vector.extract_strided_slice %5 {offsets = [56, 0], sizes = [8, 128], strides = [1, 1]} : vector<64x128xf32> to vector<8x128xf32>
    %480 = arith.truncf %445 : vector<8x32xf32> to vector<8x32xbf16>
    %cst_108 = arith.constant dense<0.000000e+00> : vector<8x128xf32>
    %481 = tpu.matmul %480, %11, %cst_108 {dimension_numbers = #tpu.dot_dimension_numbers<[1], [0], [0], [1], [0, 0, 1, 1], [], []>} : vector<8x32xbf16>, vector<32x128xbf16>, vector<8x128xf32> -> vector<8x128xf32>
    %482 = arith.addf %479, %481 : vector<8x128xf32>
    %483 = vector.extract_strided_slice %10 {offsets = [0, 0], sizes = [8, 128], strides = [1, 1]} : vector<64x128xf32> to vector<8x128xf32>
    %484 = arith.truncf %470 : vector<8x32xf32> to vector<8x32xbf16>
    %cst_109 = arith.constant dense<0.000000e+00> : vector<8x128xf32>
    %485 = tpu.matmul %484, %12, %cst_109 {dimension_numbers = #tpu.dot_dimension_numbers<[1], [0], [0], [1], [0, 0, 1, 1], [], []>} : vector<8x32xbf16>, vector<32x128xbf16>, vector<8x128xf32> -> vector<8x128xf32>
    %486 = arith.addf %483, %485 : vector<8x128xf32>
    %487 = vector.extract_strided_slice %482 {offsets = [0, 0], sizes = [8, 32], strides = [1, 1]} : vector<8x128xf32> to vector<8x32xf32>
    %488 = arith.negf %487 : vector<8x32xf32>
    %489 = math.exp %488 : vector<8x32xf32>
    %cst_110 = arith.constant 1.000000e+00 : f32
    %490 = vector.broadcast %cst_110 : f32 to vector<8x32xf32>
    %491 = arith.addf %490, %489 : vector<8x32xf32>
    %492 = arith.divf %490, %491 : vector<8x32xf32>
    %493 = vector.extract_strided_slice %482 {offsets = [0, 32], sizes = [8, 32], strides = [1, 1]} : vector<8x128xf32> to vector<8x32xf32>
    %494 = arith.negf %493 : vector<8x32xf32>
    %495 = math.exp %494 : vector<8x32xf32>
    %cst_111 = arith.constant 1.000000e+00 : f32
    %496 = vector.broadcast %cst_111 : f32 to vector<8x32xf32>
    %497 = arith.addf %496, %495 : vector<8x32xf32>
    %498 = arith.divf %496, %497 : vector<8x32xf32>
    %499 = vector.extract_strided_slice %482 {offsets = [0, 64], sizes = [8, 32], strides = [1, 1]} : vector<8x128xf32> to vector<8x32xf32>
    %500 = math.tanh %499 : vector<8x32xf32>
    %501 = vector.extract_strided_slice %482 {offsets = [0, 96], sizes = [8, 32], strides = [1, 1]} : vector<8x128xf32> to vector<8x32xf32>
    %502 = arith.negf %501 : vector<8x32xf32>
    %503 = math.exp %502 : vector<8x32xf32>
    %cst_112 = arith.constant 1.000000e+00 : f32
    %504 = vector.broadcast %cst_112 : f32 to vector<8x32xf32>
    %505 = arith.addf %504, %503 : vector<8x32xf32>
    %506 = arith.divf %504, %505 : vector<8x32xf32>
    %507 = arith.mulf %498, %443 : vector<8x32xf32>
    %508 = arith.mulf %492, %500 : vector<8x32xf32>
    %509 = arith.addf %507, %508 : vector<8x32xf32>
    %510 = math.tanh %509 : vector<8x32xf32>
    %511 = arith.mulf %506, %510 : vector<8x32xf32>
    %512 = vector.extract_strided_slice %486 {offsets = [0, 0], sizes = [8, 32], strides = [1, 1]} : vector<8x128xf32> to vector<8x32xf32>
    %513 = arith.negf %512 : vector<8x32xf32>
    %514 = math.exp %513 : vector<8x32xf32>
    %cst_113 = arith.constant 1.000000e+00 : f32
    %515 = vector.broadcast %cst_113 : f32 to vector<8x32xf32>
    %516 = arith.addf %515, %514 : vector<8x32xf32>
    %517 = arith.divf %515, %516 : vector<8x32xf32>
    %518 = vector.extract_strided_slice %486 {offsets = [0, 32], sizes = [8, 32], strides = [1, 1]} : vector<8x128xf32> to vector<8x32xf32>
    %519 = arith.negf %518 : vector<8x32xf32>
    %520 = math.exp %519 : vector<8x32xf32>
    %cst_114 = arith.constant 1.000000e+00 : f32
    %521 = vector.broadcast %cst_114 : f32 to vector<8x32xf32>
    %522 = arith.addf %521, %520 : vector<8x32xf32>
    %523 = arith.divf %521, %522 : vector<8x32xf32>
    %524 = vector.extract_strided_slice %486 {offsets = [0, 64], sizes = [8, 32], strides = [1, 1]} : vector<8x128xf32> to vector<8x32xf32>
    %525 = math.tanh %524 : vector<8x32xf32>
    %526 = vector.extract_strided_slice %486 {offsets = [0, 96], sizes = [8, 32], strides = [1, 1]} : vector<8x128xf32> to vector<8x32xf32>
    %527 = arith.negf %526 : vector<8x32xf32>
    %528 = math.exp %527 : vector<8x32xf32>
    %cst_115 = arith.constant 1.000000e+00 : f32
    %529 = vector.broadcast %cst_115 : f32 to vector<8x32xf32>
    %530 = arith.addf %529, %528 : vector<8x32xf32>
    %531 = arith.divf %529, %530 : vector<8x32xf32>
    %532 = arith.mulf %523, %468 : vector<8x32xf32>
    %533 = arith.mulf %517, %525 : vector<8x32xf32>
    %534 = arith.addf %532, %533 : vector<8x32xf32>
    %535 = math.tanh %534 : vector<8x32xf32>
    %536 = arith.mulf %531, %535 : vector<8x32xf32>
    %537 = arith.truncf %511 : vector<8x32xf32> to vector<8x32xbf16>
    %c7_116 = arith.constant 7 : index
    %c0_117 = arith.constant 0 : index
    %c0_118 = arith.constant 0 : index
    %538 = vector.load %arg7[%c7_116, %c0_117, %c0_118] : memref<8x8x64xbf16, #tpu.memory_space<vmem>>, vector<1x8x32xbf16>
    %539 = vector.shape_cast %538 : vector<1x8x32xbf16> to vector<8x32xbf16>
    %540 = vector.shape_cast %537 : vector<8x32xbf16> to vector<1x8x32xbf16>
    tpu.vector_store %arg7[%c7_116, %c0_117, %c0_118], %540 {strides = array<i32>} : memref<8x8x64xbf16, #tpu.memory_space<vmem>>, vector<1x8x32xbf16>,
    %541 = arith.truncf %536 : vector<8x32xf32> to vector<8x32xbf16>
    %c0_119 = arith.constant 0 : index
    %c0_120 = arith.constant 0 : index
    %c32_121 = arith.constant 32 : index
    %542 = vector.load %arg7[%c0_119, %c0_120, %c32_121] : memref<8x8x64xbf16, #tpu.memory_space<vmem>>, vector<1x8x32xbf16>
    %543 = vector.shape_cast %542 : vector<1x8x32xbf16> to vector<8x32xbf16>
    %544 = vector.shape_cast %541 : vector<8x32xbf16> to vector<1x8x32xbf16>
    tpu.vector_store %arg7[%c0_119, %c0_120, %c32_121], %544 {strides = array<i32>} : memref<8x8x64xbf16, #tpu.memory_space<vmem>>, vector<1x8x32xbf16>,
    %c0_122 = arith.constant 0 : index
    %c0_123 = arith.constant 0 : index
    %545 = vector.load %arg8[%c0_122, %c0_123] : memref<8x64xf32, #tpu.memory_space<vmem>>, vector<8x32xf32>
    tpu.vector_store %arg8[%c0_122, %c0_123], %509 {strides = array<i32>} : memref<8x64xf32, #tpu.memory_space<vmem>>, vector<8x32xf32>,
    %c0_124 = arith.constant 0 : index
    %c32_125 = arith.constant 32 : index
    %546 = vector.load %arg8[%c0_124, %c32_125] : memref<8x64xf32, #tpu.memory_space<vmem>>, vector<8x32xf32>
    tpu.vector_store %arg8[%c0_124, %c32_125], %534 {strides = array<i32>} : memref<8x64xf32, #tpu.memory_space<vmem>>, vector<8x32xf32>,
    return
  }
}

</mosaic_0001>

<llo_original>
// kernel: bilstm_forward.2
$region0: #{bilstm_forward.2}
  #allocation0 [shape = 'u32[]', space=smem, size = 0x4, offset = 0x4, fixed_abs, tag = 'smem constant byte address 0x4 - core index']
  #allocation1 [shape = 'u32[144,128]{1,0:T(1,128)}', space=vmem, size = 0x12000, scoped, tag = 'internal scratch']
  %s0 = inlined_call_operand.vmem [shape: bf16[64,16], index: 0, kind: input, shape index: {}]
  %s1 = inlined_call_operand.vmem [shape: bf16[16,128], index: 1, kind: input, shape index: {}]
  %s2 = inlined_call_operand.vmem [shape: bf16[32,128], index: 2, kind: input, shape index: {}]
  %s3 = inlined_call_operand.vmem [shape: f32[1,128], index: 3, kind: input, shape index: {}]
  %s4 = inlined_call_operand.vmem [shape: bf16[16,128], index: 4, kind: input, shape index: {}]
  %s5 = inlined_call_operand.vmem [shape: bf16[32,128], index: 5, kind: input, shape index: {}]
  %s6 = inlined_call_operand.vmem [shape: f32[1,128], index: 6, kind: input, shape index: {}]
  %s7 = inlined_call_operand.vmem [shape: bf16[8,8,64], index: 7, kind: output, shape index: {0}]
  %s8 = inlined_call_operand.vmem [shape: f32[8,64], index: 8, kind: output, shape index: {1}]
  %9 = xla_tuple %s7, %s8
  %s10 = sld [smem:[#allocation0]]
  $region46: #{bilstm_forward.2} parent=0
    _
  %s12 = ssub.s32 1, %s10
  %s13 = scalar_select 0, %s12, %s10
  // Predicated region
  $region2: #{bilstm_forward.2} parent=0 // pred_check
    _
  $region3: #{bilstm_forward.2} parent=0 // pred_check_branch
    %15 = sbr.rel (0) target = $region5
  $region4: #{bilstm_forward.2} parent=0 // pred_region
    _
  $region5: #{bilstm_forward.2} parent=0 // pred_fallthru
    _
  // Predicated region
  $region6: #{bilstm_forward.2} parent=0 // pred_check
    _
  $region7: #{bilstm_forward.2} parent=0 // pred_check_branch
    %17 = sbr.rel (0) target = $region9
  $region8: #{bilstm_forward.2} parent=0 // pred_region
    _
  $region9: #{bilstm_forward.2} parent=0 // pred_fallthru
    _
  // Predicated region
  $region10: #{bilstm_forward.2} parent=0 // pred_check
    _
  $region11: #{bilstm_forward.2} parent=0 // pred_check_branch
    %19 = sbr.rel (0) target = $region13
  $region12: #{bilstm_forward.2} parent=0 // pred_region
    _
  $region13: #{bilstm_forward.2} parent=0 // pred_fallthru
    _
  // Predicated region
  $region14: #{bilstm_forward.2} parent=0 // pred_check
    _
  $region15: #{bilstm_forward.2} parent=0 // pred_check_branch
    %21 = sbr.rel (0) target = $region17
  $region16: #{bilstm_forward.2} parent=0 // pred_region
    _
  $region17: #{bilstm_forward.2} parent=0 // pred_fallthru
    _
  // Predicated region
  $region18: #{bilstm_forward.2} parent=0 // pred_check
    _
  $region19: #{bilstm_forward.2} parent=0 // pred_check_branch
    %23 = sbr.rel (0) target = $region21
  $region20: #{bilstm_forward.2} parent=0 // pred_region
    _
  $region21: #{bilstm_forward.2} parent=0 // pred_fallthru
    _
  // Predicated region
  $region22: #{bilstm_forward.2} parent=0 // pred_check
    _
  $region23: #{bilstm_forward.2} parent=0 // pred_check_branch
    %25 = sbr.rel (0) target = $region25
  $region24: #{bilstm_forward.2} parent=0 // pred_region
    _
  $region25: #{bilstm_forward.2} parent=0 // pred_fallthru
    _
  // Predicated region
  $region26: #{bilstm_forward.2} parent=0 // pred_check
    _
  $region27: #{bilstm_forward.2} parent=0 // pred_check_branch
    %27 = sbr.rel (0) target = $region29
  $region28: #{bilstm_forward.2} parent=0 // pred_region
    _
  $region29: #{bilstm_forward.2} parent=0 // pred_fallthru
    _
  %v29 = vld [vmem:[%s0] sm:$0xf]
  %v30 = vld [vmem:[%s0 + $0x4] sm:$0xf]
  %v31 = vld [vmem:[%s0 + $0x8] sm:$0xf]
  %v32 = vld [vmem:[%s0 + $0xc] sm:$0xf]
  %v33 = vld [vmem:[%s0 + $0x10] sm:$0xf]
  %v34 = vld [vmem:[%s0 + $0x14] sm:$0xf]
  %v35 = vld [vmem:[%s0 + $0x18] sm:$0xf]
  %v36 = vld [vmem:[%s0 + $0x1c] sm:$0xf]
  %v37 = vld [vmem:[%s1] sm:$0xf]
  %v38 = vld [vmem:[%s1 + $0x4] sm:$0xf]
  %v39 = vld [vmem:[%s3] sm:$0x1]
  %v41 = vlaneseq
  %v42 = vshrl.u32 %v41, 7
  %v43 = vsub.s32 0, %v42
  %v44 = vrot.slane %v39, %v43
  %v54 = vunpack.c.l.b16 %v29
  %v55 = vunpack.c.l.b16 %v30
  %v56 = vunpack.c.l.b16 %v31
  %v57 = vunpack.c.l.b16 %v32
  %v58 = vunpack.c.l.b16 %v33
  %v59 = vunpack.c.l.b16 %v34
  %v60 = vunpack.c.l.b16 %v35
  %v61 = vunpack.c.l.b16 %v36
  %v62 = vpack.c.b16 %v55, %v54
  %v63 = vpack.c.b16 %v57, %v56
  %v64 = vpack.c.b16 %v59, %v58
  %v65 = vpack.c.b16 %v61, %v60
  %v68 = vunpack.c.l.b16 %v37
  %v69 = vunpack.c.l.b16 %v38
  %v70 = vpack.c.b16 %v69, %v68
  %vm72 = vcmask 130048
  %v74 = vsel %vm72, %v62, 0
  %v77 = vsel %vm72, %v63, 0
  %v80 = vsel %vm72, %v64, 0
  %v83 = vsel %vm72, %v65, 0
  %85 = vmatprep.subr.bf16.mxu0 0
  %86 = vmatpush1.bf16.msra.mxu0 0
  %87 = vmatprep.subr.bf16.mxu0 0
  %88 = vmatpush1.bf16.msra.mxu0 0
  %89 = vmatprep.subr.bf16.mxu0 0
  %90 = vmatpush1.bf16.msra.mxu0 0
  %91 = vmatprep.subr.bf16.mxu0 0
  %92 = vmatpush1.bf16.msra.mxu0 0
  %93 = vmatprep.subr.bf16.mxu0 0
  %94 = vmatpush1.bf16.msra.mxu0 0
  %95 = vmatprep.subr.bf16.mxu0 0
  %96 = vmatpush1.bf16.msra.mxu0 0
  %97 = vmatprep.subr.bf16.mxu0 0
  %98 = vmatpush1.bf16.msra.mxu0 0
  %99 = vmatprep.subr.bf16.mxu0 0
  %100 = vmatpush1.bf16.msra.mxu0 %v70
  %101 = vmatprep.subr.bf16.mxu0 0
  %102 = vmatpush2.bf16.msra.mxu0 0
  %103 = vmatprep.subr.bf16.mxu0 0
  %104 = vmatpush2.bf16.msra.mxu0 0
  %105 = vmatprep.subr.bf16.mxu0 0
  %106 = vmatpush2.bf16.msra.mxu0 0
  %107 = vmatprep.subr.bf16.mxu0 0
  %108 = vmatpush2.bf16.msra.mxu0 0
  %109 = vmatprep.subr.bf16.mxu0 0
  %110 = vmatpush2.bf16.msra.mxu0 0
  %111 = vmatprep.subr.bf16.mxu0 0
  %112 = vmatpush2.bf16.msra.mxu0 0
  %113 = vmatprep.subr.bf16.mxu0 0
  %114 = vmatpush2.bf16.msra.mxu0 0
  %115 = vmatprep.subr.bf16.mxu0 0
  %116 = vmatpush2.bf16.msra.mxu0 0
  %117 = vmatprep.mubr.bf16.mxu0 0
  %118 = vmatmul.mubr.bf16.gmra.mxu0 %v74
  %v119 = vpop.f32.mrf.mxu0
  %v120 = vadd.f32 %v44, %v119
  %v121 = vpop.f32.mrf.mxu0
  %v122 = vpop.f32.mrf.mxu0
  %v123 = vadd.f32 %v44, %v122
  %v124 = vpop.f32.mrf.mxu0
  %125 = vmatprep.mubr.bf16.mxu0 0
  %126 = vmatmul.mubr.bf16.gmra.mxu0 %v77
  %v127 = vpop.f32.mrf.mxu0
  %v128 = vadd.f32 %v44, %v127
  %v129 = vpop.f32.mrf.mxu0
  %v130 = vpop.f32.mrf.mxu0
  %v131 = vadd.f32 %v44, %v130
  %v132 = vpop.f32.mrf.mxu0
  %133 = vmatprep.mubr.bf16.mxu0 0
  %134 = vmatmul.mubr.bf16.gmra.mxu0 %v80
  %v135 = vpop.f32.mrf.mxu0
  %v136 = vadd.f32 %v44, %v135
  %v137 = vpop.f32.mrf.mxu0
  %v138 = vpop.f32.mrf.mxu0
  %v139 = vadd.f32 %v44, %v138
  %v140 = vpop.f32.mrf.mxu0
  %141 = vmatprep.mubr.bf16.mxu0 0
  %142 = vmatmul.mubr.bf16.gmra.mxu0 %v83
  %v143 = vpop.f32.mrf.mxu0
  %v144 = vadd.f32 %v44, %v143
  %v145 = vpop.f32.mrf.mxu0
  %v146 = vpop.f32.mrf.mxu0
  %v147 = vadd.f32 %v44, %v146
  %v148 = vpop.f32.mrf.mxu0
  %149 = vdwg.mxu0
  %v150 = vld [vmem:[%s4] sm:$0xf]
  %v151 = vld [vmem:[%s4 + $0x4] sm:$0xf]
  %v152 = vld [vmem:[%s6] sm:$0x1]
  %v154 = vlaneseq
  %v155 = vshrl.u32 %v154, 7
  %v156 = vsub.s32 0, %v155
  %v157 = vrot.slane %v152, %v156
  %v161 = vunpack.c.l.b16 %v150
  %v162 = vunpack.c.l.b16 %v151
  %v163 = vpack.c.b16 %v162, %v161
  %165 = vmatprep.subr.bf16.mxu0 0
  %166 = vmatpush1.bf16.msra.mxu0 0
  %167 = vmatprep.subr.bf16.mxu0 0
  %168 = vmatpush1.bf16.msra.mxu0 0
  %169 = vmatprep.subr.bf16.mxu0 0
  %170 = vmatpush1.bf16.msra.mxu0 0
  %171 = vmatprep.subr.bf16.mxu0 0
  %172 = vmatpush1.bf16.msra.mxu0 0
  %173 = vmatprep.subr.bf16.mxu0 0
  %174 = vmatpush1.bf16.msra.mxu0 0
  %175 = vmatprep.subr.bf16.mxu0 0
  %176 = vmatpush1.bf16.msra.mxu0 0
  %177 = vmatprep.subr.bf16.mxu0 0
  %178 = vmatpush1.bf16.msra.mxu0 0
  %179 = vmatprep.subr.bf16.mxu0 0
  %180 = vmatpush1.bf16.msra.mxu0 %v163
  %181 = vmatprep.subr.bf16.mxu0 0
  %182 = vmatpush2.bf16.msra.mxu0 0
  %183 = vmatprep.subr.bf16.mxu0 0
  %184 = vmatpush2.bf16.msra.mxu0 0
  %185 = vmatprep.subr.bf16.mxu0 0
  %186 = vmatpush2.bf16.msra.mxu0 0
  %187 = vmatprep.subr.bf16.mxu0 0
  %188 = vmatpush2.bf16.msra.mxu0 0
  %189 = vmatprep.subr.bf16.mxu0 0
  %190 = vmatpush2.bf16.msra.mxu0 0
  %191 = vmatprep.subr.bf16.mxu0 0
  %192 = vmatpush2.bf16.msra.mxu0 0
  %193 = vmatprep.subr.bf16.mxu0 0
  %194 = vmatpush2.bf16.msra.mxu0 0
  %195 = vmatprep.subr.bf16.mxu0 0
  %196 = vmatpush2.bf16.msra.mxu0 0
  %197 = vmatprep.mubr.bf16.mxu0 0
  %198 = vmatmul.mubr.bf16.gmra.mxu0 %v74
  %v199 = vpop.f32.mrf.mxu0
  %v200 = vadd.f32 %v157, %v199
  %v201 = vpop.f32.mrf.mxu0
  %v202 = vpop.f32.mrf.mxu0
  %v203 = vadd.f32 %v157, %v202
  %v204 = vpop.f32.mrf.mxu0
  %205 = vmatprep.mubr.bf16.mxu0 0
  %206 = vmatmul.mubr.bf16.gmra.mxu0 %v77
  %v207 = vpop.f32.mrf.mxu0
  %v208 = vadd.f32 %v157, %v207
  %v209 = vpop.f32.mrf.mxu0
  %v210 = vpop.f32.mrf.mxu0
  %v211 = vadd.f32 %v157, %v210
  %v212 = vpop.f32.mrf.mxu0
  %213 = vmatprep.mubr.bf16.mxu0 0
  %214 = vmatmul.mubr.bf16.gmra.mxu0 %v80
  %v215 = vpop.f32.mrf.mxu0
  %v216 = vadd.f32 %v157, %v215
  %v217 = vpop.f32.mrf.mxu0
  %v218 = vpop.f32.mrf.mxu0
  %v219 = vadd.f32 %v157, %v218
  %v220 = vpop.f32.mrf.mxu0
  %221 = vmatprep.mubr.bf16.mxu0 0
  %222 = vmatmul.mubr.bf16.gmra.mxu0 %v83
  %v223 = vpop.f32.mrf.mxu0
  %v224 = vadd.f32 %v157, %v223
  %v225 = vpop.f32.mrf.mxu0
  %v226 = vpop.f32.mrf.mxu0
  %v227 = vadd.f32 %v157, %v226
  %v228 = vpop.f32.mrf.mxu0
  %229 = vdwg.mxu0
  %v230 = vld [vmem:[%s2] sm:$0xf]
  %v231 = vld [vmem:[%s2 + $0x4] sm:$0xf]
  %v232 = vld [vmem:[%s2 + $0x8] sm:$0xf]
  %v233 = vld [vmem:[%s2 + $0xc] sm:$0xf]
  %v234 = vld [vmem:[%s5] sm:$0xf]
  %v235 = vld [vmem:[%s5 + $0x4] sm:$0xf]
  %v236 = vld [vmem:[%s5 + $0x8] sm:$0xf]
  %v237 = vld [vmem:[%s5 + $0xc] sm:$0xf]
  %v242 = vunpack.c.l.b16 %v230
  %v243 = vunpack.c.l.b16 %v231
  %v244 = vunpack.c.l.b16 %v232
  %v245 = vunpack.c.l.b16 %v233
  %v246 = vpack.c.b16 %v243, %v242
  %v247 = vpack.c.b16 %v245, %v244
  %vm250 = vcmask 261120
  %v252 = vsel %vm250, 0, 0
  %254 = vmatprep.subr.bf16.mxu0 0
  %255 = vmatpush1.bf16.msra.mxu0 0
  %256 = vmatprep.subr.bf16.mxu0 0
  %257 = vmatpush1.bf16.msra.mxu0 0
  %258 = vmatprep.subr.bf16.mxu0 0
  %259 = vmatpush1.bf16.msra.mxu0 0
  %260 = vmatprep.subr.bf16.mxu0 0
  %261 = vmatpush1.bf16.msra.mxu0 0
  %262 = vmatprep.subr.bf16.mxu0 0
  %263 = vmatpush1.bf16.msra.mxu0 0
  %264 = vmatprep.subr.bf16.mxu0 0
  %265 = vmatpush1.bf16.msra.mxu0 0
  %266 = vmatprep.subr.bf16.mxu0 0
  %267 = vmatpush1.bf16.msra.mxu0 %v247
  %268 = vmatprep.subr.bf16.mxu0 0
  %269 = vmatpush1.bf16.msra.mxu0 %v246
  %270 = vmatprep.subr.bf16.mxu0 0
  %271 = vmatpush2.bf16.msra.mxu0 0
  %272 = vmatprep.subr.bf16.mxu0 0
  %273 = vmatpush2.bf16.msra.mxu0 0
  %274 = vmatprep.subr.bf16.mxu0 0
  %275 = vmatpush2.bf16.msra.mxu0 0
  %276 = vmatprep.subr.bf16.mxu0 0
  %277 = vmatpush2.bf16.msra.mxu0 0
  %278 = vmatprep.subr.bf16.mxu0 0
  %279 = vmatpush2.bf16.msra.mxu0 0
  %280 = vmatprep.subr.bf16.mxu0 0
  %281 = vmatpush2.bf16.msra.mxu0 0
  %282 = vmatprep.subr.bf16.mxu0 0
  %283 = vmatpush2.bf16.msra.mxu0 0
  %284 = vmatprep.subr.bf16.mxu0 0
  %285 = vmatpush2.bf16.msra.mxu0 0
  %286 = vmatprep.mubr.bf16.mxu0 0
  %287 = vmatmul.mubr.bf16.gmra.mxu0 %v252
  %v288 = vpop.f32.mrf.mxu0
  %v289 = vadd.f32 0.0, %v288
  %v290 = vpop.f32.mrf.mxu0
  %v291 = vpop.f32.mrf.mxu0
  %v292 = vpop.f32.mrf.mxu0
  %293 = vdwg.mxu0
  %v294 = vadd.f32 %v120, %v289
  %v299 = vunpack.c.l.b16 %v234
  %v300 = vunpack.c.l.b16 %v235
  %v301 = vunpack.c.l.b16 %v236
  %v302 = vunpack.c.l.b16 %v237
  %v303 = vpack.c.b16 %v300, %v299
  %v304 = vpack.c.b16 %v302, %v301
  %307 = vmatprep.subr.bf16.mxu0 0
  %308 = vmatpush1.bf16.msra.mxu0 0
  %309 = vmatprep.subr.bf16.mxu0 0
  %310 = vmatpush1.bf16.msra.mxu0 0
  %311 = vmatprep.subr.bf16.mxu0 0
  %312 = vmatpush1.bf16.msra.mxu0 0
  %313 = vmatprep.subr.bf16.mxu0 0
  %314 = vmatpush1.bf16.msra.mxu0 0
  %315 = vmatprep.subr.bf16.mxu0 0
  %316 = vmatpush1.bf16.msra.mxu0 0
  %317 = vmatprep.subr.bf16.mxu0 0
  %318 = vmatpush1.bf16.msra.mxu0 0
  %319 = vmatprep.subr.bf16.mxu0 0
  %320 = vmatpush1.bf16.msra.mxu0 %v304
  %321 = vmatprep.subr.bf16.mxu0 0
  %322 = vmatpush1.bf16.msra.mxu0 %v303
  %323 = vmatprep.subr.bf16.mxu0 0
  %324 = vmatpush2.bf16.msra.mxu0 0
  %325 = vmatprep.subr.bf16.mxu0 0
  %326 = vmatpush2.bf16.msra.mxu0 0
  %327 = vmatprep.subr.bf16.mxu0 0
  %328 = vmatpush2.bf16.msra.mxu0 0
  %329 = vmatprep.subr.bf16.mxu0 0
  %330 = vmatpush2.bf16.msra.mxu0 0
  %331 = vmatprep.subr.bf16.mxu0 0
  %332 = vmatpush2.bf16.msra.mxu0 0
  %333 = vmatprep.subr.bf16.mxu0 0
  %334 = vmatpush2.bf16.msra.mxu0 0
  %335 = vmatprep.subr.bf16.mxu0 0
  %336 = vmatpush2.bf16.msra.mxu0 0
  %337 = vmatprep.subr.bf16.mxu0 0
  %338 = vmatpush2.bf16.msra.mxu0 0
  %339 = vmatprep.mubr.bf16.mxu0 0
  %340 = vmatmul.mubr.bf16.gmra.mxu0 %v252
  %v341 = vpop.f32.mrf.mxu0
  %v342 = vadd.f32 0.0, %v341
  %v343 = vpop.f32.mrf.mxu0
  %v344 = vpop.f32.mrf.mxu0
  %v345 = vpop.f32.mrf.mxu0
  %346 = vdwg.mxu0
  %v347 = vadd.f32 %v227, %v342
  %v348 = vxor.u32 %v294, 2147483648
  %v349 = vmul.f32 %v348, 1.442695
  %v350 = vpow.pop %v349
  %v351 = vadd.f32 %v350, 1.0
  %v352 = vrcp.pop %v351
  %v353 = vmul.f32 1.0, %v352
  %v354 = vtanh.pop %v294
  %v355 = vmul.f32 %v353, 0.0
  %357 = vrot.lane.b32.xlu0 %v354, 64
  %v358 = vpop.permute.xlu0 %357
  %v360 = vmul.f32 %v353, %v358
  %362 = vrot.lane.b32.xlu0 %v360, 32
  %v363 = vpop.permute.xlu0 %362
  %v365 = vadd.f32 %v355, %v363
  %v366 = vtanh.pop %v365
  %368 = vrot.lane.b32.xlu0 %v366, 64
  %v369 = vpop.permute.xlu0 %368
  %v371 = vmul.f32 %v353, %v369
  %v372 = vxor.u32 %v347, 2147483648
  %v373 = vmul.f32 %v372, 1.442695
  %v374 = vpow.pop %v373
  %v375 = vadd.f32 %v374, 1.0
  %v376 = vrcp.pop %v375
  %v377 = vmul.f32 1.0, %v376
  %v378 = vtanh.pop %v347
  %v379 = vmul.f32 %v377, 0.0
  %381 = vrot.lane.b32.xlu0 %v378, 64
  %v382 = vpop.permute.xlu0 %381
  %v384 = vmul.f32 %v377, %v382
  %386 = vrot.lane.b32.xlu0 %v384, 32
  %v387 = vpop.permute.xlu0 %386
  %v389 = vadd.f32 %v379, %v387
  %v390 = vtanh.pop %v389
  %392 = vrot.lane.b32.xlu0 %v390, 64
  %v393 = vpop.permute.xlu0 %392
  %v395 = vmul.f32 %v377, %v393
  %v396 = vpack.c.bf16 %v371, %v371
  %v398 = vunpack.c.l.b16 %v396
  %v399 = vpack.c.b16 %v398, %v398
  %400 = vrot.lane.b32.xlu0 %v399, 32
  %v401 = vpop.permute.xlu0 %400
  %vm403 = vcmask 257024
  %404 = vst.msk [vmem:[%s7] sm:$0xf] %vm403, %v401
  %v405 = vpack.c.bf16 %v395, %v395
  %v407 = vunpack.c.l.b16 %v405
  %v408 = vpack.c.b16 %v407, %v407
  %409 = vrot.lane.b32.xlu0 %v408, 64
  %v410 = vpop.permute.xlu0 %409
  %s412 = scalar_lea.vmem %s7, 28
  %vm413 = vcmask 519424
  %414 = vst.msk [vmem:[%s412] sm:$0xf] %vm413, %v410
  %415 = vrot.lane.b32.xlu0 %v396, 32
  %v416 = vpop.permute.xlu0 %415
  %v418 = vsel %vm250, %v416, 0
  %420 = vmatprep.subr.bf16.mxu0 0
  %421 = vmatpush1.bf16.msra.mxu0 0
  %422 = vmatprep.subr.bf16.mxu0 0
  %423 = vmatpush1.bf16.msra.mxu0 0
  %424 = vmatprep.subr.bf16.mxu0 0
  %425 = vmatpush1.bf16.msra.mxu0 0
  %426 = vmatprep.subr.bf16.mxu0 0
  %427 = vmatpush1.bf16.msra.mxu0 0
  %428 = vmatprep.subr.bf16.mxu0 0
  %429 = vmatpush1.bf16.msra.mxu0 0
  %430 = vmatprep.subr.bf16.mxu0 0
  %431 = vmatpush1.bf16.msra.mxu0 0
  %432 = vmatprep.subr.bf16.mxu0 0
  %433 = vmatpush1.bf16.msra.mxu0 %v247
  %434 = vmatprep.subr.bf16.mxu0 0
  %435 = vmatpush1.bf16.msra.mxu0 %v246
  %436 = vmatprep.subr.bf16.mxu0 0
  %437 = vmatpush2.bf16.msra.mxu0 0
  %438 = vmatprep.subr.bf16.mxu0 0
  %439 = vmatpush2.bf16.msra.mxu0 0
  %440 = vmatprep.subr.bf16.mxu0 0
  %441 = vmatpush2.bf16.msra.mxu0 0
  %442 = vmatprep.subr.bf16.mxu0 0
  %443 = vmatpush2.bf16.msra.mxu0 0
  %444 = vmatprep.subr.bf16.mxu0 0
  %445 = vmatpush2.bf16.msra.mxu0 0
  %446 = vmatprep.subr.bf16.mxu0 0
  %447 = vmatpush2.bf16.msra.mxu0 0
  %448 = vmatprep.subr.bf16.mxu0 0
  %449 = vmatpush2.bf16.msra.mxu0 0
  %450 = vmatprep.subr.bf16.mxu0 0
  %451 = vmatpush2.bf16.msra.mxu0 0
  %452 = vmatprep.mubr.bf16.mxu0 0
  %453 = vmatmul.mubr.bf16.gmra.mxu0 %v418
  %v454 = vpop.f32.mrf.mxu0
  %v455 = vadd.f32 0.0, %v454
  %v456 = vpop.f32.mrf.mxu0
  %v457 = vpop.f32.mrf.mxu0
  %v458 = vpop.f32.mrf.mxu0
  %459 = vdwg.mxu0
  %v460 = vadd.f32 %v123, %v455
  %461 = vrot.lane.b32.xlu0 %v405, 32
  %v462 = vpop.permute.xlu0 %461
  %v464 = vsel %vm250, %v462, 0
  %466 = vmatprep.subr.bf16.mxu0 0
  %467 = vmatpush1.bf16.msra.mxu0 0
  %468 = vmatprep.subr.bf16.mxu0 0
  %469 = vmatpush1.bf16.msra.mxu0 0
  %470 = vmatprep.subr.bf16.mxu0 0
  %471 = vmatpush1.bf16.msra.mxu0 0
  %472 = vmatprep.subr.bf16.mxu0 0
  %473 = vmatpush1.bf16.msra.mxu0 0
  %474 = vmatprep.subr.bf16.mxu0 0
  %475 = vmatpush1.bf16.msra.mxu0 0
  %476 = vmatprep.subr.bf16.mxu0 0
  %477 = vmatpush1.bf16.msra.mxu0 0
  %478 = vmatprep.subr.bf16.mxu0 0
  %479 = vmatpush1.bf16.msra.mxu0 %v304
  %480 = vmatprep.subr.bf16.mxu0 0
  %481 = vmatpush1.bf16.msra.mxu0 %v303
  %482 = vmatprep.subr.bf16.mxu0 0
  %483 = vmatpush2.bf16.msra.mxu0 0
  %484 = vmatprep.subr.bf16.mxu0 0
  %485 = vmatpush2.bf16.msra.mxu0 0
  %486 = vmatprep.subr.bf16.mxu0 0
  %487 = vmatpush2.bf16.msra.mxu0 0
  %488 = vmatprep.subr.bf16.mxu0 0
  %489 = vmatpush2.bf16.msra.mxu0 0
  %490 = vmatprep.subr.bf16.mxu0 0
  %491 = vmatpush2.bf16.msra.mxu0 0
  %492 = vmatprep.subr.bf16.mxu0 0
  %493 = vmatpush2.bf16.msra.mxu0 0
  %494 = vmatprep.subr.bf16.mxu0 0
  %495 = vmatpush2.bf16.msra.mxu0 0
  %496 = vmatprep.subr.bf16.mxu0 0
  %497 = vmatpush2.bf16.msra.mxu0 0
  %498 = vmatprep.mubr.bf16.mxu0 0
  %499 = vmatmul.mubr.bf16.gmra.mxu0 %v464
  %v500 = vpop.f32.mrf.mxu0
  %v501 = vadd.f32 0.0, %v500
  %v502 = vpop.f32.mrf.mxu0
  %v503 = vpop.f32.mrf.mxu0
  %v504 = vpop.f32.mrf.mxu0
  %505 = vdwg.mxu0
  %v506 = vadd.f32 %v224, %v501
  %v507 = vxor.u32 %v460, 2147483648
  %v508 = vmul.f32 %v507, 1.442695
  %v509 = vpow.pop %v508
  %v510 = vadd.f32 %v509, 1.0
  %v511 = vrcp.pop %v510
  %v512 = vmul.f32 1.0, %v511
  %v513 = vtanh.pop %v460
  %v514 = vmul.f32 %v512, %v365
  %516 = vrot.lane.b32.xlu0 %v513, 64
  %v517 = vpop.permute.xlu0 %516
  %v519 = vmul.f32 %v512, %v517
  %521 = vrot.lane.b32.xlu0 %v519, 32
  %v522 = vpop.permute.xlu0 %521
  %v524 = vadd.f32 %v514, %v522
  %v525 = vtanh.pop %v524
  %527 = vrot.lane.b32.xlu0 %v525, 64
  %v528 = vpop.permute.xlu0 %527
  %v530 = vmul.f32 %v512, %v528
  %v531 = vxor.u32 %v506, 2147483648
  %v532 = vmul.f32 %v531, 1.442695
  %v533 = vpow.pop %v532
  %v534 = vadd.f32 %v533, 1.0
  %v535 = vrcp.pop %v534
  %v536 = vmul.f32 1.0, %v535
  %v537 = vtanh.pop %v506
  %v538 = vmul.f32 %v536, %v389
  %540 = vrot.lane.b32.xlu0 %v537, 64
  %v541 = vpop.permute.xlu0 %540
  %v543 = vmul.f32 %v536, %v541
  %545 = vrot.lane.b32.xlu0 %v543, 32
  %v546 = vpop.permute.xlu0 %545
  %v548 = vadd.f32 %v538, %v546
  %v549 = vtanh.pop %v548
  %551 = vrot.lane.b32.xlu0 %v549, 64
  %v552 = vpop.permute.xlu0 %551
  %v554 = vmul.f32 %v536, %v552
  %v555 = vpack.c.bf16 %v530, %v530
  %v557 = vunpack.c.l.b16 %v555
  %v558 = vpack.c.b16 %v557, %v557
  %559 = vrot.lane.b32.xlu0 %v558, 32
  %v560 = vpop.permute.xlu0 %559
  %s562 = scalar_lea.vmem %s7, 4
  %563 = vst.msk [vmem:[%s562] sm:$0xf] %vm403, %v560
  %v564 = vpack.c.bf16 %v554, %v554
  %v566 = vunpack.c.l.b16 %v564
  %v567 = vpack.c.b16 %v566, %v566
  %568 = vrot.lane.b32.xlu0 %v567, 64
  %v569 = vpop.permute.xlu0 %568
  %s571 = scalar_lea.vmem %s7, 24
  %572 = vst.msk [vmem:[%s571] sm:$0xf] %vm413, %v569
  %573 = vrot.lane.b32.xlu0 %v555, 32
  %v574 = vpop.permute.xlu0 %573
  %v576 = vsel %vm250, %v574, 0
  %578 = vmatprep.subr.bf16.mxu0 0
  %579 = vmatpush1.bf16.msra.mxu0 0
  %580 = vmatprep.subr.bf16.mxu0 0
  %581 = vmatpush1.bf16.msra.mxu0 0
  %582 = vmatprep.subr.bf16.mxu0 0
  %583 = vmatpush1.bf16.msra.mxu0 0
  %584 = vmatprep.subr.bf16.mxu0 0
  %585 = vmatpush1.bf16.msra.mxu0 0
  %586 = vmatprep.subr.bf16.mxu0 0
  %587 = vmatpush1.bf16.msra.mxu0 0
  %588 = vmatprep.subr.bf16.mxu0 0
  %589 = vmatpush1.bf16.msra.mxu0 0
  %590 = vmatprep.subr.bf16.mxu0 0
  %591 = vmatpush1.bf16.msra.mxu0 %v247
  %592 = vmatprep.subr.bf16.mxu0 0
  %593 = vmatpush1.bf16.msra.mxu0 %v246
  %594 = vmatprep.subr.bf16.mxu0 0
  %595 = vmatpush2.bf16.msra.mxu0 0
  %596 = vmatprep.subr.bf16.mxu0 0
  %597 = vmatpush2.bf16.msra.mxu0 0
  %598 = vmatprep.subr.bf16.mxu0 0
  %599 = vmatpush2.bf16.msra.mxu0 0
  %600 = vmatprep.subr.bf16.mxu0 0
  %601 = vmatpush2.bf16.msra.mxu0 0
  %602 = vmatprep.subr.bf16.mxu0 0
  %603 = vmatpush2.bf16.msra.mxu0 0
  %604 = vmatprep.subr.bf16.mxu0 0
  %605 = vmatpush2.bf16.msra.mxu0 0
  %606 = vmatprep.subr.bf16.mxu0 0
  %607 = vmatpush2.bf16.msra.mxu0 0
  %608 = vmatprep.subr.bf16.mxu0 0
  %609 = vmatpush2.bf16.msra.mxu0 0
  %610 = vmatprep.mubr.bf16.mxu0 0
  %611 = vmatmul.mubr.bf16.gmra.mxu0 %v576
  %v612 = vpop.f32.mrf.mxu0
  %v613 = vadd.f32 0.0, %v612
  %v614 = vpop.f32.mrf.mxu0
  %v615 = vpop.f32.mrf.mxu0
  %v616 = vpop.f32.mrf.mxu0
  %617 = vdwg.mxu0
  %v618 = vadd.f32 %v128, %v613
  %619 = vrot.lane.b32.xlu0 %v564, 32
  %v620 = vpop.permute.xlu0 %619
  %v622 = vsel %vm250, %v620, 0
  %624 = vmatprep.subr.bf16.mxu0 0
  %625 = vmatpush1.bf16.msra.mxu0 0
  %626 = vmatprep.subr.bf16.mxu0 0
  %627 = vmatpush1.bf16.msra.mxu0 0
  %628 = vmatprep.subr.bf16.mxu0 0
  %629 = vmatpush1.bf16.msra.mxu0 0
  %630 = vmatprep.subr.bf16.mxu0 0
  %631 = vmatpush1.bf16.msra.mxu0 0
  %632 = vmatprep.subr.bf16.mxu0 0
  %633 = vmatpush1.bf16.msra.mxu0 0
  %634 = vmatprep.subr.bf16.mxu0 0
  %635 = vmatpush1.bf16.msra.mxu0 0
  %636 = vmatprep.subr.bf16.mxu0 0
  %637 = vmatpush1.bf16.msra.mxu0 %v304
  %638 = vmatprep.subr.bf16.mxu0 0
  %639 = vmatpush1.bf16.msra.mxu0 %v303
  %640 = vmatprep.subr.bf16.mxu0 0
  %641 = vmatpush2.bf16.msra.mxu0 0
  %642 = vmatprep.subr.bf16.mxu0 0
  %643 = vmatpush2.bf16.msra.mxu0 0
  %644 = vmatprep.subr.bf16.mxu0 0
  %645 = vmatpush2.bf16.msra.mxu0 0
  %646 = vmatprep.subr.bf16.mxu0 0
  %647 = vmatpush2.bf16.msra.mxu0 0
  %648 = vmatprep.subr.bf16.mxu0 0
  %649 = vmatpush2.bf16.msra.mxu0 0
  %650 = vmatprep.subr.bf16.mxu0 0
  %651 = vmatpush2.bf16.msra.mxu0 0
  %652 = vmatprep.subr.bf16.mxu0 0
  %653 = vmatpush2.bf16.msra.mxu0 0
  %654 = vmatprep.subr.bf16.mxu0 0
  %655 = vmatpush2.bf16.msra.mxu0 0
  %656 = vmatprep.mubr.bf16.mxu0 0
  %657 = vmatmul.mubr.bf16.gmra.mxu0 %v622
  %v658 = vpop.f32.mrf.mxu0
  %v659 = vadd.f32 0.0, %v658
  %v660 = vpop.f32.mrf.mxu0
  %v661 = vpop.f32.mrf.mxu0
  %v662 = vpop.f32.mrf.mxu0
  %663 = vdwg.mxu0
  %v664 = vadd.f32 %v219, %v659
  %v665 = vxor.u32 %v618, 2147483648
  %v666 = vmul.f32 %v665, 1.442695
  %v667 = vpow.pop %v666
  %v668 = vadd.f32 %v667, 1.0
  %v669 = vrcp.pop %v668
  %v670 = vmul.f32 1.0, %v669
  %v671 = vtanh.pop %v618
  %v672 = vmul.f32 %v670, %v524
  %674 = vrot.lane.b32.xlu0 %v671, 64
  %v675 = vpop.permute.xlu0 %674
  %v677 = vmul.f32 %v670, %v675
  %679 = vrot.lane.b32.xlu0 %v677, 32
  %v680 = vpop.permute.xlu0 %679
  %v682 = vadd.f32 %v672, %v680
  %v683 = vtanh.pop %v682
  %685 = vrot.lane.b32.xlu0 %v683, 64
  %v686 = vpop.permute.xlu0 %685
  %v688 = vmul.f32 %v670, %v686
  %v689 = vxor.u32 %v664, 2147483648
  %v690 = vmul.f32 %v689, 1.442695
  %v691 = vpow.pop %v690
  %v692 = vadd.f32 %v691, 1.0
  %v693 = vrcp.pop %v692
  %v694 = vmul.f32 1.0, %v693
  %v695 = vtanh.pop %v664
  %v696 = vmul.f32 %v694, %v548
  %698 = vrot.lane.b32.xlu0 %v695, 64
  %v699 = vpop.permute.xlu0 %698
  %v701 = vmul.f32 %v694, %v699
  %703 = vrot.lane.b32.xlu0 %v701, 32
  %v704 = vpop.permute.xlu0 %703
  %v706 = vadd.f32 %v696, %v704
  %v707 = vtanh.pop %v706
  %709 = vrot.lane.b32.xlu0 %v707, 64
  %v710 = vpop.permute.xlu0 %709
  %v712 = vmul.f32 %v694, %v710
  %v713 = vpack.c.bf16 %v688, %v688
  %v715 = vunpack.c.l.b16 %v713
  %v716 = vpack.c.b16 %v715, %v715
  %717 = vrot.lane.b32.xlu0 %v716, 32
  %v718 = vpop.permute.xlu0 %717
  %s720 = scalar_lea.vmem %s7, 8
  %721 = vst.msk [vmem:[%s720] sm:$0xf] %vm403, %v718
  %v722 = vpack.c.bf16 %v712, %v712
  %v724 = vunpack.c.l.b16 %v722
  %v725 = vpack.c.b16 %v724, %v724
  %726 = vrot.lane.b32.xlu0 %v725, 64
  %v727 = vpop.permute.xlu0 %726
  %s729 = scalar_lea.vmem %s7, 20
  %730 = vst.msk [vmem:[%s729] sm:$0xf] %vm413, %v727
  %731 = vrot.lane.b32.xlu0 %v713, 32
  %v732 = vpop.permute.xlu0 %731
  %v734 = vsel %vm250, %v732, 0
  %736 = vmatprep.subr.bf16.mxu0 0
  %737 = vmatpush1.bf16.msra.mxu0 0
  %738 = vmatprep.subr.bf16.mxu0 0
  %739 = vmatpush1.bf16.msra.mxu0 0
  %740 = vmatprep.subr.bf16.mxu0 0
  %741 = vmatpush1.bf16.msra.mxu0 0
  %742 = vmatprep.subr.bf16.mxu0 0
  %743 = vmatpush1.bf16.msra.mxu0 0
  %744 = vmatprep.subr.bf16.mxu0 0
  %745 = vmatpush1.bf16.msra.mxu0 0
  %746 = vmatprep.subr.bf16.mxu0 0
  %747 = vmatpush1.bf16.msra.mxu0 0
  %748 = vmatprep.subr.bf16.mxu0 0
  %749 = vmatpush1.bf16.msra.mxu0 %v247
  %750 = vmatprep.subr.bf16.mxu0 0
  %751 = vmatpush1.bf16.msra.mxu0 %v246
  %752 = vmatprep.subr.bf16.mxu0 0
  %753 = vmatpush2.bf16.msra.mxu0 0
  %754 = vmatprep.subr.bf16.mxu0 0
  %755 = vmatpush2.bf16.msra.mxu0 0
  %756 = vmatprep.subr.bf16.mxu0 0
  %757 = vmatpush2.bf16.msra.mxu0 0
  %758 = vmatprep.subr.bf16.mxu0 0
  %759 = vmatpush2.bf16.msra.mxu0 0
  %760 = vmatprep.subr.bf16.mxu0 0
  %761 = vmatpush2.bf16.msra.mxu0 0
  %762 = vmatprep.subr.bf16.mxu0 0
  %763 = vmatpush2.bf16.msra.mxu0 0
  %764 = vmatprep.subr.bf16.mxu0 0
  %765 = vmatpush2.bf16.msra.mxu0 0
  %766 = vmatprep.subr.bf16.mxu0 0
  %767 = vmatpush2.bf16.msra.mxu0 0
  %768 = vmatprep.mubr.bf16.mxu0 0
  %769 = vmatmul.mubr.bf16.gmra.mxu0 %v734
  %v770 = vpop.f32.mrf.mxu0
  %v771 = vadd.f32 0.0, %v770
  %v772 = vpop.f32.mrf.mxu0
  %v773 = vpop.f32.mrf.mxu0
  %v774 = vpop.f32.mrf.mxu0
  %775 = vdwg.mxu0
  %v776 = vadd.f32 %v131, %v771
  %777 = vrot.lane.b32.xlu0 %v722, 32
  %v778 = vpop.permute.xlu0 %777
  %v780 = vsel %vm250, %v778, 0
  %782 = vmatprep.subr.bf16.mxu0 0
  %783 = vmatpush1.bf16.msra.mxu0 0
  %784 = vmatprep.subr.bf16.mxu0 0
  %785 = vmatpush1.bf16.msra.mxu0 0
  %786 = vmatprep.subr.bf16.mxu0 0
  %787 = vmatpush1.bf16.msra.mxu0 0
  %788 = vmatprep.subr.bf16.mxu0 0
  %789 = vmatpush1.bf16.msra.mxu0 0
  %790 = vmatprep.subr.bf16.mxu0 0
  %791 = vmatpush1.bf16.msra.mxu0 0
  %792 = vmatprep.subr.bf16.mxu0 0
  %793 = vmatpush1.bf16.msra.mxu0 0
  %794 = vmatprep.subr.bf16.mxu0 0
  %795 = vmatpush1.bf16.msra.mxu0 %v304
  %796 = vmatprep.subr.bf16.mxu0 0
  %797 = vmatpush1.bf16.msra.mxu0 %v303
  %798 = vmatprep.subr.bf16.mxu0 0
  %799 = vmatpush2.bf16.msra.mxu0 0
  %800 = vmatprep.subr.bf16.mxu0 0
  %801 = vmatpush2.bf16.msra.mxu0 0
  %802 = vmatprep.subr.bf16.mxu0 0
  %803 = vmatpush2.bf16.msra.mxu0 0
  %804 = vmatprep.subr.bf16.mxu0 0
  %805 = vmatpush2.bf16.msra.mxu0 0
  %806 = vmatprep.subr.bf16.mxu0 0
  %807 = vmatpush2.bf16.msra.mxu0 0
  %808 = vmatprep.subr.bf16.mxu0 0
  %809 = vmatpush2.bf16.msra.mxu0 0
  %810 = vmatprep.subr.bf16.mxu0 0
  %811 = vmatpush2.bf16.msra.mxu0 0
  %812 = vmatprep.subr.bf16.mxu0 0
  %813 = vmatpush2.bf16.msra.mxu0 0
  %814 = vmatprep.mubr.bf16.mxu0 0
  %815 = vmatmul.mubr.bf16.gmra.mxu0 %v780
  %v816 = vpop.f32.mrf.mxu0
  %v817 = vadd.f32 0.0, %v816
  %v818 = vpop.f32.mrf.mxu0
  %v819 = vpop.f32.mrf.mxu0
  %v820 = vpop.f32.mrf.mxu0
  %821 = vdwg.mxu0
  %v822 = vadd.f32 %v216, %v817
  %v823 = vxor.u32 %v776, 2147483648
  %v824 = vmul.f32 %v823, 1.442695
  %v825 = vpow.pop %v824
  %v826 = vadd.f32 %v825, 1.0
  %v827 = vrcp.pop %v826
  %v828 = vmul.f32 1.0, %v827
  %v829 = vtanh.pop %v776
  %v830 = vmul.f32 %v828, %v682
  %832 = vrot.lane.b32.xlu0 %v829, 64
  %v833 = vpop.permute.xlu0 %832
  %v835 = vmul.f32 %v828, %v833
  %837 = vrot.lane.b32.xlu0 %v835, 32
  %v838 = vpop.permute.xlu0 %837
  %v840 = vadd.f32 %v830, %v838
  %v841 = vtanh.pop %v840
  %843 = vrot.lane.b32.xlu0 %v841, 64
  %v844 = vpop.permute.xlu0 %843
  %v846 = vmul.f32 %v828, %v844
  %v847 = vxor.u32 %v822, 2147483648
  %v848 = vmul.f32 %v847, 1.442695
  %v849 = vpow.pop %v848
  %v850 = vadd.f32 %v849, 1.0
  %v851 = vrcp.pop %v850
  %v852 = vmul.f32 1.0, %v851
  %v853 = vtanh.pop %v822
  %v854 = vmul.f32 %v852, %v706
  %856 = vrot.lane.b32.xlu0 %v853, 64
  %v857 = vpop.permute.xlu0 %856
  %v859 = vmul.f32 %v852, %v857
  %861 = vrot.lane.b32.xlu0 %v859, 32
  %v862 = vpop.permute.xlu0 %861
  %v864 = vadd.f32 %v854, %v862
  %v865 = vtanh.pop %v864
  %867 = vrot.lane.b32.xlu0 %v865, 64
  %v868 = vpop.permute.xlu0 %867
  %v870 = vmul.f32 %v852, %v868
  %v871 = vpack.c.bf16 %v846, %v846
  %v873 = vunpack.c.l.b16 %v871
  %v874 = vpack.c.b16 %v873, %v873
  %875 = vrot.lane.b32.xlu0 %v874, 32
  %v876 = vpop.permute.xlu0 %875
  %s878 = scalar_lea.vmem %s7, 12
  %879 = vst.msk [vmem:[%s878] sm:$0xf] %vm403, %v876
  %v880 = vpack.c.bf16 %v870, %v870
  %v882 = vunpack.c.l.b16 %v880
  %v883 = vpack.c.b16 %v882, %v882
  %884 = vrot.lane.b32.xlu0 %v883, 64
  %v885 = vpop.permute.xlu0 %884
  %s887 = scalar_lea.vmem %s7, 16
  %888 = vst.msk [vmem:[%s887] sm:$0xf] %vm413, %v885
  %889 = vrot.lane.b32.xlu0 %v871, 32
  %v890 = vpop.permute.xlu0 %889
  %v892 = vsel %vm250, %v890, 0
  %894 = vmatprep.subr.bf16.mxu0 0
  %895 = vmatpush1.bf16.msra.mxu0 0
  %896 = vmatprep.subr.bf16.mxu0 0
  %897 = vmatpush1.bf16.msra.mxu0 0
  %898 = vmatprep.subr.bf16.mxu0 0
  %899 = vmatpush1.bf16.msra.mxu0 0
  %900 = vmatprep.subr.bf16.mxu0 0
  %901 = vmatpush1.bf16.msra.mxu0 0
  %902 = vmatprep.subr.bf16.mxu0 0
  %903 = vmatpush1.bf16.msra.mxu0 0
  %904 = vmatprep.subr.bf16.mxu0 0
  %905 = vmatpush1.bf16.msra.mxu0 0
  %906 = vmatprep.subr.bf16.mxu0 0
  %907 = vmatpush1.bf16.msra.mxu0 %v247
  %908 = vmatprep.subr.bf16.mxu0 0
  %909 = vmatpush1.bf16.msra.mxu0 %v246
  %910 = vmatprep.subr.bf16.mxu0 0
  %911 = vmatpush2.bf16.msra.mxu0 0
  %912 = vmatprep.subr.bf16.mxu0 0
  %913 = vmatpush2.bf16.msra.mxu0 0
  %914 = vmatprep.subr.bf16.mxu0 0
  %915 = vmatpush2.bf16.msra.mxu0 0
  %916 = vmatprep.subr.bf16.mxu0 0
  %917 = vmatpush2.bf16.msra.mxu0 0
  %918 = vmatprep.subr.bf16.mxu0 0
  %919 = vmatpush2.bf16.msra.mxu0 0
  %920 = vmatprep.subr.bf16.mxu0 0
  %921 = vmatpush2.bf16.msra.mxu0 0
  %922 = vmatprep.subr.bf16.mxu0 0
  %923 = vmatpush2.bf16.msra.mxu0 0
  %924 = vmatprep.subr.bf16.mxu0 0
  %925 = vmatpush2.bf16.msra.mxu0 0
  %926 = vmatprep.mubr.bf16.mxu0 0
  %927 = vmatmul.mubr.bf16.gmra.mxu0 %v892
  %v928 = vpop.f32.mrf.mxu0
  %v929 = vadd.f32 0.0, %v928
  %v930 = vpop.f32.mrf.mxu0
  %v931 = vpop.f32.mrf.mxu0
  %v932 = vpop.f32.mrf.mxu0
  %933 = vdwg.mxu0
  %v934 = vadd.f32 %v136, %v929
  %935 = vrot.lane.b32.xlu0 %v880, 32
  %v936 = vpop.permute.xlu0 %935
  %v938 = vsel %vm250, %v936, 0
  %940 = vmatprep.subr.bf16.mxu0 0
  %941 = vmatpush1.bf16.msra.mxu0 0
  %942 = vmatprep.subr.bf16.mxu0 0
  %943 = vmatpush1.bf16.msra.mxu0 0
  %944 = vmatprep.subr.bf16.mxu0 0
  %945 = vmatpush1.bf16.msra.mxu0 0
  %946 = vmatprep.subr.bf16.mxu0 0
  %947 = vmatpush1.bf16.msra.mxu0 0
  %948 = vmatprep.subr.bf16.mxu0 0
  %949 = vmatpush1.bf16.msra.mxu0 0
  %950 = vmatprep.subr.bf16.mxu0 0
  %951 = vmatpush1.bf16.msra.mxu0 0
  %952 = vmatprep.subr.bf16.mxu0 0
  %953 = vmatpush1.bf16.msra.mxu0 %v304
  %954 = vmatprep.subr.bf16.mxu0 0
  %955 = vmatpush1.bf16.msra.mxu0 %v303
  %956 = vmatprep.subr.bf16.mxu0 0
  %957 = vmatpush2.bf16.msra.mxu0 0
  %958 = vmatprep.subr.bf16.mxu0 0
  %959 = vmatpush2.bf16.msra.mxu0 0
  %960 = vmatprep.subr.bf16.mxu0 0
  %961 = vmatpush2.bf16.msra.mxu0 0
  %962 = vmatprep.subr.bf16.mxu0 0
  %963 = vmatpush2.bf16.msra.mxu0 0
  %964 = vmatprep.subr.bf16.mxu0 0
  %965 = vmatpush2.bf16.msra.mxu0 0
  %966 = vmatprep.subr.bf16.mxu0 0
  %967 = vmatpush2.bf16.msra.mxu0 0
  %968 = vmatprep.subr.bf16.mxu0 0
  %969 = vmatpush2.bf16.msra.mxu0 0
  %970 = vmatprep.subr.bf16.mxu0 0
  %971 = vmatpush2.bf16.msra.mxu0 0
  %972 = vmatprep.mubr.bf16.mxu0 0
  %973 = vmatmul.mubr.bf16.gmra.mxu0 %v938
  %v974 = vpop.f32.mrf.mxu0
  %v975 = vadd.f32 0.0, %v974
  %v976 = vpop.f32.mrf.mxu0
  %v977 = vpop.f32.mrf.mxu0
  %v978 = vpop.f32.mrf.mxu0
  %979 = vdwg.mxu0
  %v980 = vadd.f32 %v211, %v975
  %v981 = vxor.u32 %v934, 2147483648
  %v982 = vmul.f32 %v981, 1.442695
  %v983 = vpow.pop %v982
  %v984 = vadd.f32 %v983, 1.0
  %v985 = vrcp.pop %v984
  %v986 = vmul.f32 1.0, %v985
  %v987 = vtanh.pop %v934
  %v988 = vmul.f32 %v986, %v840
  %990 = vrot.lane.b32.xlu0 %v987, 64
  %v991 = vpop.permute.xlu0 %990
  %v993 = vmul.f32 %v986, %v991
  %995 = vrot.lane.b32.xlu0 %v993, 32
  %v996 = vpop.permute.xlu0 %995
  %v998 = vadd.f32 %v988, %v996
  %v999 = vtanh.pop %v998
  %1001 = vrot.lane.b32.xlu0 %v999, 64
  %v1002 = vpop.permute.xlu0 %1001
  %v1004 = vmul.f32 %v986, %v1002
  %v1005 = vxor.u32 %v980, 2147483648
  %v1006 = vmul.f32 %v1005, 1.442695
  %v1007 = vpow.pop %v1006
  %v1008 = vadd.f32 %v1007, 1.0
  %v1009 = vrcp.pop %v1008
  %v1010 = vmul.f32 1.0, %v1009
  %v1011 = vtanh.pop %v980
  %v1012 = vmul.f32 %v1010, %v864
  %1014 = vrot.lane.b32.xlu0 %v1011, 64
  %v1015 = vpop.permute.xlu0 %1014
  %v1017 = vmul.f32 %v1010, %v1015
  %1019 = vrot.lane.b32.xlu0 %v1017, 32
  %v1020 = vpop.permute.xlu0 %1019
  %v1022 = vadd.f32 %v1012, %v1020
  %v1023 = vtanh.pop %v1022
  %1025 = vrot.lane.b32.xlu0 %v1023, 64
  %v1026 = vpop.permute.xlu0 %1025
  %v1028 = vmul.f32 %v1010, %v1026
  %v1029 = vpack.c.bf16 %v1004, %v1004
  %v1031 = vunpack.c.l.b16 %v1029
  %v1032 = vpack.c.b16 %v1031, %v1031
  %1033 = vrot.lane.b32.xlu0 %v1032, 32
  %v1034 = vpop.permute.xlu0 %1033
  %1036 = vst.msk [vmem:[%s887] sm:$0xf] %vm403, %v1034
  %v1037 = vpack.c.bf16 %v1028, %v1028
  %v1039 = vunpack.c.l.b16 %v1037
  %v1040 = vpack.c.b16 %v1039, %v1039
  %1041 = vrot.lane.b32.xlu0 %v1040, 64
  %v1042 = vpop.permute.xlu0 %1041
  %1044 = vst.msk [vmem:[%s878] sm:$0xf] %vm413, %v1042
  %1045 = vrot.lane.b32.xlu0 %v1029, 32
  %v1046 = vpop.permute.xlu0 %1045
  %v1048 = vsel %vm250, %v1046, 0
  %1050 = vmatprep.subr.bf16.mxu0 0
  %1051 = vmatpush1.bf16.msra.mxu0 0
  %1052 = vmatprep.subr.bf16.mxu0 0
  %1053 = vmatpush1.bf16.msra.mxu0 0
  %1054 = vmatprep.subr.bf16.mxu0 0
  %1055 = vmatpush1.bf16.msra.mxu0 0
  %1056 = vmatprep.subr.bf16.mxu0 0
  %1057 = vmatpush1.bf16.msra.mxu0 0
  %1058 = vmatprep.subr.bf16.mxu0 0
  %1059 = vmatpush1.bf16.msra.mxu0 0
  %1060 = vmatprep.subr.bf16.mxu0 0
  %1061 = vmatpush1.bf16.msra.mxu0 0
  %1062 = vmatprep.subr.bf16.mxu0 0
  %1063 = vmatpush1.bf16.msra.mxu0 %v247
  %1064 = vmatprep.subr.bf16.mxu0 0
  %1065 = vmatpush1.bf16.msra.mxu0 %v246
  %1066 = vmatprep.subr.bf16.mxu0 0
  %1067 = vmatpush2.bf16.msra.mxu0 0
  %1068 = vmatprep.subr.bf16.mxu0 0
  %1069 = vmatpush2.bf16.msra.mxu0 0
  %1070 = vmatprep.subr.bf16.mxu0 0
  %1071 = vmatpush2.bf16.msra.mxu0 0
  %1072 = vmatprep.subr.bf16.mxu0 0
  %1073 = vmatpush2.bf16.msra.mxu0 0
  %1074 = vmatprep.subr.bf16.mxu0 0
  %1075 = vmatpush2.bf16.msra.mxu0 0
  %1076 = vmatprep.subr.bf16.mxu0 0
  %1077 = vmatpush2.bf16.msra.mxu0 0
  %1078 = vmatprep.subr.bf16.mxu0 0
  %1079 = vmatpush2.bf16.msra.mxu0 0
  %1080 = vmatprep.subr.bf16.mxu0 0
  %1081 = vmatpush2.bf16.msra.mxu0 0
  %1082 = vmatprep.mubr.bf16.mxu0 0
  %1083 = vmatmul.mubr.bf16.gmra.mxu0 %v1048
  %v1084 = vpop.f32.mrf.mxu0
  %v1085 = vadd.f32 0.0, %v1084
  %v1086 = vpop.f32.mrf.mxu0
  %v1087 = vpop.f32.mrf.mxu0
  %v1088 = vpop.f32.mrf.mxu0
  %1089 = vdwg.mxu0
  %v1090 = vadd.f32 %v139, %v1085
  %1091 = vrot.lane.b32.xlu0 %v1037, 32
  %v1092 = vpop.permute.xlu0 %1091
  %v1094 = vsel %vm250, %v1092, 0
  %1096 = vmatprep.subr.bf16.mxu0 0
  %1097 = vmatpush1.bf16.msra.mxu0 0
  %1098 = vmatprep.subr.bf16.mxu0 0
  %1099 = vmatpush1.bf16.msra.mxu0 0
  %1100 = vmatprep.subr.bf16.mxu0 0
  %1101 = vmatpush1.bf16.msra.mxu0 0
  %1102 = vmatprep.subr.bf16.mxu0 0
  %1103 = vmatpush1.bf16.msra.mxu0 0
  %1104 = vmatprep.subr.bf16.mxu0 0
  %1105 = vmatpush1.bf16.msra.mxu0 0
  %1106 = vmatprep.subr.bf16.mxu0 0
  %1107 = vmatpush1.bf16.msra.mxu0 0
  %1108 = vmatprep.subr.bf16.mxu0 0
  %1109 = vmatpush1.bf16.msra.mxu0 %v304
  %1110 = vmatprep.subr.bf16.mxu0 0
  %1111 = vmatpush1.bf16.msra.mxu0 %v303
  %1112 = vmatprep.subr.bf16.mxu0 0
  %1113 = vmatpush2.bf16.msra.mxu0 0
  %1114 = vmatprep.subr.bf16.mxu0 0
  %1115 = vmatpush2.bf16.msra.mxu0 0
  %1116 = vmatprep.subr.bf16.mxu0 0
  %1117 = vmatpush2.bf16.msra.mxu0 0
  %1118 = vmatprep.subr.bf16.mxu0 0
  %1119 = vmatpush2.bf16.msra.mxu0 0
  %1120 = vmatprep.subr.bf16.mxu0 0
  %1121 = vmatpush2.bf16.msra.mxu0 0
  %1122 = vmatprep.subr.bf16.mxu0 0
  %1123 = vmatpush2.bf16.msra.mxu0 0
  %1124 = vmatprep.subr.bf16.mxu0 0
  %1125 = vmatpush2.bf16.msra.mxu0 0
  %1126 = vmatprep.subr.bf16.mxu0 0
  %1127 = vmatpush2.bf16.msra.mxu0 0
  %1128 = vmatprep.mubr.bf16.mxu0 0
  %1129 = vmatmul.mubr.bf16.gmra.mxu0 %v1094
  %v1130 = vpop.f32.mrf.mxu0
  %v1131 = vadd.f32 0.0, %v1130
  %v1132 = vpop.f32.mrf.mxu0
  %v1133 = vpop.f32.mrf.mxu0
  %v1134 = vpop.f32.mrf.mxu0
  %1135 = vdwg.mxu0
  %v1136 = vadd.f32 %v208, %v1131
  %v1137 = vxor.u32 %v1090, 2147483648
  %v1138 = vmul.f32 %v1137, 1.442695
  %v1139 = vpow.pop %v1138
  %v1140 = vadd.f32 %v1139, 1.0
  %v1141 = vrcp.pop %v1140
  %v1142 = vmul.f32 1.0, %v1141
  %v1143 = vtanh.pop %v1090
  %v1144 = vmul.f32 %v1142, %v998
  %1146 = vrot.lane.b32.xlu0 %v1143, 64
  %v1147 = vpop.permute.xlu0 %1146
  %v1149 = vmul.f32 %v1142, %v1147
  %1151 = vrot.lane.b32.xlu0 %v1149, 32
  %v1152 = vpop.permute.xlu0 %1151
  %v1154 = vadd.f32 %v1144, %v1152
  %v1155 = vtanh.pop %v1154
  %1157 = vrot.lane.b32.xlu0 %v1155, 64
  %v1158 = vpop.permute.xlu0 %1157
  %v1160 = vmul.f32 %v1142, %v1158
  %v1161 = vxor.u32 %v1136, 2147483648
  %v1162 = vmul.f32 %v1161, 1.442695
  %v1163 = vpow.pop %v1162
  %v1164 = vadd.f32 %v1163, 1.0
  %v1165 = vrcp.pop %v1164
  %v1166 = vmul.f32 1.0, %v1165
  %v1167 = vtanh.pop %v1136
  %v1168 = vmul.f32 %v1166, %v1022
  %1170 = vrot.lane.b32.xlu0 %v1167, 64
  %v1171 = vpop.permute.xlu0 %1170
  %v1173 = vmul.f32 %v1166, %v1171
  %1175 = vrot.lane.b32.xlu0 %v1173, 32
  %v1176 = vpop.permute.xlu0 %1175
  %v1178 = vadd.f32 %v1168, %v1176
  %v1179 = vtanh.pop %v1178
  %1181 = vrot.lane.b32.xlu0 %v1179, 64
  %v1182 = vpop.permute.xlu0 %1181
  %v1184 = vmul.f32 %v1166, %v1182
  %v1185 = vpack.c.bf16 %v1160, %v1160
  %v1187 = vunpack.c.l.b16 %v1185
  %v1188 = vpack.c.b16 %v1187, %v1187
  %1189 = vrot.lane.b32.xlu0 %v1188, 32
  %v1190 = vpop.permute.xlu0 %1189
  %1192 = vst.msk [vmem:[%s729] sm:$0xf] %vm403, %v1190
  %v1193 = vpack.c.bf16 %v1184, %v1184
  %v1195 = vunpack.c.l.b16 %v1193
  %v1196 = vpack.c.b16 %v1195, %v1195
  %1197 = vrot.lane.b32.xlu0 %v1196, 64
  %v1198 = vpop.permute.xlu0 %1197
  %1200 = vst.msk [vmem:[%s720] sm:$0xf] %vm413, %v1198
  %1201 = vrot.lane.b32.xlu0 %v1185, 32
  %v1202 = vpop.permute.xlu0 %1201
  %v1204 = vsel %vm250, %v1202, 0
  %1206 = vmatprep.subr.bf16.mxu0 0
  %1207 = vmatpush1.bf16.msra.mxu0 0
  %1208 = vmatprep.subr.bf16.mxu0 0
  %1209 = vmatpush1.bf16.msra.mxu0 0
  %1210 = vmatprep.subr.bf16.mxu0 0
  %1211 = vmatpush1.bf16.msra.mxu0 0
  %1212 = vmatprep.subr.bf16.mxu0 0
  %1213 = vmatpush1.bf16.msra.mxu0 0
  %1214 = vmatprep.subr.bf16.mxu0 0
  %1215 = vmatpush1.bf16.msra.mxu0 0
  %1216 = vmatprep.subr.bf16.mxu0 0
  %1217 = vmatpush1.bf16.msra.mxu0 0
  %1218 = vmatprep.subr.bf16.mxu0 0
  %1219 = vmatpush1.bf16.msra.mxu0 %v247
  %1220 = vmatprep.subr.bf16.mxu0 0
  %1221 = vmatpush1.bf16.msra.mxu0 %v246
  %1222 = vmatprep.subr.bf16.mxu0 0
  %1223 = vmatpush2.bf16.msra.mxu0 0
  %1224 = vmatprep.subr.bf16.mxu0 0
  %1225 = vmatpush2.bf16.msra.mxu0 0
  %1226 = vmatprep.subr.bf16.mxu0 0
  %1227 = vmatpush2.bf16.msra.mxu0 0
  %1228 = vmatprep.subr.bf16.mxu0 0
  %1229 = vmatpush2.bf16.msra.mxu0 0
  %1230 = vmatprep.subr.bf16.mxu0 0
  %1231 = vmatpush2.bf16.msra.mxu0 0
  %1232 = vmatprep.subr.bf16.mxu0 0
  %1233 = vmatpush2.bf16.msra.mxu0 0
  %1234 = vmatprep.subr.bf16.mxu0 0
  %1235 = vmatpush2.bf16.msra.mxu0 0
  %1236 = vmatprep.subr.bf16.mxu0 0
  %1237 = vmatpush2.bf16.msra.mxu0 0
  %1238 = vmatprep.mubr.bf16.mxu0 0
  %1239 = vmatmul.mubr.bf16.gmra.mxu0 %v1204
  %v1240 = vpop.f32.mrf.mxu0
  %v1241 = vadd.f32 0.0, %v1240
  %v1242 = vpop.f32.mrf.mxu0
  %v1243 = vpop.f32.mrf.mxu0
  %v1244 = vpop.f32.mrf.mxu0
  %1245 = vdwg.mxu0
  %v1246 = vadd.f32 %v144, %v1241
  %1247 = vrot.lane.b32.xlu0 %v1193, 32
  %v1248 = vpop.permute.xlu0 %1247
  %v1250 = vsel %vm250, %v1248, 0
  %1252 = vmatprep.subr.bf16.mxu0 0
  %1253 = vmatpush1.bf16.msra.mxu0 0
  %1254 = vmatprep.subr.bf16.mxu0 0
  %1255 = vmatpush1.bf16.msra.mxu0 0
  %1256 = vmatprep.subr.bf16.mxu0 0
  %1257 = vmatpush1.bf16.msra.mxu0 0
  %1258 = vmatprep.subr.bf16.mxu0 0
  %1259 = vmatpush1.bf16.msra.mxu0 0
  %1260 = vmatprep.subr.bf16.mxu0 0
  %1261 = vmatpush1.bf16.msra.mxu0 0
  %1262 = vmatprep.subr.bf16.mxu0 0
  %1263 = vmatpush1.bf16.msra.mxu0 0
  %1264 = vmatprep.subr.bf16.mxu0 0
  %1265 = vmatpush1.bf16.msra.mxu0 %v304
  %1266 = vmatprep.subr.bf16.mxu0 0
  %1267 = vmatpush1.bf16.msra.mxu0 %v303
  %1268 = vmatprep.subr.bf16.mxu0 0
  %1269 = vmatpush2.bf16.msra.mxu0 0
  %1270 = vmatprep.subr.bf16.mxu0 0
  %1271 = vmatpush2.bf16.msra.mxu0 0
  %1272 = vmatprep.subr.bf16.mxu0 0
  %1273 = vmatpush2.bf16.msra.mxu0 0
  %1274 = vmatprep.subr.bf16.mxu0 0
  %1275 = vmatpush2.bf16.msra.mxu0 0
  %1276 = vmatprep.subr.bf16.mxu0 0
  %1277 = vmatpush2.bf16.msra.mxu0 0
  %1278 = vmatprep.subr.bf16.mxu0 0
  %1279 = vmatpush2.bf16.msra.mxu0 0
  %1280 = vmatprep.subr.bf16.mxu0 0
  %1281 = vmatpush2.bf16.msra.mxu0 0
  %1282 = vmatprep.subr.bf16.mxu0 0
  %1283 = vmatpush2.bf16.msra.mxu0 0
  %1284 = vmatprep.mubr.bf16.mxu0 0
  %1285 = vmatmul.mubr.bf16.gmra.mxu0 %v1250
  %v1286 = vpop.f32.mrf.mxu0
  %v1287 = vadd.f32 0.0, %v1286
  %v1288 = vpop.f32.mrf.mxu0
  %v1289 = vpop.f32.mrf.mxu0
  %v1290 = vpop.f32.mrf.mxu0
  %1291 = vdwg.mxu0
  %v1292 = vadd.f32 %v203, %v1287
  %v1293 = vxor.u32 %v1246, 2147483648
  %v1294 = vmul.f32 %v1293, 1.442695
  %v1295 = vpow.pop %v1294
  %v1296 = vadd.f32 %v1295, 1.0
  %v1297 = vrcp.pop %v1296
  %v1298 = vmul.f32 1.0, %v1297
  %v1299 = vtanh.pop %v1246
  %v1300 = vmul.f32 %v1298, %v1154
  %1302 = vrot.lane.b32.xlu0 %v1299, 64
  %v1303 = vpop.permute.xlu0 %1302
  %v1305 = vmul.f32 %v1298, %v1303
  %1307 = vrot.lane.b32.xlu0 %v1305, 32
  %v1308 = vpop.permute.xlu0 %1307
  %v1310 = vadd.f32 %v1300, %v1308
  %v1311 = vtanh.pop %v1310
  %1313 = vrot.lane.b32.xlu0 %v1311, 64
  %v1314 = vpop.permute.xlu0 %1313
  %v1316 = vmul.f32 %v1298, %v1314
  %v1317 = vxor.u32 %v1292, 2147483648
  %v1318 = vmul.f32 %v1317, 1.442695
  %v1319 = vpow.pop %v1318
  %v1320 = vadd.f32 %v1319, 1.0
  %v1321 = vrcp.pop %v1320
  %v1322 = vmul.f32 1.0, %v1321
  %v1323 = vtanh.pop %v1292
  %v1324 = vmul.f32 %v1322, %v1178
  %1326 = vrot.lane.b32.xlu0 %v1323, 64
  %v1327 = vpop.permute.xlu0 %1326
  %v1329 = vmul.f32 %v1322, %v1327
  %1331 = vrot.lane.b32.xlu0 %v1329, 32
  %v1332 = vpop.permute.xlu0 %1331
  %v1334 = vadd.f32 %v1324, %v1332
  %v1335 = vtanh.pop %v1334
  %1337 = vrot.lane.b32.xlu0 %v1335, 64
  %v1338 = vpop.permute.xlu0 %1337
  %v1340 = vmul.f32 %v1322, %v1338
  %v1341 = vpack.c.bf16 %v1316, %v1316
  %v1343 = vunpack.c.l.b16 %v1341
  %v1344 = vpack.c.b16 %v1343, %v1343
  %1345 = vrot.lane.b32.xlu0 %v1344, 32
  %v1346 = vpop.permute.xlu0 %1345
  %1348 = vst.msk [vmem:[%s571] sm:$0xf] %vm403, %v1346
  %v1349 = vpack.c.bf16 %v1340, %v1340
  %v1351 = vunpack.c.l.b16 %v1349
  %v1352 = vpack.c.b16 %v1351, %v1351
  %1353 = vrot.lane.b32.xlu0 %v1352, 64
  %v1354 = vpop.permute.xlu0 %1353
  %1356 = vst.msk [vmem:[%s562] sm:$0xf] %vm413, %v1354
  %1357 = vrot.lane.b32.xlu0 %v1341, 32
  %v1358 = vpop.permute.xlu0 %1357
  %v1360 = vsel %vm250, %v1358, 0
  %1362 = vmatprep.subr.bf16.mxu0 0
  %1363 = vmatpush1.bf16.msra.mxu0 0
  %1364 = vmatprep.subr.bf16.mxu0 0
  %1365 = vmatpush1.bf16.msra.mxu0 0
  %1366 = vmatprep.subr.bf16.mxu0 0
  %1367 = vmatpush1.bf16.msra.mxu0 0
  %1368 = vmatprep.subr.bf16.mxu0 0
  %1369 = vmatpush1.bf16.msra.mxu0 0
  %1370 = vmatprep.subr.bf16.mxu0 0
  %1371 = vmatpush1.bf16.msra.mxu0 0
  %1372 = vmatprep.subr.bf16.mxu0 0
  %1373 = vmatpush1.bf16.msra.mxu0 0
  %1374 = vmatprep.subr.bf16.mxu0 0
  %1375 = vmatpush1.bf16.msra.mxu0 %v247
  %1376 = vmatprep.subr.bf16.mxu0 0
  %1377 = vmatpush1.bf16.msra.mxu0 %v246
  %1378 = vmatprep.subr.bf16.mxu0 0
  %1379 = vmatpush2.bf16.msra.mxu0 0
  %1380 = vmatprep.subr.bf16.mxu0 0
  %1381 = vmatpush2.bf16.msra.mxu0 0
  %1382 = vmatprep.subr.bf16.mxu0 0
  %1383 = vmatpush2.bf16.msra.mxu0 0
  %1384 = vmatprep.subr.bf16.mxu0 0
  %1385 = vmatpush2.bf16.msra.mxu0 0
  %1386 = vmatprep.subr.bf16.mxu0 0
  %1387 = vmatpush2.bf16.msra.mxu0 0
  %1388 = vmatprep.subr.bf16.mxu0 0
  %1389 = vmatpush2.bf16.msra.mxu0 0
  %1390 = vmatprep.subr.bf16.mxu0 0
  %1391 = vmatpush2.bf16.msra.mxu0 0
  %1392 = vmatprep.subr.bf16.mxu0 0
  %1393 = vmatpush2.bf16.msra.mxu0 0
  %1394 = vmatprep.mubr.bf16.mxu0 0
  %1395 = vmatmul.mubr.bf16.gmra.mxu0 %v1360
  %v1396 = vpop.f32.mrf.mxu0
  %v1397 = vadd.f32 0.0, %v1396
  %v1398 = vpop.f32.mrf.mxu0
  %v1399 = vpop.f32.mrf.mxu0
  %v1400 = vpop.f32.mrf.mxu0
  %1401 = vdwg.mxu0
  %v1402 = vadd.f32 %v147, %v1397
  %1403 = vrot.lane.b32.xlu0 %v1349, 32
  %v1404 = vpop.permute.xlu0 %1403
  %v1406 = vsel %vm250, %v1404, 0
  %1408 = vmatprep.subr.bf16.mxu0 0
  %1409 = vmatpush1.bf16.msra.mxu0 0
  %1410 = vmatprep.subr.bf16.mxu0 0
  %1411 = vmatpush1.bf16.msra.mxu0 0
  %1412 = vmatprep.subr.bf16.mxu0 0
  %1413 = vmatpush1.bf16.msra.mxu0 0
  %1414 = vmatprep.subr.bf16.mxu0 0
  %1415 = vmatpush1.bf16.msra.mxu0 0
  %1416 = vmatprep.subr.bf16.mxu0 0
  %1417 = vmatpush1.bf16.msra.mxu0 0
  %1418 = vmatprep.subr.bf16.mxu0 0
  %1419 = vmatpush1.bf16.msra.mxu0 0
  %1420 = vmatprep.subr.bf16.mxu0 0
  %1421 = vmatpush1.bf16.msra.mxu0 %v304
  %1422 = vmatprep.subr.bf16.mxu0 0
  %1423 = vmatpush1.bf16.msra.mxu0 %v303
  %1424 = vmatprep.subr.bf16.mxu0 0
  %1425 = vmatpush2.bf16.msra.mxu0 0
  %1426 = vmatprep.subr.bf16.mxu0 0
  %1427 = vmatpush2.bf16.msra.mxu0 0
  %1428 = vmatprep.subr.bf16.mxu0 0
  %1429 = vmatpush2.bf16.msra.mxu0 0
  %1430 = vmatprep.subr.bf16.mxu0 0
  %1431 = vmatpush2.bf16.msra.mxu0 0
  %1432 = vmatprep.subr.bf16.mxu0 0
  %1433 = vmatpush2.bf16.msra.mxu0 0
  %1434 = vmatprep.subr.bf16.mxu0 0
  %1435 = vmatpush2.bf16.msra.mxu0 0
  %1436 = vmatprep.subr.bf16.mxu0 0
  %1437 = vmatpush2.bf16.msra.mxu0 0
  %1438 = vmatprep.subr.bf16.mxu0 0
  %1439 = vmatpush2.bf16.msra.mxu0 0
  %1440 = vmatprep.mubr.bf16.mxu0 0
  %1441 = vmatmul.mubr.bf16.gmra.mxu0 %v1406
  %v1442 = vpop.f32.mrf.mxu0
  %v1443 = vadd.f32 0.0, %v1442
  %v1444 = vpop.f32.mrf.mxu0
  %v1445 = vpop.f32.mrf.mxu0
  %v1446 = vpop.f32.mrf.mxu0
  %1447 = vdwg.mxu0
  %v1448 = vadd.f32 %v200, %v1443
  %v1449 = vxor.u32 %v1402, 2147483648
  %v1450 = vmul.f32 %v1449, 1.442695
  %v1451 = vpow.pop %v1450
  %v1452 = vadd.f32 %v1451, 1.0
  %v1453 = vrcp.pop %v1452
  %v1454 = vmul.f32 1.0, %v1453
  %v1455 = vtanh.pop %v1402
  %v1456 = vmul.f32 %v1454, %v1310
  %1458 = vrot.lane.b32.xlu0 %v1455, 64
  %v1459 = vpop.permute.xlu0 %1458
  %v1461 = vmul.f32 %v1454, %v1459
  %1463 = vrot.lane.b32.xlu0 %v1461, 32
  %v1464 = vpop.permute.xlu0 %1463
  %v1466 = vadd.f32 %v1456, %v1464
  %v1467 = vtanh.pop %v1466
  %1469 = vrot.lane.b32.xlu0 %v1467, 64
  %v1470 = vpop.permute.xlu0 %1469
  %v1472 = vmul.f32 %v1454, %v1470
  %v1473 = vxor.u32 %v1448, 2147483648
  %v1474 = vmul.f32 %v1473, 1.442695
  %v1475 = vpow.pop %v1474
  %v1476 = vadd.f32 %v1475, 1.0
  %v1477 = vrcp.pop %v1476
  %v1478 = vmul.f32 1.0, %v1477
  %v1479 = vtanh.pop %v1448
  %v1480 = vmul.f32 %v1478, %v1334
  %1482 = vrot.lane.b32.xlu0 %v1479, 64
  %v1483 = vpop.permute.xlu0 %1482
  %v1485 = vmul.f32 %v1478, %v1483
  %1487 = vrot.lane.b32.xlu0 %v1485, 32
  %v1488 = vpop.permute.xlu0 %1487
  %v1490 = vadd.f32 %v1480, %v1488
  %v1491 = vtanh.pop %v1490
  %1493 = vrot.lane.b32.xlu0 %v1491, 64
  %v1494 = vpop.permute.xlu0 %1493
  %v1496 = vmul.f32 %v1478, %v1494
  %v1497 = vpack.c.bf16 %v1472, %v1472
  %v1499 = vunpack.c.l.b16 %v1497
  %v1500 = vpack.c.b16 %v1499, %v1499
  %1501 = vrot.lane.b32.xlu0 %v1500, 32
  %v1502 = vpop.permute.xlu0 %1501
  %1504 = vst.msk [vmem:[%s412] sm:$0xf] %vm403, %v1502
  %v1505 = vpack.c.bf16 %v1496, %v1496
  %v1507 = vunpack.c.l.b16 %v1505
  %v1508 = vpack.c.b16 %v1507, %v1507
  %1509 = vrot.lane.b32.xlu0 %v1508, 64
  %v1510 = vpop.permute.xlu0 %1509
  %1512 = vst.msk [vmem:[%s7] sm:$0xf] %vm413, %v1510
  %1514 = vrot.lane.b32.xlu0 %v1466, 96
  %v1515 = vpop.permute.xlu0 %1514
  %1517 = vst.msk [vmem:[%s8] sm:$0xff] %vm250, %v1515
  %vm1518 = vcmask 523520
  %1519 = vst.msk [vmem:[%s8] sm:$0xff] %vm1518, %v1490
  // Predicated region
  $region30: #{bilstm_forward.2} parent=0 // pred_check
    _
  $region31: #{bilstm_forward.2} parent=0 // pred_check_branch
    %1521 = sbr.rel (0) target = $region33
  $region32: #{bilstm_forward.2} parent=0 // pred_region
    _
  $region33: #{bilstm_forward.2} parent=0 // pred_fallthru
    _
  // Predicated region
  $region34: #{bilstm_forward.2} parent=0 // pred_check
    _
  $region35: #{bilstm_forward.2} parent=0 // pred_check_branch
    %1523 = sbr.rel (0) target = $region37
  $region36: #{bilstm_forward.2} parent=0 // pred_region
    _
  $region37: #{bilstm_forward.2} parent=0 // pred_fallthru
    _
  // Predicated region
  $region38: #{bilstm_forward.2} parent=0 // pred_check
    _
  $region39: #{bilstm_forward.2} parent=0 // pred_check_branch
    %1525 = sbr.rel (0) target = $region41
  $region40: #{bilstm_forward.2} parent=0 // pred_region
    _
  $region41: #{bilstm_forward.2} parent=0 // pred_fallthru
    _
  // Predicated region
  $region42: #{bilstm_forward.2} parent=0 // pred_check
    _
  $region43: #{bilstm_forward.2} parent=0 // pred_check_branch
    %1527 = sbr.rel (0) target = $region45
  $region44: #{bilstm_forward.2} parent=0 // pred_region
    _
  $region45: #{bilstm_forward.2} parent=0 // pred_fallthru
    _

// kernel: bilstm_forward.3
$region0: #{bilstm_forward.3}
  #allocation0 [shape = 'u32[]', space=smem, size = 0x4, offset = 0x4, fixed_abs, tag = 'smem constant byte address 0x4 - core index']
  #allocation1 [shape = 'u32[144,128]{1,0:T(1,128)}', space=vmem, size = 0x12000, scoped, tag = 'internal scratch']
  %s0 = inlined_call_operand.vmem [shape: bf16[64,64], index: 0, kind: input, shape index: {}]
  %s1 = inlined_call_operand.vmem [shape: bf16[64,128], index: 1, kind: input, shape index: {}]
  %s2 = inlined_call_operand.vmem [shape: bf16[32,128], index: 2, kind: input, shape index: {}]
  %s3 = inlined_call_operand.vmem [shape: f32[1,128], index: 3, kind: input, shape index: {}]
  %s4 = inlined_call_operand.vmem [shape: bf16[64,128], index: 4, kind: input, shape index: {}]
  %s5 = inlined_call_operand.vmem [shape: bf16[32,128], index: 5, kind: input, shape index: {}]
  %s6 = inlined_call_operand.vmem [shape: f32[1,128], index: 6, kind: input, shape index: {}]
  %s7 = inlined_call_operand.hbm [shape: bf16[8,8,64], index: 7, kind: output, shape index: {0}]
  %s8 = inlined_call_operand.vmem [shape: f32[8,64], index: 8, kind: output, shape index: {1}]
  %9 = xla_tuple %s7, %s8
  %s10 = sld [smem:[#allocation0]]
  $region46: #{bilstm_forward.3} parent=0
    _
  %s12 = ssub.s32 1, %s10
  %s13 = scalar_select 0, %s12, %s10
  $region1: #{bilstm_forward.3} parent=0
    #allocation2 [shape = 'u8[16384]{0}', space=vmem, size = 0x4000, scoped, tag = 'output window, operand 0, single buffered']
    #allocation3 [shape = 's32[1]{0}', space=sflag, size = 0x4, scoped, tag = 'scoped memory for bilstm_forward.3']
    %14 = vsyncpa [#allocation3], 0
    // Predicated region
    $region2: #{bilstm_forward.3} parent=1 // pred_check
      _
    $region3: #{bilstm_forward.3} parent=1 // pred_check_branch
      %16 = sbr.rel (0) target = $region5
    $region4: #{bilstm_forward.3} parent=1 // pred_region
      _
    $region5: #{bilstm_forward.3} parent=1 // pred_fallthru
      _
    // Predicated region
    $region6: #{bilstm_forward.3} parent=1 // pred_check
      _
    $region7: #{bilstm_forward.3} parent=1 // pred_check_branch
      %18 = sbr.rel (0) target = $region9
    $region8: #{bilstm_forward.3} parent=1 // pred_region
      _
    $region9: #{bilstm_forward.3} parent=1 // pred_fallthru
      _
    // Predicated region
    $region10: #{bilstm_forward.3} parent=1 // pred_check
      _
    $region11: #{bilstm_forward.3} parent=1 // pred_check_branch
      %20 = sbr.rel (0) target = $region13
    $region12: #{bilstm_forward.3} parent=1 // pred_region
      _
    $region13: #{bilstm_forward.3} parent=1 // pred_fallthru
      _
    // Predicated region
    $region14: #{bilstm_forward.3} parent=1 // pred_check
      _
    $region15: #{bilstm_forward.3} parent=1 // pred_check_branch
      %22 = sbr.rel (0) target = $region17
    $region16: #{bilstm_forward.3} parent=1 // pred_region
      _
    $region17: #{bilstm_forward.3} parent=1 // pred_fallthru
      _
    // Predicated region
    $region18: #{bilstm_forward.3} parent=1 // pred_check
      _
    $region19: #{bilstm_forward.3} parent=1 // pred_check_branch
      %24 = sbr.rel (0) target = $region21
    $region20: #{bilstm_forward.3} parent=1 // pred_region
      _
    $region21: #{bilstm_forward.3} parent=1 // pred_fallthru
      _
    // Predicated region
    $region22: #{bilstm_forward.3} parent=1 // pred_check
      _
    $region23: #{bilstm_forward.3} parent=1 // pred_check_branch
      %26 = sbr.rel (0) target = $region25
    $region24: #{bilstm_forward.3} parent=1 // pred_region
      _
    $region25: #{bilstm_forward.3} parent=1 // pred_fallthru
      _
    // Predicated region
    $region26: #{bilstm_forward.3} parent=1 // pred_check
      _
    $region27: #{bilstm_forward.3} parent=1 // pred_check_branch
      %28 = sbr.rel (0) target = $region29
    $region28: #{bilstm_forward.3} parent=1 // pred_region
      _
    $region29: #{bilstm_forward.3} parent=1 // pred_fallthru
      _
    %v30 = vld [vmem:[%s0] sm:$0xf]
    %v31 = vld [vmem:[%s0 + $0x4] sm:$0xf]
    %v32 = vld [vmem:[%s0 + $0x8] sm:$0xf]
    %v33 = vld [vmem:[%s0 + $0xc] sm:$0xf]
    %v34 = vld [vmem:[%s0 + $0x10] sm:$0xf]
    %v35 = vld [vmem:[%s0 + $0x14] sm:$0xf]
    %v36 = vld [vmem:[%s0 + $0x18] sm:$0xf]
    %v37 = vld [vmem:[%s0 + $0x1c] sm:$0xf]
    %v38 = vld [vmem:[%s1] sm:$0xf]
    %v39 = vld [vmem:[%s1 + $0x4] sm:$0xf]
    %v40 = vld [vmem:[%s1 + $0x8] sm:$0xf]
    %v41 = vld [vmem:[%s1 + $0xc] sm:$0xf]
    %v42 = vld [vmem:[%s1 + $0x10] sm:$0xf]
    %v43 = vld [vmem:[%s1 + $0x14] sm:$0xf]
    %v44 = vld [vmem:[%s1 + $0x18] sm:$0xf]
    %v45 = vld [vmem:[%s1 + $0x1c] sm:$0xf]
    %v46 = vld [vmem:[%s3] sm:$0x1]
    %v48 = vlaneseq
    %v49 = vshrl.u32 %v48, 7
    %v50 = vsub.s32 0, %v49
    %v51 = vrot.slane %v46, %v50
    %v61 = vunpack.c.l.b16 %v30
    %v62 = vunpack.c.l.b16 %v31
    %v63 = vunpack.c.l.b16 %v32
    %v64 = vunpack.c.l.b16 %v33
    %v65 = vunpack.c.l.b16 %v34
    %v66 = vunpack.c.l.b16 %v35
    %v67 = vunpack.c.l.b16 %v36
    %v68 = vunpack.c.l.b16 %v37
    %v69 = vpack.c.b16 %v62, %v61
    %v70 = vpack.c.b16 %v64, %v63
    %v71 = vpack.c.b16 %v66, %v65
    %v72 = vpack.c.b16 %v68, %v67
    %v81 = vunpack.c.l.b16 %v38
    %v82 = vunpack.c.l.b16 %v39
    %v83 = vunpack.c.l.b16 %v40
    %v84 = vunpack.c.l.b16 %v41
    %v85 = vunpack.c.l.b16 %v42
    %v86 = vunpack.c.l.b16 %v43
    %v87 = vunpack.c.l.b16 %v44
    %v88 = vunpack.c.l.b16 %v45
    %v89 = vpack.c.b16 %v82, %v81
    %v90 = vpack.c.b16 %v84, %v83
    %v91 = vpack.c.b16 %v86, %v85
    %v92 = vpack.c.b16 %v88, %v87
    %vm97 = vcmask 523264
    %v99 = vsel %vm97, %v69, 0
    %v102 = vsel %vm97, %v70, 0
    %v105 = vsel %vm97, %v71, 0
    %v108 = vsel %vm97, %v72, 0
    %110 = vmatprep.subr.bf16.mxu0 0
    %111 = vmatpush1.bf16.msra.mxu0 0
    %112 = vmatprep.subr.bf16.mxu0 0
    %113 = vmatpush1.bf16.msra.mxu0 0
    %114 = vmatprep.subr.bf16.mxu0 0
    %115 = vmatpush1.bf16.msra.mxu0 0
    %116 = vmatprep.subr.bf16.mxu0 0
    %117 = vmatpush1.bf16.msra.mxu0 0
    %118 = vmatprep.subr.bf16.mxu0 0
    %119 = vmatpush1.bf16.msra.mxu0 %v92
    %120 = vmatprep.subr.bf16.mxu0 0
    %121 = vmatpush1.bf16.msra.mxu0 %v91
    %122 = vmatprep.subr.bf16.mxu0 0
    %123 = vmatpush1.bf16.msra.mxu0 %v90
    %124 = vmatprep.subr.bf16.mxu0 0
    %125 = vmatpush1.bf16.msra.mxu0 %v89
    %126 = vmatprep.subr.bf16.mxu0 0
    %127 = vmatpush2.bf16.msra.mxu0 0
    %128 = vmatprep.subr.bf16.mxu0 0
    %129 = vmatpush2.bf16.msra.mxu0 0
    %130 = vmatprep.subr.bf16.mxu0 0
    %131 = vmatpush2.bf16.msra.mxu0 0
    %132 = vmatprep.subr.bf16.mxu0 0
    %133 = vmatpush2.bf16.msra.mxu0 0
    %134 = vmatprep.subr.bf16.mxu0 0
    %135 = vmatpush2.bf16.msra.mxu0 0
    %136 = vmatprep.subr.bf16.mxu0 0
    %137 = vmatpush2.bf16.msra.mxu0 0
    %138 = vmatprep.subr.bf16.mxu0 0
    %139 = vmatpush2.bf16.msra.mxu0 0
    %140 = vmatprep.subr.bf16.mxu0 0
    %141 = vmatpush2.bf16.msra.mxu0 0
    %142 = vmatprep.mubr.bf16.mxu0 0
    %143 = vmatmul.mubr.bf16.gmra.mxu0 %v99
    %v144 = vpop.f32.mrf.mxu0
    %v145 = vadd.f32 %v51, %v144
    %v146 = vpop.f32.mrf.mxu0
    %v147 = vpop.f32.mrf.mxu0
    %v148 = vadd.f32 %v51, %v147
    %v149 = vpop.f32.mrf.mxu0
    %150 = vmatprep.mubr.bf16.mxu0 0
    %151 = vmatmul.mubr.bf16.gmra.mxu0 %v102
    %v152 = vpop.f32.mrf.mxu0
    %v153 = vadd.f32 %v51, %v152
    %v154 = vpop.f32.mrf.mxu0
    %v155 = vpop.f32.mrf.mxu0
    %v156 = vadd.f32 %v51, %v155
    %v157 = vpop.f32.mrf.mxu0
    %158 = vmatprep.mubr.bf16.mxu0 0
    %159 = vmatmul.mubr.bf16.gmra.mxu0 %v105
    %v160 = vpop.f32.mrf.mxu0
    %v161 = vadd.f32 %v51, %v160
    %v162 = vpop.f32.mrf.mxu0
    %v163 = vpop.f32.mrf.mxu0
    %v164 = vadd.f32 %v51, %v163
    %v165 = vpop.f32.mrf.mxu0
    %166 = vmatprep.mubr.bf16.mxu0 0
    %167 = vmatmul.mubr.bf16.gmra.mxu0 %v108
    %v168 = vpop.f32.mrf.mxu0
    %v169 = vadd.f32 %v51, %v168
    %v170 = vpop.f32.mrf.mxu0
    %v171 = vpop.f32.mrf.mxu0
    %v172 = vadd.f32 %v51, %v171
    %v173 = vpop.f32.mrf.mxu0
    %174 = vdwg.mxu0
    %v175 = vld [vmem:[%s4] sm:$0xf]
    %v176 = vld [vmem:[%s4 + $0x4] sm:$0xf]
    %v177 = vld [vmem:[%s4 + $0x8] sm:$0xf]
    %v178 = vld [vmem:[%s4 + $0xc] sm:$0xf]
    %v179 = vld [vmem:[%s4 + $0x10] sm:$0xf]
    %v180 = vld [vmem:[%s4 + $0x14] sm:$0xf]
    %v181 = vld [vmem:[%s4 + $0x18] sm:$0xf]
    %v182 = vld [vmem:[%s4 + $0x1c] sm:$0xf]
    %v183 = vld [vmem:[%s6] sm:$0x1]
    %v185 = vlaneseq
    %v186 = vshrl.u32 %v185, 7
    %v187 = vsub.s32 0, %v186
    %v188 = vrot.slane %v183, %v187
    %v198 = vunpack.c.l.b16 %v175
    %v199 = vunpack.c.l.b16 %v176
    %v200 = vunpack.c.l.b16 %v177
    %v201 = vunpack.c.l.b16 %v178
    %v202 = vunpack.c.l.b16 %v179
    %v203 = vunpack.c.l.b16 %v180
    %v204 = vunpack.c.l.b16 %v181
    %v205 = vunpack.c.l.b16 %v182
    %v206 = vpack.c.b16 %v199, %v198
    %v207 = vpack.c.b16 %v201, %v200
    %v208 = vpack.c.b16 %v203, %v202
    %v209 = vpack.c.b16 %v205, %v204
    %214 = vmatprep.subr.bf16.mxu0 0
    %215 = vmatpush1.bf16.msra.mxu0 0
    %216 = vmatprep.subr.bf16.mxu0 0
    %217 = vmatpush1.bf16.msra.mxu0 0
    %218 = vmatprep.subr.bf16.mxu0 0
    %219 = vmatpush1.bf16.msra.mxu0 0
    %220 = vmatprep.subr.bf16.mxu0 0
    %221 = vmatpush1.bf16.msra.mxu0 0
    %222 = vmatprep.subr.bf16.mxu0 0
    %223 = vmatpush1.bf16.msra.mxu0 %v209
    %224 = vmatprep.subr.bf16.mxu0 0
    %225 = vmatpush1.bf16.msra.mxu0 %v208
    %226 = vmatprep.subr.bf16.mxu0 0
    %227 = vmatpush1.bf16.msra.mxu0 %v207
    %228 = vmatprep.subr.bf16.mxu0 0
    %229 = vmatpush1.bf16.msra.mxu0 %v206
    %230 = vmatprep.subr.bf16.mxu0 0
    %231 = vmatpush2.bf16.msra.mxu0 0
    %232 = vmatprep.subr.bf16.mxu0 0
    %233 = vmatpush2.bf16.msra.mxu0 0
    %234 = vmatprep.subr.bf16.mxu0 0
    %235 = vmatpush2.bf16.msra.mxu0 0
    %236 = vmatprep.subr.bf16.mxu0 0
    %237 = vmatpush2.bf16.msra.mxu0 0
    %238 = vmatprep.subr.bf16.mxu0 0
    %239 = vmatpush2.bf16.msra.mxu0 0
    %240 = vmatprep.subr.bf16.mxu0 0
    %241 = vmatpush2.bf16.msra.mxu0 0
    %242 = vmatprep.subr.bf16.mxu0 0
    %243 = vmatpush2.bf16.msra.mxu0 0
    %244 = vmatprep.subr.bf16.mxu0 0
    %245 = vmatpush2.bf16.msra.mxu0 0
    %246 = vmatprep.mubr.bf16.mxu0 0
    %247 = vmatmul.mubr.bf16.gmra.mxu0 %v99
    %v248 = vpop.f32.mrf.mxu0
    %v249 = vadd.f32 %v188, %v248
    %v250 = vpop.f32.mrf.mxu0
    %v251 = vpop.f32.mrf.mxu0
    %v252 = vadd.f32 %v188, %v251
    %v253 = vpop.f32.mrf.mxu0
    %254 = vmatprep.mubr.bf16.mxu0 0
    %255 = vmatmul.mubr.bf16.gmra.mxu0 %v102
    %v256 = vpop.f32.mrf.mxu0
    %v257 = vadd.f32 %v188, %v256
    %v258 = vpop.f32.mrf.mxu0
    %v259 = vpop.f32.mrf.mxu0
    %v260 = vadd.f32 %v188, %v259
    %v261 = vpop.f32.mrf.mxu0
    %262 = vmatprep.mubr.bf16.mxu0 0
    %263 = vmatmul.mubr.bf16.gmra.mxu0 %v105
    %v264 = vpop.f32.mrf.mxu0
    %v265 = vadd.f32 %v188, %v264
    %v266 = vpop.f32.mrf.mxu0
    %v267 = vpop.f32.mrf.mxu0
    %v268 = vadd.f32 %v188, %v267
    %v269 = vpop.f32.mrf.mxu0
    %270 = vmatprep.mubr.bf16.mxu0 0
    %271 = vmatmul.mubr.bf16.gmra.mxu0 %v108
    %v272 = vpop.f32.mrf.mxu0
    %v273 = vadd.f32 %v188, %v272
    %v274 = vpop.f32.mrf.mxu0
    %v275 = vpop.f32.mrf.mxu0
    %v276 = vadd.f32 %v188, %v275
    %v277 = vpop.f32.mrf.mxu0
    %278 = vdwg.mxu0
    %v279 = vld [vmem:[%s2] sm:$0xf]
    %v280 = vld [vmem:[%s2 + $0x4] sm:$0xf]
    %v281 = vld [vmem:[%s2 + $0x8] sm:$0xf]
    %v282 = vld [vmem:[%s2 + $0xc] sm:$0xf]
    %v283 = vld [vmem:[%s5] sm:$0xf]
    %v284 = vld [vmem:[%s5 + $0x4] sm:$0xf]
    %v285 = vld [vmem:[%s5 + $0x8] sm:$0xf]
    %v286 = vld [vmem:[%s5 + $0xc] sm:$0xf]
    %v291 = vunpack.c.l.b16 %v279
    %v292 = vunpack.c.l.b16 %v280
    %v293 = vunpack.c.l.b16 %v281
    %v294 = vunpack.c.l.b16 %v282
    %v295 = vpack.c.b16 %v292, %v291
    %v296 = vpack.c.b16 %v294, %v293
    %vm299 = vcmask 261120
    %v301 = vsel %vm299, 0, 0
    %303 = vmatprep.subr.bf16.mxu0 0
    %304 = vmatpush1.bf16.msra.mxu0 0
    %305 = vmatprep.subr.bf16.mxu0 0
    %306 = vmatpush1.bf16.msra.mxu0 0
    %307 = vmatprep.subr.bf16.mxu0 0
    %308 = vmatpush1.bf16.msra.mxu0 0
    %309 = vmatprep.subr.bf16.mxu0 0
    %310 = vmatpush1.bf16.msra.mxu0 0
    %311 = vmatprep.subr.bf16.mxu0 0
    %312 = vmatpush1.bf16.msra.mxu0 0
    %313 = vmatprep.subr.bf16.mxu0 0
    %314 = vmatpush1.bf16.msra.mxu0 0
    %315 = vmatprep.subr.bf16.mxu0 0
    %316 = vmatpush1.bf16.msra.mxu0 %v296
    %317 = vmatprep.subr.bf16.mxu0 0
    %318 = vmatpush1.bf16.msra.mxu0 %v295
    %319 = vmatprep.subr.bf16.mxu0 0
    %320 = vmatpush2.bf16.msra.mxu0 0
    %321 = vmatprep.subr.bf16.mxu0 0
    %322 = vmatpush2.bf16.msra.mxu0 0
    %323 = vmatprep.subr.bf16.mxu0 0
    %324 = vmatpush2.bf16.msra.mxu0 0
    %325 = vmatprep.subr.bf16.mxu0 0
    %326 = vmatpush2.bf16.msra.mxu0 0
    %327 = vmatprep.subr.bf16.mxu0 0
    %328 = vmatpush2.bf16.msra.mxu0 0
    %329 = vmatprep.subr.bf16.mxu0 0
    %330 = vmatpush2.bf16.msra.mxu0 0
    %331 = vmatprep.subr.bf16.mxu0 0
    %332 = vmatpush2.bf16.msra.mxu0 0
    %333 = vmatprep.subr.bf16.mxu0 0
    %334 = vmatpush2.bf16.msra.mxu0 0
    %335 = vmatprep.mubr.bf16.mxu0 0
    %336 = vmatmul.mubr.bf16.gmra.mxu0 %v301
    %v337 = vpop.f32.mrf.mxu0
    %v338 = vadd.f32 0.0, %v337
    %v339 = vpop.f32.mrf.mxu0
    %v340 = vpop.f32.mrf.mxu0
    %v341 = vpop.f32.mrf.mxu0
    %342 = vdwg.mxu0
    %v343 = vadd.f32 %v145, %v338
    %v348 = vunpack.c.l.b16 %v283
    %v349 = vunpack.c.l.b16 %v284
    %v350 = vunpack.c.l.b16 %v285
    %v351 = vunpack.c.l.b16 %v286
    %v352 = vpack.c.b16 %v349, %v348
    %v353 = vpack.c.b16 %v351, %v350
    %356 = vmatprep.subr.bf16.mxu0 0
    %357 = vmatpush1.bf16.msra.mxu0 0
    %358 = vmatprep.subr.bf16.mxu0 0
    %359 = vmatpush1.bf16.msra.mxu0 0
    %360 = vmatprep.subr.bf16.mxu0 0
    %361 = vmatpush1.bf16.msra.mxu0 0
    %362 = vmatprep.subr.bf16.mxu0 0
    %363 = vmatpush1.bf16.msra.mxu0 0
    %364 = vmatprep.subr.bf16.mxu0 0
    %365 = vmatpush1.bf16.msra.mxu0 0
    %366 = vmatprep.subr.bf16.mxu0 0
    %367 = vmatpush1.bf16.msra.mxu0 0
    %368 = vmatprep.subr.bf16.mxu0 0
    %369 = vmatpush1.bf16.msra.mxu0 %v353
    %370 = vmatprep.subr.bf16.mxu0 0
    %371 = vmatpush1.bf16.msra.mxu0 %v352
    %372 = vmatprep.subr.bf16.mxu0 0
    %373 = vmatpush2.bf16.msra.mxu0 0
    %374 = vmatprep.subr.bf16.mxu0 0
    %375 = vmatpush2.bf16.msra.mxu0 0
    %376 = vmatprep.subr.bf16.mxu0 0
    %377 = vmatpush2.bf16.msra.mxu0 0
    %378 = vmatprep.subr.bf16.mxu0 0
    %379 = vmatpush2.bf16.msra.mxu0 0
    %380 = vmatprep.subr.bf16.mxu0 0
    %381 = vmatpush2.bf16.msra.mxu0 0
    %382 = vmatprep.subr.bf16.mxu0 0
    %383 = vmatpush2.bf16.msra.mxu0 0
    %384 = vmatprep.subr.bf16.mxu0 0
    %385 = vmatpush2.bf16.msra.mxu0 0
    %386 = vmatprep.subr.bf16.mxu0 0
    %387 = vmatpush2.bf16.msra.mxu0 0
    %388 = vmatprep.mubr.bf16.mxu0 0
    %389 = vmatmul.mubr.bf16.gmra.mxu0 %v301
    %v390 = vpop.f32.mrf.mxu0
    %v391 = vadd.f32 0.0, %v390
    %v392 = vpop.f32.mrf.mxu0
    %v393 = vpop.f32.mrf.mxu0
    %v394 = vpop.f32.mrf.mxu0
    %395 = vdwg.mxu0
    %v396 = vadd.f32 %v276, %v391
    %v397 = vxor.u32 %v343, 2147483648
    %v398 = vmul.f32 %v397, 1.442695
    %v399 = vpow.pop %v398
    %v400 = vadd.f32 %v399, 1.0
    %v401 = vrcp.pop %v400
    %v402 = vmul.f32 1.0, %v401
    %v403 = vtanh.pop %v343
    %v404 = vmul.f32 %v402, 0.0
    %406 = vrot.lane.b32.xlu0 %v403, 64
    %v407 = vpop.permute.xlu0 %406
    %v409 = vmul.f32 %v402, %v407
    %411 = vrot.lane.b32.xlu0 %v409, 32
    %v412 = vpop.permute.xlu0 %411
    %v414 = vadd.f32 %v404, %v412
    %v415 = vtanh.pop %v414
    %417 = vrot.lane.b32.xlu0 %v415, 64
    %v418 = vpop.permute.xlu0 %417
    %v420 = vmul.f32 %v402, %v418
    %v421 = vxor.u32 %v396, 2147483648
    %v422 = vmul.f32 %v421, 1.442695
    %v423 = vpow.pop %v422
    %v424 = vadd.f32 %v423, 1.0
    %v425 = vrcp.pop %v424
    %v426 = vmul.f32 1.0, %v425
    %v427 = vtanh.pop %v396
    %v428 = vmul.f32 %v426, 0.0
    %430 = vrot.lane.b32.xlu0 %v427, 64
    %v431 = vpop.permute.xlu0 %430
    %v433 = vmul.f32 %v426, %v431
    %435 = vrot.lane.b32.xlu0 %v433, 32
    %v436 = vpop.permute.xlu0 %435
    %v438 = vadd.f32 %v428, %v436
    %v439 = vtanh.pop %v438
    %441 = vrot.lane.b32.xlu0 %v439, 64
    %v442 = vpop.permute.xlu0 %441
    %v444 = vmul.f32 %v426, %v442
    %v445 = vpack.c.bf16 %v420, %v420
    %v447 = vunpack.c.l.b16 %v445
    %v448 = vpack.c.b16 %v447, %v447
    %449 = vrot.lane.b32.xlu0 %v448, 32
    %v450 = vpop.permute.xlu0 %449
    %vm452 = vcmask 257024
    %453 = vst.msk [vmem:[#allocation2] sm:$0xf] %vm452, %v450
    %v454 = vpack.c.bf16 %v444, %v444
    %v456 = vunpack.c.l.b16 %v454
    %v457 = vpack.c.b16 %v456, %v456
    %458 = vrot.lane.b32.xlu0 %v457, 64
    %v459 = vpop.permute.xlu0 %458
    %s461 = scalar_lea.vmem [#allocation2], 28
    %vm462 = vcmask 519424
    %463 = vst.msk [vmem:[%s461] sm:$0xf] %vm462, %v459
    %464 = vrot.lane.b32.xlu0 %v445, 32
    %v465 = vpop.permute.xlu0 %464
    %v467 = vsel %vm299, %v465, 0
    %469 = vmatprep.subr.bf16.mxu0 0
    %470 = vmatpush1.bf16.msra.mxu0 0
    %471 = vmatprep.subr.bf16.mxu0 0
    %472 = vmatpush1.bf16.msra.mxu0 0
    %473 = vmatprep.subr.bf16.mxu0 0
    %474 = vmatpush1.bf16.msra.mxu0 0
    %475 = vmatprep.subr.bf16.mxu0 0
    %476 = vmatpush1.bf16.msra.mxu0 0
    %477 = vmatprep.subr.bf16.mxu0 0
    %478 = vmatpush1.bf16.msra.mxu0 0
    %479 = vmatprep.subr.bf16.mxu0 0
    %480 = vmatpush1.bf16.msra.mxu0 0
    %481 = vmatprep.subr.bf16.mxu0 0
    %482 = vmatpush1.bf16.msra.mxu0 %v296
    %483 = vmatprep.subr.bf16.mxu0 0
    %484 = vmatpush1.bf16.msra.mxu0 %v295
    %485 = vmatprep.subr.bf16.mxu0 0
    %486 = vmatpush2.bf16.msra.mxu0 0
    %487 = vmatprep.subr.bf16.mxu0 0
    %488 = vmatpush2.bf16.msra.mxu0 0
    %489 = vmatprep.subr.bf16.mxu0 0
    %490 = vmatpush2.bf16.msra.mxu0 0
    %491 = vmatprep.subr.bf16.mxu0 0
    %492 = vmatpush2.bf16.msra.mxu0 0
    %493 = vmatprep.subr.bf16.mxu0 0
    %494 = vmatpush2.bf16.msra.mxu0 0
    %495 = vmatprep.subr.bf16.mxu0 0
    %496 = vmatpush2.bf16.msra.mxu0 0
    %497 = vmatprep.subr.bf16.mxu0 0
    %498 = vmatpush2.bf16.msra.mxu0 0
    %499 = vmatprep.subr.bf16.mxu0 0
    %500 = vmatpush2.bf16.msra.mxu0 0
    %501 = vmatprep.mubr.bf16.mxu0 0
    %502 = vmatmul.mubr.bf16.gmra.mxu0 %v467
    %v503 = vpop.f32.mrf.mxu0
    %v504 = vadd.f32 0.0, %v503
    %v505 = vpop.f32.mrf.mxu0
    %v506 = vpop.f32.mrf.mxu0
    %v507 = vpop.f32.mrf.mxu0
    %508 = vdwg.mxu0
    %v509 = vadd.f32 %v148, %v504
    %510 = vrot.lane.b32.xlu0 %v454, 32
    %v511 = vpop.permute.xlu0 %510
    %v513 = vsel %vm299, %v511, 0
    %515 = vmatprep.subr.bf16.mxu0 0
    %516 = vmatpush1.bf16.msra.mxu0 0
    %517 = vmatprep.subr.bf16.mxu0 0
    %518 = vmatpush1.bf16.msra.mxu0 0
    %519 = vmatprep.subr.bf16.mxu0 0
    %520 = vmatpush1.bf16.msra.mxu0 0
    %521 = vmatprep.subr.bf16.mxu0 0
    %522 = vmatpush1.bf16.msra.mxu0 0
    %523 = vmatprep.subr.bf16.mxu0 0
    %524 = vmatpush1.bf16.msra.mxu0 0
    %525 = vmatprep.subr.bf16.mxu0 0
    %526 = vmatpush1.bf16.msra.mxu0 0
    %527 = vmatprep.subr.bf16.mxu0 0
    %528 = vmatpush1.bf16.msra.mxu0 %v353
    %529 = vmatprep.subr.bf16.mxu0 0
    %530 = vmatpush1.bf16.msra.mxu0 %v352
    %531 = vmatprep.subr.bf16.mxu0 0
    %532 = vmatpush2.bf16.msra.mxu0 0
    %533 = vmatprep.subr.bf16.mxu0 0
    %534 = vmatpush2.bf16.msra.mxu0 0
    %535 = vmatprep.subr.bf16.mxu0 0
    %536 = vmatpush2.bf16.msra.mxu0 0
    %537 = vmatprep.subr.bf16.mxu0 0
    %538 = vmatpush2.bf16.msra.mxu0 0
    %539 = vmatprep.subr.bf16.mxu0 0
    %540 = vmatpush2.bf16.msra.mxu0 0
    %541 = vmatprep.subr.bf16.mxu0 0
    %542 = vmatpush2.bf16.msra.mxu0 0
    %543 = vmatprep.subr.bf16.mxu0 0
    %544 = vmatpush2.bf16.msra.mxu0 0
    %545 = vmatprep.subr.bf16.mxu0 0
    %546 = vmatpush2.bf16.msra.mxu0 0
    %547 = vmatprep.mubr.bf16.mxu0 0
    %548 = vmatmul.mubr.bf16.gmra.mxu0 %v513
    %v549 = vpop.f32.mrf.mxu0
    %v550 = vadd.f32 0.0, %v549
    %v551 = vpop.f32.mrf.mxu0
    %v552 = vpop.f32.mrf.mxu0
    %v553 = vpop.f32.mrf.mxu0
    %554 = vdwg.mxu0
    %v555 = vadd.f32 %v273, %v550
    %v556 = vxor.u32 %v509, 2147483648
    %v557 = vmul.f32 %v556, 1.442695
    %v558 = vpow.pop %v557
    %v559 = vadd.f32 %v558, 1.0
    %v560 = vrcp.pop %v559
    %v561 = vmul.f32 1.0, %v560
    %v562 = vtanh.pop %v509
    %v563 = vmul.f32 %v561, %v414
    %565 = vrot.lane.b32.xlu0 %v562, 64
    %v566 = vpop.permute.xlu0 %565
    %v568 = vmul.f32 %v561, %v566
    %570 = vrot.lane.b32.xlu0 %v568, 32
    %v571 = vpop.permute.xlu0 %570
    %v573 = vadd.f32 %v563, %v571
    %v574 = vtanh.pop %v573
    %576 = vrot.lane.b32.xlu0 %v574, 64
    %v577 = vpop.permute.xlu0 %576
    %v579 = vmul.f32 %v561, %v577
    %v580 = vxor.u32 %v555, 2147483648
    %v581 = vmul.f32 %v580, 1.442695
    %v582 = vpow.pop %v581
    %v583 = vadd.f32 %v582, 1.0
    %v584 = vrcp.pop %v583
    %v585 = vmul.f32 1.0, %v584
    %v586 = vtanh.pop %v555
    %v587 = vmul.f32 %v585, %v438
    %589 = vrot.lane.b32.xlu0 %v586, 64
    %v590 = vpop.permute.xlu0 %589
    %v592 = vmul.f32 %v585, %v590
    %594 = vrot.lane.b32.xlu0 %v592, 32
    %v595 = vpop.permute.xlu0 %594
    %v597 = vadd.f32 %v587, %v595
    %v598 = vtanh.pop %v597
    %600 = vrot.lane.b32.xlu0 %v598, 64
    %v601 = vpop.permute.xlu0 %600
    %v603 = vmul.f32 %v585, %v601
    %v604 = vpack.c.bf16 %v579, %v579
    %v606 = vunpack.c.l.b16 %v604
    %v607 = vpack.c.b16 %v606, %v606
    %608 = vrot.lane.b32.xlu0 %v607, 32
    %v609 = vpop.permute.xlu0 %608
    %s611 = scalar_lea.vmem [#allocation2], 4
    %612 = vst.msk [vmem:[%s611] sm:$0xf] %vm452, %v609
    %v613 = vpack.c.bf16 %v603, %v603
    %v615 = vunpack.c.l.b16 %v613
    %v616 = vpack.c.b16 %v615, %v615
    %617 = vrot.lane.b32.xlu0 %v616, 64
    %v618 = vpop.permute.xlu0 %617
    %s620 = scalar_lea.vmem [#allocation2], 24
    %621 = vst.msk [vmem:[%s620] sm:$0xf] %vm462, %v618
    %622 = vrot.lane.b32.xlu0 %v604, 32
    %v623 = vpop.permute.xlu0 %622
    %v625 = vsel %vm299, %v623, 0
    %627 = vmatprep.subr.bf16.mxu0 0
    %628 = vmatpush1.bf16.msra.mxu0 0
    %629 = vmatprep.subr.bf16.mxu0 0
    %630 = vmatpush1.bf16.msra.mxu0 0
    %631 = vmatprep.subr.bf16.mxu0 0
    %632 = vmatpush1.bf16.msra.mxu0 0
    %633 = vmatprep.subr.bf16.mxu0 0
    %634 = vmatpush1.bf16.msra.mxu0 0
    %635 = vmatprep.subr.bf16.mxu0 0
    %636 = vmatpush1.bf16.msra.mxu0 0
    %637 = vmatprep.subr.bf16.mxu0 0
    %638 = vmatpush1.bf16.msra.mxu0 0
    %639 = vmatprep.subr.bf16.mxu0 0
    %640 = vmatpush1.bf16.msra.mxu0 %v296
    %641 = vmatprep.subr.bf16.mxu0 0
    %642 = vmatpush1.bf16.msra.mxu0 %v295
    %643 = vmatprep.subr.bf16.mxu0 0
    %644 = vmatpush2.bf16.msra.mxu0 0
    %645 = vmatprep.subr.bf16.mxu0 0
    %646 = vmatpush2.bf16.msra.mxu0 0
    %647 = vmatprep.subr.bf16.mxu0 0
    %648 = vmatpush2.bf16.msra.mxu0 0
    %649 = vmatprep.subr.bf16.mxu0 0
    %650 = vmatpush2.bf16.msra.mxu0 0
    %651 = vmatprep.subr.bf16.mxu0 0
    %652 = vmatpush2.bf16.msra.mxu0 0
    %653 = vmatprep.subr.bf16.mxu0 0
    %654 = vmatpush2.bf16.msra.mxu0 0
    %655 = vmatprep.subr.bf16.mxu0 0
    %656 = vmatpush2.bf16.msra.mxu0 0
    %657 = vmatprep.subr.bf16.mxu0 0
    %658 = vmatpush2.bf16.msra.mxu0 0
    %659 = vmatprep.mubr.bf16.mxu0 0
    %660 = vmatmul.mubr.bf16.gmra.mxu0 %v625
    %v661 = vpop.f32.mrf.mxu0
    %v662 = vadd.f32 0.0, %v661
    %v663 = vpop.f32.mrf.mxu0
    %v664 = vpop.f32.mrf.mxu0
    %v665 = vpop.f32.mrf.mxu0
    %666 = vdwg.mxu0
    %v667 = vadd.f32 %v153, %v662
    %668 = vrot.lane.b32.xlu0 %v613, 32
    %v669 = vpop.permute.xlu0 %668
    %v671 = vsel %vm299, %v669, 0
    %673 = vmatprep.subr.bf16.mxu0 0
    %674 = vmatpush1.bf16.msra.mxu0 0
    %675 = vmatprep.subr.bf16.mxu0 0
    %676 = vmatpush1.bf16.msra.mxu0 0
    %677 = vmatprep.subr.bf16.mxu0 0
    %678 = vmatpush1.bf16.msra.mxu0 0
    %679 = vmatprep.subr.bf16.mxu0 0
    %680 = vmatpush1.bf16.msra.mxu0 0
    %681 = vmatprep.subr.bf16.mxu0 0
    %682 = vmatpush1.bf16.msra.mxu0 0
    %683 = vmatprep.subr.bf16.mxu0 0
    %684 = vmatpush1.bf16.msra.mxu0 0
    %685 = vmatprep.subr.bf16.mxu0 0
    %686 = vmatpush1.bf16.msra.mxu0 %v353
    %687 = vmatprep.subr.bf16.mxu0 0
    %688 = vmatpush1.bf16.msra.mxu0 %v352
    %689 = vmatprep.subr.bf16.mxu0 0
    %690 = vmatpush2.bf16.msra.mxu0 0
    %691 = vmatprep.subr.bf16.mxu0 0
    %692 = vmatpush2.bf16.msra.mxu0 0
    %693 = vmatprep.subr.bf16.mxu0 0
    %694 = vmatpush2.bf16.msra.mxu0 0
    %695 = vmatprep.subr.bf16.mxu0 0
    %696 = vmatpush2.bf16.msra.mxu0 0
    %697 = vmatprep.subr.bf16.mxu0 0
    %698 = vmatpush2.bf16.msra.mxu0 0
    %699 = vmatprep.subr.bf16.mxu0 0
    %700 = vmatpush2.bf16.msra.mxu0 0
    %701 = vmatprep.subr.bf16.mxu0 0
    %702 = vmatpush2.bf16.msra.mxu0 0
    %703 = vmatprep.subr.bf16.mxu0 0
    %704 = vmatpush2.bf16.msra.mxu0 0
    %705 = vmatprep.mubr.bf16.mxu0 0
    %706 = vmatmul.mubr.bf16.gmra.mxu0 %v671
    %v707 = vpop.f32.mrf.mxu0
    %v708 = vadd.f32 0.0, %v707
    %v709 = vpop.f32.mrf.mxu0
    %v710 = vpop.f32.mrf.mxu0
    %v711 = vpop.f32.mrf.mxu0
    %712 = vdwg.mxu0
    %v713 = vadd.f32 %v268, %v708
    %v714 = vxor.u32 %v667, 2147483648
    %v715 = vmul.f32 %v714, 1.442695
    %v716 = vpow.pop %v715
    %v717 = vadd.f32 %v716, 1.0
    %v718 = vrcp.pop %v717
    %v719 = vmul.f32 1.0, %v718
    %v720 = vtanh.pop %v667
    %v721 = vmul.f32 %v719, %v573
    %723 = vrot.lane.b32.xlu0 %v720, 64
    %v724 = vpop.permute.xlu0 %723
    %v726 = vmul.f32 %v719, %v724
    %728 = vrot.lane.b32.xlu0 %v726, 32
    %v729 = vpop.permute.xlu0 %728
    %v731 = vadd.f32 %v721, %v729
    %v732 = vtanh.pop %v731
    %734 = vrot.lane.b32.xlu0 %v732, 64
    %v735 = vpop.permute.xlu0 %734
    %v737 = vmul.f32 %v719, %v735
    %v738 = vxor.u32 %v713, 2147483648
    %v739 = vmul.f32 %v738, 1.442695
    %v740 = vpow.pop %v739
    %v741 = vadd.f32 %v740, 1.0
    %v742 = vrcp.pop %v741
    %v743 = vmul.f32 1.0, %v742
    %v744 = vtanh.pop %v713
    %v745 = vmul.f32 %v743, %v597
    %747 = vrot.lane.b32.xlu0 %v744, 64
    %v748 = vpop.permute.xlu0 %747
    %v750 = vmul.f32 %v743, %v748
    %752 = vrot.lane.b32.xlu0 %v750, 32
    %v753 = vpop.permute.xlu0 %752
    %v755 = vadd.f32 %v745, %v753
    %v756 = vtanh.pop %v755
    %758 = vrot.lane.b32.xlu0 %v756, 64
    %v759 = vpop.permute.xlu0 %758
    %v761 = vmul.f32 %v743, %v759
    %v762 = vpack.c.bf16 %v737, %v737
    %v764 = vunpack.c.l.b16 %v762
    %v765 = vpack.c.b16 %v764, %v764
    %766 = vrot.lane.b32.xlu0 %v765, 32
    %v767 = vpop.permute.xlu0 %766
    %s769 = scalar_lea.vmem [#allocation2], 8
    %770 = vst.msk [vmem:[%s769] sm:$0xf] %vm452, %v767
    %v771 = vpack.c.bf16 %v761, %v761
    %v773 = vunpack.c.l.b16 %v771
    %v774 = vpack.c.b16 %v773, %v773
    %775 = vrot.lane.b32.xlu0 %v774, 64
    %v776 = vpop.permute.xlu0 %775
    %s778 = scalar_lea.vmem [#allocation2], 20
    %779 = vst.msk [vmem:[%s778] sm:$0xf] %vm462, %v776
    %780 = vrot.lane.b32.xlu0 %v762, 32
    %v781 = vpop.permute.xlu0 %780
    %v783 = vsel %vm299, %v781, 0
    %785 = vmatprep.subr.bf16.mxu0 0
    %786 = vmatpush1.bf16.msra.mxu0 0
    %787 = vmatprep.subr.bf16.mxu0 0
    %788 = vmatpush1.bf16.msra.mxu0 0
    %789 = vmatprep.subr.bf16.mxu0 0
    %790 = vmatpush1.bf16.msra.mxu0 0
    %791 = vmatprep.subr.bf16.mxu0 0
    %792 = vmatpush1.bf16.msra.mxu0 0
    %793 = vmatprep.subr.bf16.mxu0 0
    %794 = vmatpush1.bf16.msra.mxu0 0
    %795 = vmatprep.subr.bf16.mxu0 0
    %796 = vmatpush1.bf16.msra.mxu0 0
    %797 = vmatprep.subr.bf16.mxu0 0
    %798 = vmatpush1.bf16.msra.mxu0 %v296
    %799 = vmatprep.subr.bf16.mxu0 0
    %800 = vmatpush1.bf16.msra.mxu0 %v295
    %801 = vmatprep.subr.bf16.mxu0 0
    %802 = vmatpush2.bf16.msra.mxu0 0
    %803 = vmatprep.subr.bf16.mxu0 0
    %804 = vmatpush2.bf16.msra.mxu0 0
    %805 = vmatprep.subr.bf16.mxu0 0
    %806 = vmatpush2.bf16.msra.mxu0 0
    %807 = vmatprep.subr.bf16.mxu0 0
    %808 = vmatpush2.bf16.msra.mxu0 0
    %809 = vmatprep.subr.bf16.mxu0 0
    %810 = vmatpush2.bf16.msra.mxu0 0
    %811 = vmatprep.subr.bf16.mxu0 0
    %812 = vmatpush2.bf16.msra.mxu0 0
    %813 = vmatprep.subr.bf16.mxu0 0
    %814 = vmatpush2.bf16.msra.mxu0 0
    %815 = vmatprep.subr.bf16.mxu0 0
    %816 = vmatpush2.bf16.msra.mxu0 0
    %817 = vmatprep.mubr.bf16.mxu0 0
    %818 = vmatmul.mubr.bf16.gmra.mxu0 %v783
    %v819 = vpop.f32.mrf.mxu0
    %v820 = vadd.f32 0.0, %v819
    %v821 = vpop.f32.mrf.mxu0
    %v822 = vpop.f32.mrf.mxu0
    %v823 = vpop.f32.mrf.mxu0
    %824 = vdwg.mxu0
    %v825 = vadd.f32 %v156, %v820
    %826 = vrot.lane.b32.xlu0 %v771, 32
    %v827 = vpop.permute.xlu0 %826
    %v829 = vsel %vm299, %v827, 0
    %831 = vmatprep.subr.bf16.mxu0 0
    %832 = vmatpush1.bf16.msra.mxu0 0
    %833 = vmatprep.subr.bf16.mxu0 0
    %834 = vmatpush1.bf16.msra.mxu0 0
    %835 = vmatprep.subr.bf16.mxu0 0
    %836 = vmatpush1.bf16.msra.mxu0 0
    %837 = vmatprep.subr.bf16.mxu0 0
    %838 = vmatpush1.bf16.msra.mxu0 0
    %839 = vmatprep.subr.bf16.mxu0 0
    %840 = vmatpush1.bf16.msra.mxu0 0
    %841 = vmatprep.subr.bf16.mxu0 0
    %842 = vmatpush1.bf16.msra.mxu0 0
    %843 = vmatprep.subr.bf16.mxu0 0
    %844 = vmatpush1.bf16.msra.mxu0 %v353
    %845 = vmatprep.subr.bf16.mxu0 0
    %846 = vmatpush1.bf16.msra.mxu0 %v352
    %847 = vmatprep.subr.bf16.mxu0 0
    %848 = vmatpush2.bf16.msra.mxu0 0
    %849 = vmatprep.subr.bf16.mxu0 0
    %850 = vmatpush2.bf16.msra.mxu0 0
    %851 = vmatprep.subr.bf16.mxu0 0
    %852 = vmatpush2.bf16.msra.mxu0 0
    %853 = vmatprep.subr.bf16.mxu0 0
    %854 = vmatpush2.bf16.msra.mxu0 0
    %855 = vmatprep.subr.bf16.mxu0 0
    %856 = vmatpush2.bf16.msra.mxu0 0
    %857 = vmatprep.subr.bf16.mxu0 0
    %858 = vmatpush2.bf16.msra.mxu0 0
    %859 = vmatprep.subr.bf16.mxu0 0
    %860 = vmatpush2.bf16.msra.mxu0 0
    %861 = vmatprep.subr.bf16.mxu0 0
    %862 = vmatpush2.bf16.msra.mxu0 0
    %863 = vmatprep.mubr.bf16.mxu0 0
    %864 = vmatmul.mubr.bf16.gmra.mxu0 %v829
    %v865 = vpop.f32.mrf.mxu0
    %v866 = vadd.f32 0.0, %v865
    %v867 = vpop.f32.mrf.mxu0
    %v868 = vpop.f32.mrf.mxu0
    %v869 = vpop.f32.mrf.mxu0
    %870 = vdwg.mxu0
    %v871 = vadd.f32 %v265, %v866
    %v872 = vxor.u32 %v825, 2147483648
    %v873 = vmul.f32 %v872, 1.442695
    %v874 = vpow.pop %v873
    %v875 = vadd.f32 %v874, 1.0
    %v876 = vrcp.pop %v875
    %v877 = vmul.f32 1.0, %v876
    %v878 = vtanh.pop %v825
    %v879 = vmul.f32 %v877, %v731
    %881 = vrot.lane.b32.xlu0 %v878, 64
    %v882 = vpop.permute.xlu0 %881
    %v884 = vmul.f32 %v877, %v882
    %886 = vrot.lane.b32.xlu0 %v884, 32
    %v887 = vpop.permute.xlu0 %886
    %v889 = vadd.f32 %v879, %v887
    %v890 = vtanh.pop %v889
    %892 = vrot.lane.b32.xlu0 %v890, 64
    %v893 = vpop.permute.xlu0 %892
    %v895 = vmul.f32 %v877, %v893
    %v896 = vxor.u32 %v871, 2147483648
    %v897 = vmul.f32 %v896, 1.442695
    %v898 = vpow.pop %v897
    %v899 = vadd.f32 %v898, 1.0
    %v900 = vrcp.pop %v899
    %v901 = vmul.f32 1.0, %v900
    %v902 = vtanh.pop %v871
    %v903 = vmul.f32 %v901, %v755
    %905 = vrot.lane.b32.xlu0 %v902, 64
    %v906 = vpop.permute.xlu0 %905
    %v908 = vmul.f32 %v901, %v906
    %910 = vrot.lane.b32.xlu0 %v908, 32
    %v911 = vpop.permute.xlu0 %910
    %v913 = vadd.f32 %v903, %v911
    %v914 = vtanh.pop %v913
    %916 = vrot.lane.b32.xlu0 %v914, 64
    %v917 = vpop.permute.xlu0 %916
    %v919 = vmul.f32 %v901, %v917
    %v920 = vpack.c.bf16 %v895, %v895
    %v922 = vunpack.c.l.b16 %v920
    %v923 = vpack.c.b16 %v922, %v922
    %924 = vrot.lane.b32.xlu0 %v923, 32
    %v925 = vpop.permute.xlu0 %924
    %s927 = scalar_lea.vmem [#allocation2], 12
    %928 = vst.msk [vmem:[%s927] sm:$0xf] %vm452, %v925
    %v929 = vpack.c.bf16 %v919, %v919
    %v931 = vunpack.c.l.b16 %v929
    %v932 = vpack.c.b16 %v931, %v931
    %933 = vrot.lane.b32.xlu0 %v932, 64
    %v934 = vpop.permute.xlu0 %933
    %s936 = scalar_lea.vmem [#allocation2], 16
    %937 = vst.msk [vmem:[%s936] sm:$0xf] %vm462, %v934
    %938 = vrot.lane.b32.xlu0 %v920, 32
    %v939 = vpop.permute.xlu0 %938
    %v941 = vsel %vm299, %v939, 0
    %943 = vmatprep.subr.bf16.mxu0 0
    %944 = vmatpush1.bf16.msra.mxu0 0
    %945 = vmatprep.subr.bf16.mxu0 0
    %946 = vmatpush1.bf16.msra.mxu0 0
    %947 = vmatprep.subr.bf16.mxu0 0
    %948 = vmatpush1.bf16.msra.mxu0 0
    %949 = vmatprep.subr.bf16.mxu0 0
    %950 = vmatpush1.bf16.msra.mxu0 0
    %951 = vmatprep.subr.bf16.mxu0 0
    %952 = vmatpush1.bf16.msra.mxu0 0
    %953 = vmatprep.subr.bf16.mxu0 0
    %954 = vmatpush1.bf16.msra.mxu0 0
    %955 = vmatprep.subr.bf16.mxu0 0
    %956 = vmatpush1.bf16.msra.mxu0 %v296
    %957 = vmatprep.subr.bf16.mxu0 0
    %958 = vmatpush1.bf16.msra.mxu0 %v295
    %959 = vmatprep.subr.bf16.mxu0 0
    %960 = vmatpush2.bf16.msra.mxu0 0
    %961 = vmatprep.subr.bf16.mxu0 0
    %962 = vmatpush2.bf16.msra.mxu0 0
    %963 = vmatprep.subr.bf16.mxu0 0
    %964 = vmatpush2.bf16.msra.mxu0 0
    %965 = vmatprep.subr.bf16.mxu0 0
    %966 = vmatpush2.bf16.msra.mxu0 0
    %967 = vmatprep.subr.bf16.mxu0 0
    %968 = vmatpush2.bf16.msra.mxu0 0
    %969 = vmatprep.subr.bf16.mxu0 0
    %970 = vmatpush2.bf16.msra.mxu0 0
    %971 = vmatprep.subr.bf16.mxu0 0
    %972 = vmatpush2.bf16.msra.mxu0 0
    %973 = vmatprep.subr.bf16.mxu0 0
    %974 = vmatpush2.bf16.msra.mxu0 0
    %975 = vmatprep.mubr.bf16.mxu0 0
    %976 = vmatmul.mubr.bf16.gmra.mxu0 %v941
    %v977 = vpop.f32.mrf.mxu0
    %v978 = vadd.f32 0.0, %v977
    %v979 = vpop.f32.mrf.mxu0
    %v980 = vpop.f32.mrf.mxu0
    %v981 = vpop.f32.mrf.mxu0
    %982 = vdwg.mxu0
    %v983 = vadd.f32 %v161, %v978
    %984 = vrot.lane.b32.xlu0 %v929, 32
    %v985 = vpop.permute.xlu0 %984
    %v987 = vsel %vm299, %v985, 0
    %989 = vmatprep.subr.bf16.mxu0 0
    %990 = vmatpush1.bf16.msra.mxu0 0
    %991 = vmatprep.subr.bf16.mxu0 0
    %992 = vmatpush1.bf16.msra.mxu0 0
    %993 = vmatprep.subr.bf16.mxu0 0
    %994 = vmatpush1.bf16.msra.mxu0 0
    %995 = vmatprep.subr.bf16.mxu0 0
    %996 = vmatpush1.bf16.msra.mxu0 0
    %997 = vmatprep.subr.bf16.mxu0 0
    %998 = vmatpush1.bf16.msra.mxu0 0
    %999 = vmatprep.subr.bf16.mxu0 0
    %1000 = vmatpush1.bf16.msra.mxu0 0
    %1001 = vmatprep.subr.bf16.mxu0 0
    %1002 = vmatpush1.bf16.msra.mxu0 %v353
    %1003 = vmatprep.subr.bf16.mxu0 0
    %1004 = vmatpush1.bf16.msra.mxu0 %v352
    %1005 = vmatprep.subr.bf16.mxu0 0
    %1006 = vmatpush2.bf16.msra.mxu0 0
    %1007 = vmatprep.subr.bf16.mxu0 0
    %1008 = vmatpush2.bf16.msra.mxu0 0
    %1009 = vmatprep.subr.bf16.mxu0 0
    %1010 = vmatpush2.bf16.msra.mxu0 0
    %1011 = vmatprep.subr.bf16.mxu0 0
    %1012 = vmatpush2.bf16.msra.mxu0 0
    %1013 = vmatprep.subr.bf16.mxu0 0
    %1014 = vmatpush2.bf16.msra.mxu0 0
    %1015 = vmatprep.subr.bf16.mxu0 0
    %1016 = vmatpush2.bf16.msra.mxu0 0
    %1017 = vmatprep.subr.bf16.mxu0 0
    %1018 = vmatpush2.bf16.msra.mxu0 0
    %1019 = vmatprep.subr.bf16.mxu0 0
    %1020 = vmatpush2.bf16.msra.mxu0 0
    %1021 = vmatprep.mubr.bf16.mxu0 0
    %1022 = vmatmul.mubr.bf16.gmra.mxu0 %v987
    %v1023 = vpop.f32.mrf.mxu0
    %v1024 = vadd.f32 0.0, %v1023
    %v1025 = vpop.f32.mrf.mxu0
    %v1026 = vpop.f32.mrf.mxu0
    %v1027 = vpop.f32.mrf.mxu0
    %1028 = vdwg.mxu0
    %v1029 = vadd.f32 %v260, %v1024
    %v1030 = vxor.u32 %v983, 2147483648
    %v1031 = vmul.f32 %v1030, 1.442695
    %v1032 = vpow.pop %v1031
    %v1033 = vadd.f32 %v1032, 1.0
    %v1034 = vrcp.pop %v1033
    %v1035 = vmul.f32 1.0, %v1034
    %v1036 = vtanh.pop %v983
    %v1037 = vmul.f32 %v1035, %v889
    %1039 = vrot.lane.b32.xlu0 %v1036, 64
    %v1040 = vpop.permute.xlu0 %1039
    %v1042 = vmul.f32 %v1035, %v1040
    %1044 = vrot.lane.b32.xlu0 %v1042, 32
    %v1045 = vpop.permute.xlu0 %1044
    %v1047 = vadd.f32 %v1037, %v1045
    %v1048 = vtanh.pop %v1047
    %1050 = vrot.lane.b32.xlu0 %v1048, 64
    %v1051 = vpop.permute.xlu0 %1050
    %v1053 = vmul.f32 %v1035, %v1051
    %v1054 = vxor.u32 %v1029, 2147483648
    %v1055 = vmul.f32 %v1054, 1.442695
    %v1056 = vpow.pop %v1055
    %v1057 = vadd.f32 %v1056, 1.0
    %v1058 = vrcp.pop %v1057
    %v1059 = vmul.f32 1.0, %v1058
    %v1060 = vtanh.pop %v1029
    %v1061 = vmul.f32 %v1059, %v913
    %1063 = vrot.lane.b32.xlu0 %v1060, 64
    %v1064 = vpop.permute.xlu0 %1063
    %v1066 = vmul.f32 %v1059, %v1064
    %1068 = vrot.lane.b32.xlu0 %v1066, 32
    %v1069 = vpop.permute.xlu0 %1068
    %v1071 = vadd.f32 %v1061, %v1069
    %v1072 = vtanh.pop %v1071
    %1074 = vrot.lane.b32.xlu0 %v1072, 64
    %v1075 = vpop.permute.xlu0 %1074
    %v1077 = vmul.f32 %v1059, %v1075
    %v1078 = vpack.c.bf16 %v1053, %v1053
    %v1080 = vunpack.c.l.b16 %v1078
    %v1081 = vpack.c.b16 %v1080, %v1080
    %1082 = vrot.lane.b32.xlu0 %v1081, 32
    %v1083 = vpop.permute.xlu0 %1082
    %1085 = vst.msk [vmem:[%s936] sm:$0xf] %vm452, %v1083
    %v1086 = vpack.c.bf16 %v1077, %v1077
    %v1088 = vunpack.c.l.b16 %v1086
    %v1089 = vpack.c.b16 %v1088, %v1088
    %1090 = vrot.lane.b32.xlu0 %v1089, 64
    %v1091 = vpop.permute.xlu0 %1090
    %1093 = vst.msk [vmem:[%s927] sm:$0xf] %vm462, %v1091
    %1094 = vrot.lane.b32.xlu0 %v1078, 32
    %v1095 = vpop.permute.xlu0 %1094
    %v1097 = vsel %vm299, %v1095, 0
    %1099 = vmatprep.subr.bf16.mxu0 0
    %1100 = vmatpush1.bf16.msra.mxu0 0
    %1101 = vmatprep.subr.bf16.mxu0 0
    %1102 = vmatpush1.bf16.msra.mxu0 0
    %1103 = vmatprep.subr.bf16.mxu0 0
    %1104 = vmatpush1.bf16.msra.mxu0 0
    %1105 = vmatprep.subr.bf16.mxu0 0
    %1106 = vmatpush1.bf16.msra.mxu0 0
    %1107 = vmatprep.subr.bf16.mxu0 0
    %1108 = vmatpush1.bf16.msra.mxu0 0
    %1109 = vmatprep.subr.bf16.mxu0 0
    %1110 = vmatpush1.bf16.msra.mxu0 0
    %1111 = vmatprep.subr.bf16.mxu0 0
    %1112 = vmatpush1.bf16.msra.mxu0 %v296
    %1113 = vmatprep.subr.bf16.mxu0 0
    %1114 = vmatpush1.bf16.msra.mxu0 %v295
    %1115 = vmatprep.subr.bf16.mxu0 0
    %1116 = vmatpush2.bf16.msra.mxu0 0
    %1117 = vmatprep.subr.bf16.mxu0 0
    %1118 = vmatpush2.bf16.msra.mxu0 0
    %1119 = vmatprep.subr.bf16.mxu0 0
    %1120 = vmatpush2.bf16.msra.mxu0 0
    %1121 = vmatprep.subr.bf16.mxu0 0
    %1122 = vmatpush2.bf16.msra.mxu0 0
    %1123 = vmatprep.subr.bf16.mxu0 0
    %1124 = vmatpush2.bf16.msra.mxu0 0
    %1125 = vmatprep.subr.bf16.mxu0 0
    %1126 = vmatpush2.bf16.msra.mxu0 0
    %1127 = vmatprep.subr.bf16.mxu0 0
    %1128 = vmatpush2.bf16.msra.mxu0 0
    %1129 = vmatprep.subr.bf16.mxu0 0
    %1130 = vmatpush2.bf16.msra.mxu0 0
    %1131 = vmatprep.mubr.bf16.mxu0 0
    %1132 = vmatmul.mubr.bf16.gmra.mxu0 %v1097
    %v1133 = vpop.f32.mrf.mxu0
    %v1134 = vadd.f32 0.0, %v1133
    %v1135 = vpop.f32.mrf.mxu0
    %v1136 = vpop.f32.mrf.mxu0
    %v1137 = vpop.f32.mrf.mxu0
    %1138 = vdwg.mxu0
    %v1139 = vadd.f32 %v164, %v1134
    %1140 = vrot.lane.b32.xlu0 %v1086, 32
    %v1141 = vpop.permute.xlu0 %1140
    %v1143 = vsel %vm299, %v1141, 0
    %1145 = vmatprep.subr.bf16.mxu0 0
    %1146 = vmatpush1.bf16.msra.mxu0 0
    %1147 = vmatprep.subr.bf16.mxu0 0
    %1148 = vmatpush1.bf16.msra.mxu0 0
    %1149 = vmatprep.subr.bf16.mxu0 0
    %1150 = vmatpush1.bf16.msra.mxu0 0
    %1151 = vmatprep.subr.bf16.mxu0 0
    %1152 = vmatpush1.bf16.msra.mxu0 0
    %1153 = vmatprep.subr.bf16.mxu0 0
    %1154 = vmatpush1.bf16.msra.mxu0 0
    %1155 = vmatprep.subr.bf16.mxu0 0
    %1156 = vmatpush1.bf16.msra.mxu0 0
    %1157 = vmatprep.subr.bf16.mxu0 0
    %1158 = vmatpush1.bf16.msra.mxu0 %v353
    %1159 = vmatprep.subr.bf16.mxu0 0
    %1160 = vmatpush1.bf16.msra.mxu0 %v352
    %1161 = vmatprep.subr.bf16.mxu0 0
    %1162 = vmatpush2.bf16.msra.mxu0 0
    %1163 = vmatprep.subr.bf16.mxu0 0
    %1164 = vmatpush2.bf16.msra.mxu0 0
    %1165 = vmatprep.subr.bf16.mxu0 0
    %1166 = vmatpush2.bf16.msra.mxu0 0
    %1167 = vmatprep.subr.bf16.mxu0 0
    %1168 = vmatpush2.bf16.msra.mxu0 0
    %1169 = vmatprep.subr.bf16.mxu0 0
    %1170 = vmatpush2.bf16.msra.mxu0 0
    %1171 = vmatprep.subr.bf16.mxu0 0
    %1172 = vmatpush2.bf16.msra.mxu0 0
    %1173 = vmatprep.subr.bf16.mxu0 0
    %1174 = vmatpush2.bf16.msra.mxu0 0
    %1175 = vmatprep.subr.bf16.mxu0 0
    %1176 = vmatpush2.bf16.msra.mxu0 0
    %1177 = vmatprep.mubr.bf16.mxu0 0
    %1178 = vmatmul.mubr.bf16.gmra.mxu0 %v1143
    %v1179 = vpop.f32.mrf.mxu0
    %v1180 = vadd.f32 0.0, %v1179
    %v1181 = vpop.f32.mrf.mxu0
    %v1182 = vpop.f32.mrf.mxu0
    %v1183 = vpop.f32.mrf.mxu0
    %1184 = vdwg.mxu0
    %v1185 = vadd.f32 %v257, %v1180
    %v1186 = vxor.u32 %v1139, 2147483648
    %v1187 = vmul.f32 %v1186, 1.442695
    %v1188 = vpow.pop %v1187
    %v1189 = vadd.f32 %v1188, 1.0
    %v1190 = vrcp.pop %v1189
    %v1191 = vmul.f32 1.0, %v1190
    %v1192 = vtanh.pop %v1139
    %v1193 = vmul.f32 %v1191, %v1047
    %1195 = vrot.lane.b32.xlu0 %v1192, 64
    %v1196 = vpop.permute.xlu0 %1195
    %v1198 = vmul.f32 %v1191, %v1196
    %1200 = vrot.lane.b32.xlu0 %v1198, 32
    %v1201 = vpop.permute.xlu0 %1200
    %v1203 = vadd.f32 %v1193, %v1201
    %v1204 = vtanh.pop %v1203
    %1206 = vrot.lane.b32.xlu0 %v1204, 64
    %v1207 = vpop.permute.xlu0 %1206
    %v1209 = vmul.f32 %v1191, %v1207
    %v1210 = vxor.u32 %v1185, 2147483648
    %v1211 = vmul.f32 %v1210, 1.442695
    %v1212 = vpow.pop %v1211
    %v1213 = vadd.f32 %v1212, 1.0
    %v1214 = vrcp.pop %v1213
    %v1215 = vmul.f32 1.0, %v1214
    %v1216 = vtanh.pop %v1185
    %v1217 = vmul.f32 %v1215, %v1071
    %1219 = vrot.lane.b32.xlu0 %v1216, 64
    %v1220 = vpop.permute.xlu0 %1219
    %v1222 = vmul.f32 %v1215, %v1220
    %1224 = vrot.lane.b32.xlu0 %v1222, 32
    %v1225 = vpop.permute.xlu0 %1224
    %v1227 = vadd.f32 %v1217, %v1225
    %v1228 = vtanh.pop %v1227
    %1230 = vrot.lane.b32.xlu0 %v1228, 64
    %v1231 = vpop.permute.xlu0 %1230
    %v1233 = vmul.f32 %v1215, %v1231
    %v1234 = vpack.c.bf16 %v1209, %v1209
    %v1236 = vunpack.c.l.b16 %v1234
    %v1237 = vpack.c.b16 %v1236, %v1236
    %1238 = vrot.lane.b32.xlu0 %v1237, 32
    %v1239 = vpop.permute.xlu0 %1238
    %1241 = vst.msk [vmem:[%s778] sm:$0xf] %vm452, %v1239
    %v1242 = vpack.c.bf16 %v1233, %v1233
    %v1244 = vunpack.c.l.b16 %v1242
    %v1245 = vpack.c.b16 %v1244, %v1244
    %1246 = vrot.lane.b32.xlu0 %v1245, 64
    %v1247 = vpop.permute.xlu0 %1246
    %1249 = vst.msk [vmem:[%s769] sm:$0xf] %vm462, %v1247
    %1250 = vrot.lane.b32.xlu0 %v1234, 32
    %v1251 = vpop.permute.xlu0 %1250
    %v1253 = vsel %vm299, %v1251, 0
    %1255 = vmatprep.subr.bf16.mxu0 0
    %1256 = vmatpush1.bf16.msra.mxu0 0
    %1257 = vmatprep.subr.bf16.mxu0 0
    %1258 = vmatpush1.bf16.msra.mxu0 0
    %1259 = vmatprep.subr.bf16.mxu0 0
    %1260 = vmatpush1.bf16.msra.mxu0 0
    %1261 = vmatprep.subr.bf16.mxu0 0
    %1262 = vmatpush1.bf16.msra.mxu0 0
    %1263 = vmatprep.subr.bf16.mxu0 0
    %1264 = vmatpush1.bf16.msra.mxu0 0
    %1265 = vmatprep.subr.bf16.mxu0 0
    %1266 = vmatpush1.bf16.msra.mxu0 0
    %1267 = vmatprep.subr.bf16.mxu0 0
    %1268 = vmatpush1.bf16.msra.mxu0 %v296
    %1269 = vmatprep.subr.bf16.mxu0 0
    %1270 = vmatpush1.bf16.msra.mxu0 %v295
    %1271 = vmatprep.subr.bf16.mxu0 0
    %1272 = vmatpush2.bf16.msra.mxu0 0
    %1273 = vmatprep.subr.bf16.mxu0 0
    %1274 = vmatpush2.bf16.msra.mxu0 0
    %1275 = vmatprep.subr.bf16.mxu0 0
    %1276 = vmatpush2.bf16.msra.mxu0 0
    %1277 = vmatprep.subr.bf16.mxu0 0
    %1278 = vmatpush2.bf16.msra.mxu0 0
    %1279 = vmatprep.subr.bf16.mxu0 0
    %1280 = vmatpush2.bf16.msra.mxu0 0
    %1281 = vmatprep.subr.bf16.mxu0 0
    %1282 = vmatpush2.bf16.msra.mxu0 0
    %1283 = vmatprep.subr.bf16.mxu0 0
    %1284 = vmatpush2.bf16.msra.mxu0 0
    %1285 = vmatprep.subr.bf16.mxu0 0
    %1286 = vmatpush2.bf16.msra.mxu0 0
    %1287 = vmatprep.mubr.bf16.mxu0 0
    %1288 = vmatmul.mubr.bf16.gmra.mxu0 %v1253
    %v1289 = vpop.f32.mrf.mxu0
    %v1290 = vadd.f32 0.0, %v1289
    %v1291 = vpop.f32.mrf.mxu0
    %v1292 = vpop.f32.mrf.mxu0
    %v1293 = vpop.f32.mrf.mxu0
    %1294 = vdwg.mxu0
    %v1295 = vadd.f32 %v169, %v1290
    %1296 = vrot.lane.b32.xlu0 %v1242, 32
    %v1297 = vpop.permute.xlu0 %1296
    %v1299 = vsel %vm299, %v1297, 0
    %1301 = vmatprep.subr.bf16.mxu0 0
    %1302 = vmatpush1.bf16.msra.mxu0 0
    %1303 = vmatprep.subr.bf16.mxu0 0
    %1304 = vmatpush1.bf16.msra.mxu0 0
    %1305 = vmatprep.subr.bf16.mxu0 0
    %1306 = vmatpush1.bf16.msra.mxu0 0
    %1307 = vmatprep.subr.bf16.mxu0 0
    %1308 = vmatpush1.bf16.msra.mxu0 0
    %1309 = vmatprep.subr.bf16.mxu0 0
    %1310 = vmatpush1.bf16.msra.mxu0 0
    %1311 = vmatprep.subr.bf16.mxu0 0
    %1312 = vmatpush1.bf16.msra.mxu0 0
    %1313 = vmatprep.subr.bf16.mxu0 0
    %1314 = vmatpush1.bf16.msra.mxu0 %v353
    %1315 = vmatprep.subr.bf16.mxu0 0
    %1316 = vmatpush1.bf16.msra.mxu0 %v352
    %1317 = vmatprep.subr.bf16.mxu0 0
    %1318 = vmatpush2.bf16.msra.mxu0 0
    %1319 = vmatprep.subr.bf16.mxu0 0
    %1320 = vmatpush2.bf16.msra.mxu0 0
    %1321 = vmatprep.subr.bf16.mxu0 0
    %1322 = vmatpush2.bf16.msra.mxu0 0
    %1323 = vmatprep.subr.bf16.mxu0 0
    %1324 = vmatpush2.bf16.msra.mxu0 0
    %1325 = vmatprep.subr.bf16.mxu0 0
    %1326 = vmatpush2.bf16.msra.mxu0 0
    %1327 = vmatprep.subr.bf16.mxu0 0
    %1328 = vmatpush2.bf16.msra.mxu0 0
    %1329 = vmatprep.subr.bf16.mxu0 0
    %1330 = vmatpush2.bf16.msra.mxu0 0
    %1331 = vmatprep.subr.bf16.mxu0 0
    %1332 = vmatpush2.bf16.msra.mxu0 0
    %1333 = vmatprep.mubr.bf16.mxu0 0
    %1334 = vmatmul.mubr.bf16.gmra.mxu0 %v1299
    %v1335 = vpop.f32.mrf.mxu0
    %v1336 = vadd.f32 0.0, %v1335
    %v1337 = vpop.f32.mrf.mxu0
    %v1338 = vpop.f32.mrf.mxu0
    %v1339 = vpop.f32.mrf.mxu0
    %1340 = vdwg.mxu0
    %v1341 = vadd.f32 %v252, %v1336
    %v1342 = vxor.u32 %v1295, 2147483648
    %v1343 = vmul.f32 %v1342, 1.442695
    %v1344 = vpow.pop %v1343
    %v1345 = vadd.f32 %v1344, 1.0
    %v1346 = vrcp.pop %v1345
    %v1347 = vmul.f32 1.0, %v1346
    %v1348 = vtanh.pop %v1295
    %v1349 = vmul.f32 %v1347, %v1203
    %1351 = vrot.lane.b32.xlu0 %v1348, 64
    %v1352 = vpop.permute.xlu0 %1351
    %v1354 = vmul.f32 %v1347, %v1352
    %1356 = vrot.lane.b32.xlu0 %v1354, 32
    %v1357 = vpop.permute.xlu0 %1356
    %v1359 = vadd.f32 %v1349, %v1357
    %v1360 = vtanh.pop %v1359
    %1362 = vrot.lane.b32.xlu0 %v1360, 64
    %v1363 = vpop.permute.xlu0 %1362
    %v1365 = vmul.f32 %v1347, %v1363
    %v1366 = vxor.u32 %v1341, 2147483648
    %v1367 = vmul.f32 %v1366, 1.442695
    %v1368 = vpow.pop %v1367
    %v1369 = vadd.f32 %v1368, 1.0
    %v1370 = vrcp.pop %v1369
    %v1371 = vmul.f32 1.0, %v1370
    %v1372 = vtanh.pop %v1341
    %v1373 = vmul.f32 %v1371, %v1227
    %1375 = vrot.lane.b32.xlu0 %v1372, 64
    %v1376 = vpop.permute.xlu0 %1375
    %v1378 = vmul.f32 %v1371, %v1376
    %1380 = vrot.lane.b32.xlu0 %v1378, 32
    %v1381 = vpop.permute.xlu0 %1380
    %v1383 = vadd.f32 %v1373, %v1381
    %v1384 = vtanh.pop %v1383
    %1386 = vrot.lane.b32.xlu0 %v1384, 64
    %v1387 = vpop.permute.xlu0 %1386
    %v1389 = vmul.f32 %v1371, %v1387
    %v1390 = vpack.c.bf16 %v1365, %v1365
    %v1392 = vunpack.c.l.b16 %v1390
    %v1393 = vpack.c.b16 %v1392, %v1392
    %1394 = vrot.lane.b32.xlu0 %v1393, 32
    %v1395 = vpop.permute.xlu0 %1394
    %1397 = vst.msk [vmem:[%s620] sm:$0xf] %vm452, %v1395
    %v1398 = vpack.c.bf16 %v1389, %v1389
    %v1400 = vunpack.c.l.b16 %v1398
    %v1401 = vpack.c.b16 %v1400, %v1400
    %1402 = vrot.lane.b32.xlu0 %v1401, 64
    %v1403 = vpop.permute.xlu0 %1402
    %1405 = vst.msk [vmem:[%s611] sm:$0xf] %vm462, %v1403
    %1406 = vrot.lane.b32.xlu0 %v1390, 32
    %v1407 = vpop.permute.xlu0 %1406
    %v1409 = vsel %vm299, %v1407, 0
    %1411 = vmatprep.subr.bf16.mxu0 0
    %1412 = vmatpush1.bf16.msra.mxu0 0
    %1413 = vmatprep.subr.bf16.mxu0 0
    %1414 = vmatpush1.bf16.msra.mxu0 0
    %1415 = vmatprep.subr.bf16.mxu0 0
    %1416 = vmatpush1.bf16.msra.mxu0 0
    %1417 = vmatprep.subr.bf16.mxu0 0
    %1418 = vmatpush1.bf16.msra.mxu0 0
    %1419 = vmatprep.subr.bf16.mxu0 0
    %1420 = vmatpush1.bf16.msra.mxu0 0
    %1421 = vmatprep.subr.bf16.mxu0 0
    %1422 = vmatpush1.bf16.msra.mxu0 0
    %1423 = vmatprep.subr.bf16.mxu0 0
    %1424 = vmatpush1.bf16.msra.mxu0 %v296
    %1425 = vmatprep.subr.bf16.mxu0 0
    %1426 = vmatpush1.bf16.msra.mxu0 %v295
    %1427 = vmatprep.subr.bf16.mxu0 0
    %1428 = vmatpush2.bf16.msra.mxu0 0
    %1429 = vmatprep.subr.bf16.mxu0 0
    %1430 = vmatpush2.bf16.msra.mxu0 0
    %1431 = vmatprep.subr.bf16.mxu0 0
    %1432 = vmatpush2.bf16.msra.mxu0 0
    %1433 = vmatprep.subr.bf16.mxu0 0
    %1434 = vmatpush2.bf16.msra.mxu0 0
    %1435 = vmatprep.subr.bf16.mxu0 0
    %1436 = vmatpush2.bf16.msra.mxu0 0
    %1437 = vmatprep.subr.bf16.mxu0 0
    %1438 = vmatpush2.bf16.msra.mxu0 0
    %1439 = vmatprep.subr.bf16.mxu0 0
    %1440 = vmatpush2.bf16.msra.mxu0 0
    %1441 = vmatprep.subr.bf16.mxu0 0
    %1442 = vmatpush2.bf16.msra.mxu0 0
    %1443 = vmatprep.mubr.bf16.mxu0 0
    %1444 = vmatmul.mubr.bf16.gmra.mxu0 %v1409
    %v1445 = vpop.f32.mrf.mxu0
    %v1446 = vadd.f32 0.0, %v1445
    %v1447 = vpop.f32.mrf.mxu0
    %v1448 = vpop.f32.mrf.mxu0
    %v1449 = vpop.f32.mrf.mxu0
    %1450 = vdwg.mxu0
    %v1451 = vadd.f32 %v172, %v1446
    %1452 = vrot.lane.b32.xlu0 %v1398, 32
    %v1453 = vpop.permute.xlu0 %1452
    %v1455 = vsel %vm299, %v1453, 0
    %1457 = vmatprep.subr.bf16.mxu0 0
    %1458 = vmatpush1.bf16.msra.mxu0 0
    %1459 = vmatprep.subr.bf16.mxu0 0
    %1460 = vmatpush1.bf16.msra.mxu0 0
    %1461 = vmatprep.subr.bf16.mxu0 0
    %1462 = vmatpush1.bf16.msra.mxu0 0
    %1463 = vmatprep.subr.bf16.mxu0 0
    %1464 = vmatpush1.bf16.msra.mxu0 0
    %1465 = vmatprep.subr.bf16.mxu0 0
    %1466 = vmatpush1.bf16.msra.mxu0 0
    %1467 = vmatprep.subr.bf16.mxu0 0
    %1468 = vmatpush1.bf16.msra.mxu0 0
    %1469 = vmatprep.subr.bf16.mxu0 0
    %1470 = vmatpush1.bf16.msra.mxu0 %v353
    %1471 = vmatprep.subr.bf16.mxu0 0
    %1472 = vmatpush1.bf16.msra.mxu0 %v352
    %1473 = vmatprep.subr.bf16.mxu0 0
    %1474 = vmatpush2.bf16.msra.mxu0 0
    %1475 = vmatprep.subr.bf16.mxu0 0
    %1476 = vmatpush2.bf16.msra.mxu0 0
    %1477 = vmatprep.subr.bf16.mxu0 0
    %1478 = vmatpush2.bf16.msra.mxu0 0
    %1479 = vmatprep.subr.bf16.mxu0 0
    %1480 = vmatpush2.bf16.msra.mxu0 0
    %1481 = vmatprep.subr.bf16.mxu0 0
    %1482 = vmatpush2.bf16.msra.mxu0 0
    %1483 = vmatprep.subr.bf16.mxu0 0
    %1484 = vmatpush2.bf16.msra.mxu0 0
    %1485 = vmatprep.subr.bf16.mxu0 0
    %1486 = vmatpush2.bf16.msra.mxu0 0
    %1487 = vmatprep.subr.bf16.mxu0 0
    %1488 = vmatpush2.bf16.msra.mxu0 0
    %1489 = vmatprep.mubr.bf16.mxu0 0
    %1490 = vmatmul.mubr.bf16.gmra.mxu0 %v1455
    %v1491 = vpop.f32.mrf.mxu0
    %v1492 = vadd.f32 0.0, %v1491
    %v1493 = vpop.f32.mrf.mxu0
    %v1494 = vpop.f32.mrf.mxu0
    %v1495 = vpop.f32.mrf.mxu0
    %1496 = vdwg.mxu0
    %v1497 = vadd.f32 %v249, %v1492
    %v1498 = vxor.u32 %v1451, 2147483648
    %v1499 = vmul.f32 %v1498, 1.442695
    %v1500 = vpow.pop %v1499
    %v1501 = vadd.f32 %v1500, 1.0
    %v1502 = vrcp.pop %v1501
    %v1503 = vmul.f32 1.0, %v1502
    %v1504 = vtanh.pop %v1451
    %v1505 = vmul.f32 %v1503, %v1359
    %1507 = vrot.lane.b32.xlu0 %v1504, 64
    %v1508 = vpop.permute.xlu0 %1507
    %v1510 = vmul.f32 %v1503, %v1508
    %1512 = vrot.lane.b32.xlu0 %v1510, 32
    %v1513 = vpop.permute.xlu0 %1512
    %v1515 = vadd.f32 %v1505, %v1513
    %v1516 = vtanh.pop %v1515
    %1518 = vrot.lane.b32.xlu0 %v1516, 64
    %v1519 = vpop.permute.xlu0 %1518
    %v1521 = vmul.f32 %v1503, %v1519
    %v1522 = vxor.u32 %v1497, 2147483648
    %v1523 = vmul.f32 %v1522, 1.442695
    %v1524 = vpow.pop %v1523
    %v1525 = vadd.f32 %v1524, 1.0
    %v1526 = vrcp.pop %v1525
    %v1527 = vmul.f32 1.0, %v1526
    %v1528 = vtanh.pop %v1497
    %v1529 = vmul.f32 %v1527, %v1383
    %1531 = vrot.lane.b32.xlu0 %v1528, 64
    %v1532 = vpop.permute.xlu0 %1531
    %v1534 = vmul.f32 %v1527, %v1532
    %1536 = vrot.lane.b32.xlu0 %v1534, 32
    %v1537 = vpop.permute.xlu0 %1536
    %v1539 = vadd.f32 %v1529, %v1537
    %v1540 = vtanh.pop %v1539
    %1542 = vrot.lane.b32.xlu0 %v1540, 64
    %v1543 = vpop.permute.xlu0 %1542
    %v1545 = vmul.f32 %v1527, %v1543
    %v1546 = vpack.c.bf16 %v1521, %v1521
    %v1548 = vunpack.c.l.b16 %v1546
    %v1549 = vpack.c.b16 %v1548, %v1548
    %1550 = vrot.lane.b32.xlu0 %v1549, 32
    %v1551 = vpop.permute.xlu0 %1550
    %1553 = vst.msk [vmem:[%s461] sm:$0xf] %vm452, %v1551
    %v1554 = vpack.c.bf16 %v1545, %v1545
    %v1556 = vunpack.c.l.b16 %v1554
    %v1557 = vpack.c.b16 %v1556, %v1556
    %1558 = vrot.lane.b32.xlu0 %v1557, 64
    %v1559 = vpop.permute.xlu0 %1558
    %1561 = vst.msk [vmem:[#allocation2] sm:$0xf] %vm462, %v1559
    %1563 = vrot.lane.b32.xlu0 %v1515, 96
    %v1564 = vpop.permute.xlu0 %1563
    %1566 = vst.msk [vmem:[%s8] sm:$0xff] %vm299, %v1564
    %vm1567 = vcmask 523520
    %1568 = vst.msk [vmem:[%s8] sm:$0xff] %vm1567, %v1539
    // Predicated region
    $region30: #{bilstm_forward.3} parent=1 // pred_check
      _
    $region31: #{bilstm_forward.3} parent=1 // pred_check_branch
      %1570 = sbr.rel (0) target = $region33
    $region32: #{bilstm_forward.3} parent=1 // pred_region
      %s1572 = ssub.s32 512, 512
      %1573 = vsyncadd [#allocation3], %s1572
      %s1574 = sshll.u32 [#allocation2], 4
      %s1575 = int_to_ptr.vmem [resolvable:$true] %s1574
      %1580 = dma.vmem_to_hbm [thread:$0]  %s1575, 512, %s7, [#allocation3], 64, 64, 4
    $region33: #{bilstm_forward.3} parent=1 // pred_fallthru
      _
    // Predicated region
    $region34: #{bilstm_forward.3} parent=1 // pred_check
      _
    $region35: #{bilstm_forward.3} parent=1 // pred_check_branch
      %1582 = sbr.rel (0) target = $region37
    $region36: #{bilstm_forward.3} parent=1 // pred_region
      _
    $region37: #{bilstm_forward.3} parent=1 // pred_fallthru
      _
    // Predicated region
    $region38: #{bilstm_forward.3} parent=1 // pred_check
      _
    $region39: #{bilstm_forward.3} parent=1 // pred_check_branch
      %1584 = sbr.rel (0) target = $region41
    $region40: #{bilstm_forward.3} parent=1 // pred_region
      %1585 = dma.done [#allocation3], 512
    $region41: #{bilstm_forward.3} parent=1 // pred_fallthru
      _
    // Predicated region
    $region42: #{bilstm_forward.3} parent=1 // pred_check
      _
    $region43: #{bilstm_forward.3} parent=1 // pred_check_branch
      %1587 = sbr.rel (0) target = $region45
    $region44: #{bilstm_forward.3} parent=1 // pred_region
      _
    $region45: #{bilstm_forward.3} parent=1 // pred_fallthru
      _
    %1588 = vsyncpa [#allocation3], 1

</llo_original>
